<compile_context>
chip_gen: v7x
topology: tpu7x:2x2x1
jax: 0.10.0
libtpu: 0.0.40
codegen_flags: <defaults>
</compile_context>

<pallas_src>
import functools

import jax
import jax.numpy as jnp
from jax import lax
from jax.experimental import pallas as pl
from jax.experimental.pallas import tpu as pltpu


# ------------------------------ fused Pallas kernel ------------------------- #

def _lstnet_kernel(data_ref, convw_ref, gih_ref, g1_whh_ref, gs_whh_ref,
                   headw_ref, biases_ref, out_ref, gi1_sc, gis_sc,
                   *, Bp, W, T, hidR, hidS, skip, pt, t0, mp):
    f32 = jnp.float32
    TB = T * Bp
    G1, Gs = 3 * hidR, 3 * hidS
    NS = skip * Bp
    D = hidR + skip * hidS
    H, Hs = hidR, hidS

    bias = biases_ref[...]                                  # (8, max width), 1 vreg

    # ---- conv1 + ReLU (im2col matmul; conv bias folded in via ones column;
    #      dropout = identity) ----
    c = jnp.dot(data_ref[pl.ds(0, TB), :], convw_ref[...],
                preferred_element_type=f32)
    c = jnp.maximum(c, 0.0)                                 # (T*Bp, hidC), time-major rows

    # ---- hoisted GRU input projections (both GRUs, all timesteps, one MXU pass) ----
    proj = jnp.dot(c, gih_ref[...], preferred_element_type=f32)   # (T*Bp, G1+Gs)
    gi1_sc[...] = proj[:, :G1] + bias[0:1, :G1]
    gis_sc[...] = proj[t0 * Bp:, G1:] + bias[2:3, :Gs]      # only consumed timesteps

    # ---- interleaved recurrences: per fused step issue BOTH h @ W_hh pushes,
    #      then both gate blocks -> two independent chains fill each other's
    #      MXU-drain / EUP latency bubbles.  Weights/biases hoisted. ----
    w1 = g1_whh_ref[...]                                    # (hidR, 3*hidR)
    ws = gs_whh_ref[...]                                    # (hidS, 3*hidS)
    b1 = jnp.broadcast_to(bias[1:2, :G1], (Bp, G1))
    bs = jnp.broadcast_to(bias[3:4, :Gs], (NS, Gs))
    h1 = jnp.zeros((Bp, H), f32)
    hs = jnp.zeros((NS, Hs), f32)
    for t in range(T):                                      # static unroll (T is small)
        gi = gi1_sc[pl.ds(t * Bp, Bp), :]                   # 8-row aligned load
        gh = jnp.dot(h1, w1, preferred_element_type=f32) + b1
        if t < pt:                                          # fused GRUskip step
            gis = gis_sc[pl.ds(t * NS, NS), :]              # 32-row aligned load
            ghs = jnp.dot(hs, ws, preferred_element_type=f32) + bs
        r = jax.nn.sigmoid(gi[:, :H] + gh[:, :H])
        z = jax.nn.sigmoid(gi[:, H:2 * H] + gh[:, H:2 * H])
        n = jnp.tanh(gi[:, 2 * H:] + r * gh[:, 2 * H:])
        h1 = (1.0 - z) * n + z * h1
        if t < pt:
            rs = jax.nn.sigmoid(gis[:, :Hs] + ghs[:, :Hs])
            zs = jax.nn.sigmoid(gis[:, Hs:2 * Hs] + ghs[:, Hs:2 * Hs])
            ns = jnp.tanh(gis[:, 2 * Hs:] + rs * ghs[:, 2 * Hs:])
            hs = (1.0 - zs) * ns + zs * hs

    # ---- head: linear1([r | s]) + highway + sigmoid.  hs stays in vregs; the
    #      (q,b)->(b,q) skip re-permutation is folded into per-q row slices of
    #      linear1's weight; highway is a block-diagonal matmul. ----
    res = jnp.dot(h1, headw_ref[pl.ds(0, hidR), :], preferred_element_type=f32)
    for q in range(skip):
        hq = hs[q * Bp:(q + 1) * Bp, :]                     # static, 8-row aligned
        wq = headw_ref[pl.ds(hidR + q * hidS, hidS), :]
        res = res + jnp.dot(hq, wq, preferred_element_type=f32)
    xz = data_ref[pl.ds(TB, Bp), :]
    res = res + jnp.dot(xz, headw_ref[pl.ds(D, W), :], preferred_element_type=f32)
    res = res + bias[4:5, :mp]
    out_ref[...] = jax.nn.sigmoid(res)                      # output_fun == 'sigmoid'


# --------------------------- LSTNet forward (Pallas) ------------------------ #

def lstnet_forward(x, p, cfg):
    B, P, m = x.shape
    Ck, hidC, hidR, hidS = cfg["Ck"], cfg["hidC"], cfg["hidR"], cfg["hidS"]
    skip, pre, hw = cfg["skip"], cfg["pre"], cfg["hw"]
    assert skip > 0 and hw > 0
    T = P - Ck + 1
    pt = (P - Ck) // skip
    t0 = T - pt * skip
    mp = m * pre
    G1, Gs = 3 * hidR, 3 * hidS
    D = hidR + skip * hidS
    f32 = jnp.float32

    Bp = ((B + 7) // 8) * 8                       # sublane-pad batch: aligned row slices
    K = Ck * m
    W = ((max(K + 1, m * hw) + 7) // 8) * 8       # shared lane width of the data slab

    # ---- one-time parameter packing / input glue (plain XLA, outside kernel) ----
    xp = jnp.pad(x.astype(f32), ((0, Bp - B), (0, 0), (0, 0)))

    # im2col with time-major rows (t, b); column K carries a 1 for the conv bias.
    patches = jnp.concatenate([xp[:, k:k + T, :] for k in range(Ck)], axis=-1)  # (Bp,T,K)
    patches = jnp.transpose(patches, (1, 0, 2)).reshape(T * Bp, K)
    patches = jnp.concatenate([patches, jnp.ones((T * Bp, 1), f32)], axis=-1)
    patches = jnp.pad(patches, ((0, 0), (0, W - K - 1)))
    # highway input rows stacked under the patches (same lane width).
    xz = jnp.transpose(xp[:, P - hw:, :], (0, 2, 1)).reshape(Bp, m * hw)
    xz = jnp.pad(xz, ((0, 0), (0, W - m * hw)))
    data = jnp.concatenate([patches, xz], axis=0)                         # (T*Bp+Bp, W)

    # conv weight, bias folded in as contraction row K, padded to W rows.
    convw = jnp.zeros((W, hidC), f32)
    convw = convw.at[:K, :].set(p["conv_w"].reshape(hidC, K).T)
    convw = convw.at[K, :].set(p["conv_b"])

    # fused GRU input-projection weights: [GRU1 r|z|n | GRUskip r|z|n].
    gih = jnp.concatenate([p["gru1_wih"].T, p["grus_wih"].T], axis=-1)    # (hidC, G1+Gs)
    g1_whh = p["gru1_whh"].T                                              # (hidR, G1)
    gs_whh = p["grus_whh"].T                                              # (hidS, Gs)

    # head: linear1 weight stacked over block-diagonal highway weight (padded to W rows).
    hw_wT = p["hw_w"].T                                                   # (hw, pre)
    hwy_w = (jnp.eye(m, dtype=f32)[:, None, :, None]
             * hw_wT[None, :, None, :]).reshape(m * hw, mp)
    hwy_w = jnp.pad(hwy_w, ((0, W - m * hw), (0, 0)))                     # (W, mp)
    headw = jnp.concatenate([p["lin1_w"].T, hwy_w], axis=0)               # (D + W, mp)

    # all biases in one padded slab (one per row).
    BW = max(G1, Gs, mp)
    biases = jnp.zeros((8, BW), f32)
    biases = biases.at[0, :G1].set(p["gru1_bih"])
    biases = biases.at[1, :G1].set(p["gru1_bhh"])
    biases = biases.at[2, :Gs].set(p["grus_bih"])
    biases = biases.at[3, :Gs].set(p["grus_bhh"])
    biases = biases.at[4, :mp].set(p["lin1_b"] + jnp.tile(p["hw_b"], m))

    kern = functools.partial(_lstnet_kernel, Bp=Bp, W=W, T=T, hidR=hidR,
                             hidS=hidS, skip=skip, pt=pt, t0=t0, mp=mp)
    vm = pl.BlockSpec(memory_space=pltpu.MemorySpace.VMEM)
    res = pl.pallas_call(
        kern,
        out_shape=jax.ShapeDtypeStruct((Bp, mp), f32),
        in_specs=[vm] * 7,
        out_specs=vm,
        scratch_shapes=[
            pltpu.VMEM((T * Bp, G1), f32),                  # hoisted GRU1 gate inputs
            pltpu.VMEM((pt * skip * Bp, Gs), f32),          # hoisted GRUskip gate inputs
        ],
    )(data, convw, gih, g1_whh, gs_whh, headw, biases)
    return res[:B].reshape(B, pre, m)


# ------------------------------ pure-JAX reference -------------------------- #

def _gru_ref(x_seq, w_ih, w_hh, b_ih, b_hh):
    T, N, _ = x_seq.shape
    H = w_hh.shape[1]

    def step(h, x_t):
        gi = x_t @ w_ih.T + b_ih
        gh = h @ w_hh.T + b_hh
        ir, iz, i_n = jnp.split(gi, 3, axis=1)
        hr, hz, hn = jnp.split(gh, 3, axis=1)
        r = jax.nn.sigmoid(ir + hr)
        z = jax.nn.sigmoid(iz + hz)
        n = jnp.tanh(i_n + r * hn)
        return (1.0 - z) * n + z * h, None

    h0 = jnp.zeros((N, H), jnp.float32)
    hT, _ = lax.scan(step, h0, x_seq)
    return hT


def lstnet_ref(x, p, cfg):
    B, P, m = x.shape
    Ck, hidC, hidS = cfg["Ck"], cfg["hidC"], cfg["hidS"]
    skip, pre, hw = cfg["skip"], cfg["pre"], cfg["hw"]
    T = P - Ck + 1
    pt = (P - Ck) // skip if skip > 0 else 0

    patches = jnp.stack([x[:, k:k + T, :] for k in range(Ck)], axis=2).reshape(B * T, Ck * m)
    c = jnp.maximum(patches @ p["conv_w"].reshape(hidC, Ck * m).T + p["conv_b"], 0.0)
    c = c.reshape(B, T, hidC)

    r_seq = jnp.transpose(c, (1, 0, 2))
    r = _gru_ref(r_seq, p["gru1_wih"], p["gru1_whh"], p["gru1_bih"], p["gru1_bhh"])

    if skip > 0:
        L = pt * skip
        s = c[:, T - L:, :].reshape(B, pt, skip, hidC)
        s = jnp.transpose(s, (1, 0, 2, 3)).reshape(pt, B * skip, hidC)
        hs = _gru_ref(s, p["grus_wih"], p["grus_whh"], p["grus_bih"], p["grus_bhh"])
        r = jnp.concatenate([r, hs.reshape(B, skip * hidS)], axis=1)

    res = r @ p["lin1_w"].T + p["lin1_b"]
    if hw > 0:
        z = jnp.transpose(x[:, P - hw:, :], (0, 2, 1)).reshape(B * m, hw)
        z = z @ p["hw_w"].T + p["hw_b"]
        res = res + z.reshape(B, m * pre)
    return jax.nn.sigmoid(res.reshape(B, pre, m))


# ----------------------------------- main ----------------------------------- #

if __name__ == "__main__":
    # Small LSTNet configuration (args).
    cfg = dict(P=24, m=8, hidC=16, hidR=32, hidS=8, Ck=3, skip=4, pre=2, hw=4)
    B = 4
    P, m = cfg["P"], cfg["m"]
    hidC, hidR, hidS = cfg["hidC"], cfg["hidR"], cfg["hidS"]
    Ck, skip, pre, hw = cfg["Ck"], cfg["skip"], cfg["pre"], cfg["hw"]
    D = hidR + skip * hidS

    key = jax.random.PRNGKey(0)
    ks = jax.random.split(key, 16)

    def u(k, shape, scale=0.3):
        return jax.random.uniform(k, shape, jnp.float32, -scale, scale)

    params = {
        "conv_w":   u(ks[0], (hidC, 1, Ck, m)),
        "conv_b":   u(ks[1], (hidC,)),
        "gru1_wih": u(ks[2], (3 * hidR, hidC)),
        "gru1_whh": u(ks[3], (3 * hidR, hidR)),
        "gru1_bih": u(ks[4], (3 * hidR,)),
        "gru1_bhh": u(ks[5], (3 * hidR,)),
        "grus_wih": u(ks[6], (3 * hidS, hidC)),
        "grus_whh": u(ks[7], (3 * hidS, hidS)),
        "grus_bih": u(ks[8], (3 * hidS,)),
        "grus_bhh": u(ks[9], (3 * hidS,)),
        "lin1_w":   u(ks[10], (m * pre, D)),
        "lin1_b":   u(ks[11], (m * pre,)),
        "hw_w":     u(ks[12], (pre, hw)),
        "hw_b":     u(ks[13], (pre,)),
    }

    x = jax.random.normal(ks[14], (B, P, m), jnp.float32)

    fwd = jax.jit(functools.partial(lstnet_forward, cfg=cfg))
    ref_fn = jax.jit(functools.partial(lstnet_ref, cfg=cfg))

    out = jax.block_until_ready(fwd(x, params))
    ref = jax.block_until_ready(ref_fn(x, params))

    assert out.shape == (B, pre, m), out.shape
    assert jnp.allclose(out, ref, atol=1e-3, rtol=1e-3), float(jnp.max(jnp.abs(out - ref)))
    print("KERNEL_OK")
</pallas_src>

<mosaic_0001>
module attributes {stable_mosaic.version = 11 : i64} {
  func.func @_lstnet_kernel(%arg0: memref<184x32xf32, #tpu.memory_space<vmem>>, %arg1: memref<32x16xf32, #tpu.memory_space<vmem>>, %arg2: memref<16x120xf32, #tpu.memory_space<vmem>>, %arg3: memref<32x96xf32, #tpu.memory_space<vmem>>, %arg4: memref<8x24xf32, #tpu.memory_space<vmem>>, %arg5: memref<96x16xf32, #tpu.memory_space<vmem>>, %arg6: memref<8x96xf32, #tpu.memory_space<vmem>>, %arg7: memref<8x16xf32, #tpu.memory_space<vmem>>, %arg8: memref<176x96xf32, #tpu.memory_space<vmem>>, %arg9: memref<160x24xf32, #tpu.memory_space<vmem>>) attributes {dimension_semantics = [], scalar_prefetch = 0 : i64, scratch_operands = 2 : i64, tpu.core_type = #tpu.core_type<tc>} {
    %c0 = arith.constant 0 : index
    %c0_0 = arith.constant 0 : index
    %0 = vector.load %arg6[%c0, %c0_0] : memref<8x96xf32, #tpu.memory_space<vmem>>, vector<8x96xf32>
    %c0_1 = arith.constant 0 : index
    %c0_2 = arith.constant 0 : index
    %1 = vector.load %arg0[%c0_1, %c0_2] : memref<184x32xf32, #tpu.memory_space<vmem>>, vector<176x32xf32>
    %c0_3 = arith.constant 0 : index
    %c0_4 = arith.constant 0 : index
    %2 = vector.load %arg1[%c0_3, %c0_4] : memref<32x16xf32, #tpu.memory_space<vmem>>, vector<32x16xf32>
    %cst = arith.constant dense<0.000000e+00> : vector<176x16xf32>
    %3 = tpu.matmul %1, %2, %cst {dimension_numbers = #tpu.dot_dimension_numbers<[1], [0], [0], [1], [0, 0, 1, 1], [], []>} : vector<176x32xf32>, vector<32x16xf32>, vector<176x16xf32> -> vector<176x16xf32>
    %cst_5 = arith.constant 0.000000e+00 : f32
    %4 = vector.broadcast %cst_5 : f32 to vector<176x16xf32>
    %5 = arith.maximumf %3, %4 : vector<176x16xf32>
    %c0_6 = arith.constant 0 : index
    %c0_7 = arith.constant 0 : index
    %6 = vector.load %arg2[%c0_6, %c0_7] : memref<16x120xf32, #tpu.memory_space<vmem>>, vector<16x120xf32>
    %cst_8 = arith.constant dense<0.000000e+00> : vector<176x120xf32>
    %7 = tpu.matmul %5, %6, %cst_8 {dimension_numbers = #tpu.dot_dimension_numbers<[1], [0], [0], [1], [0, 0, 1, 1], [], []>} : vector<176x16xf32>, vector<16x120xf32>, vector<176x120xf32> -> vector<176x120xf32>
    %8 = vector.extract_strided_slice %7 {offsets = [0, 0], sizes = [176, 96], strides = [1, 1]} : vector<176x120xf32> to vector<176x96xf32>
    %9 = vector.extract_strided_slice %0 {offsets = [0, 0], sizes = [1, 96], strides = [1, 1]} : vector<8x96xf32> to vector<1x96xf32>
    %10 = vector.broadcast %9 : vector<1x96xf32> to vector<176x96xf32>
    %11 = arith.addf %8, %10 : vector<176x96xf32>
    %c0_9 = arith.constant 0 : index
    %c0_10 = arith.constant 0 : index
    %12 = vector.load %arg8[%c0_9, %c0_10] : memref<176x96xf32, #tpu.memory_space<vmem>>, vector<176x96xf32>
    tpu.vector_store %arg8[%c0_9, %c0_10], %11 {strides = array<i32>} : memref<176x96xf32, #tpu.memory_space<vmem>>, vector<176x96xf32>,
    %13 = vector.extract_strided_slice %7 {offsets = [16, 96], sizes = [160, 24], strides = [1, 1]} : vector<176x120xf32> to vector<160x24xf32>
    %14 = vector.extract_strided_slice %0 {offsets = [2, 0], sizes = [1, 24], strides = [1, 1]} : vector<8x96xf32> to vector<1x24xf32>
    %15 = vector.broadcast %14 : vector<1x24xf32> to vector<160x24xf32>
    %16 = arith.addf %13, %15 : vector<160x24xf32>
    %c0_11 = arith.constant 0 : index
    %c0_12 = arith.constant 0 : index
    %17 = vector.load %arg9[%c0_11, %c0_12] : memref<160x24xf32, #tpu.memory_space<vmem>>, vector<160x24xf32>
    tpu.vector_store %arg9[%c0_11, %c0_12], %16 {strides = array<i32>} : memref<160x24xf32, #tpu.memory_space<vmem>>, vector<160x24xf32>,
    %c0_13 = arith.constant 0 : index
    %c0_14 = arith.constant 0 : index
    %18 = vector.load %arg3[%c0_13, %c0_14] : memref<32x96xf32, #tpu.memory_space<vmem>>, vector<32x96xf32>
    %c0_15 = arith.constant 0 : index
    %c0_16 = arith.constant 0 : index
    %19 = vector.load %arg4[%c0_15, %c0_16] : memref<8x24xf32, #tpu.memory_space<vmem>>, vector<8x24xf32>
    %20 = vector.extract_strided_slice %0 {offsets = [1, 0], sizes = [1, 96], strides = [1, 1]} : vector<8x96xf32> to vector<1x96xf32>
    %21 = vector.shape_cast %20 : vector<1x96xf32> to vector<1x96xf32>
    %22 = vector.broadcast %21 : vector<1x96xf32> to vector<8x96xf32>
    %23 = vector.extract_strided_slice %0 {offsets = [3, 0], sizes = [1, 24], strides = [1, 1]} : vector<8x96xf32> to vector<1x24xf32>
    %24 = vector.shape_cast %23 : vector<1x24xf32> to vector<1x24xf32>
    %25 = vector.broadcast %24 : vector<1x24xf32> to vector<32x24xf32>
    %cst_17 = arith.constant 0.000000e+00 : f32
    %26 = vector.broadcast %cst_17 : f32 to vector<8x32xf32>
    %cst_18 = arith.constant 0.000000e+00 : f32
    %27 = vector.broadcast %cst_18 : f32 to vector<32x8xf32>
    %c0_19 = arith.constant 0 : index
    %c0_20 = arith.constant 0 : index
    %28 = vector.load %arg8[%c0_19, %c0_20] : memref<176x96xf32, #tpu.memory_space<vmem>>, vector<8x96xf32>
    %cst_21 = arith.constant dense<0.000000e+00> : vector<8x96xf32>
    %29 = tpu.matmul %26, %18, %cst_21 {dimension_numbers = #tpu.dot_dimension_numbers<[1], [0], [0], [1], [0, 0, 1, 1], [], []>} : vector<8x32xf32>, vector<32x96xf32>, vector<8x96xf32> -> vector<8x96xf32>
    %30 = arith.addf %29, %22 : vector<8x96xf32>
    %c0_22 = arith.constant 0 : index
    %c0_23 = arith.constant 0 : index
    %31 = vector.load %arg9[%c0_22, %c0_23] : memref<160x24xf32, #tpu.memory_space<vmem>>, vector<32x24xf32>
    %cst_24 = arith.constant dense<0.000000e+00> : vector<32x24xf32>
    %32 = tpu.matmul %27, %19, %cst_24 {dimension_numbers = #tpu.dot_dimension_numbers<[1], [0], [0], [1], [0, 0, 1, 1], [], []>} : vector<32x8xf32>, vector<8x24xf32>, vector<32x24xf32> -> vector<32x24xf32>
    %33 = arith.addf %32, %25 : vector<32x24xf32>
    %34 = vector.extract_strided_slice %28 {offsets = [0, 0], sizes = [8, 32], strides = [1, 1]} : vector<8x96xf32> to vector<8x32xf32>
    %35 = vector.extract_strided_slice %30 {offsets = [0, 0], sizes = [8, 32], strides = [1, 1]} : vector<8x96xf32> to vector<8x32xf32>
    %36 = arith.addf %34, %35 : vector<8x32xf32>
    %37 = arith.negf %36 : vector<8x32xf32>
    %38 = math.exp %37 : vector<8x32xf32>
    %cst_25 = arith.constant 1.000000e+00 : f32
    %39 = vector.broadcast %cst_25 : f32 to vector<8x32xf32>
    %40 = arith.addf %39, %38 : vector<8x32xf32>
    %41 = arith.divf %39, %40 : vector<8x32xf32>
    %42 = vector.extract_strided_slice %28 {offsets = [0, 32], sizes = [8, 32], strides = [1, 1]} : vector<8x96xf32> to vector<8x32xf32>
    %43 = vector.extract_strided_slice %30 {offsets = [0, 32], sizes = [8, 32], strides = [1, 1]} : vector<8x96xf32> to vector<8x32xf32>
    %44 = arith.addf %42, %43 : vector<8x32xf32>
    %45 = arith.negf %44 : vector<8x32xf32>
    %46 = math.exp %45 : vector<8x32xf32>
    %cst_26 = arith.constant 1.000000e+00 : f32
    %47 = vector.broadcast %cst_26 : f32 to vector<8x32xf32>
    %48 = arith.addf %47, %46 : vector<8x32xf32>
    %49 = arith.divf %47, %48 : vector<8x32xf32>
    %50 = vector.extract_strided_slice %28 {offsets = [0, 64], sizes = [8, 32], strides = [1, 1]} : vector<8x96xf32> to vector<8x32xf32>
    %51 = vector.extract_strided_slice %30 {offsets = [0, 64], sizes = [8, 32], strides = [1, 1]} : vector<8x96xf32> to vector<8x32xf32>
    %52 = arith.mulf %41, %51 : vector<8x32xf32>
    %53 = arith.addf %50, %52 : vector<8x32xf32>
    %54 = math.tanh %53 : vector<8x32xf32>
    %cst_27 = arith.constant 1.000000e+00 : f32
    %55 = vector.broadcast %cst_27 : f32 to vector<8x32xf32>
    %56 = arith.subf %55, %49 : vector<8x32xf32>
    %57 = arith.mulf %56, %54 : vector<8x32xf32>
    %58 = arith.mulf %49, %26 : vector<8x32xf32>
    %59 = arith.addf %57, %58 : vector<8x32xf32>
    %60 = vector.extract_strided_slice %31 {offsets = [0, 0], sizes = [32, 8], strides = [1, 1]} : vector<32x24xf32> to vector<32x8xf32>
    %61 = vector.extract_strided_slice %33 {offsets = [0, 0], sizes = [32, 8], strides = [1, 1]} : vector<32x24xf32> to vector<32x8xf32>
    %62 = arith.addf %60, %61 : vector<32x8xf32>
    %63 = arith.negf %62 : vector<32x8xf32>
    %64 = math.exp %63 : vector<32x8xf32>
    %cst_28 = arith.constant 1.000000e+00 : f32
    %65 = vector.broadcast %cst_28 : f32 to vector<32x8xf32>
    %66 = arith.addf %65, %64 : vector<32x8xf32>
    %67 = arith.divf %65, %66 : vector<32x8xf32>
    %68 = vector.extract_strided_slice %31 {offsets = [0, 8], sizes = [32, 8], strides = [1, 1]} : vector<32x24xf32> to vector<32x8xf32>
    %69 = vector.extract_strided_slice %33 {offsets = [0, 8], sizes = [32, 8], strides = [1, 1]} : vector<32x24xf32> to vector<32x8xf32>
    %70 = arith.addf %68, %69 : vector<32x8xf32>
    %71 = arith.negf %70 : vector<32x8xf32>
    %72 = math.exp %71 : vector<32x8xf32>
    %cst_29 = arith.constant 1.000000e+00 : f32
    %73 = vector.broadcast %cst_29 : f32 to vector<32x8xf32>
    %74 = arith.addf %73, %72 : vector<32x8xf32>
    %75 = arith.divf %73, %74 : vector<32x8xf32>
    %76 = vector.extract_strided_slice %31 {offsets = [0, 16], sizes = [32, 8], strides = [1, 1]} : vector<32x24xf32> to vector<32x8xf32>
    %77 = vector.extract_strided_slice %33 {offsets = [0, 16], sizes = [32, 8], strides = [1, 1]} : vector<32x24xf32> to vector<32x8xf32>
    %78 = arith.mulf %67, %77 : vector<32x8xf32>
    %79 = arith.addf %76, %78 : vector<32x8xf32>
    %80 = math.tanh %79 : vector<32x8xf32>
    %cst_30 = arith.constant 1.000000e+00 : f32
    %81 = vector.broadcast %cst_30 : f32 to vector<32x8xf32>
    %82 = arith.subf %81, %75 : vector<32x8xf32>
    %83 = arith.mulf %82, %80 : vector<32x8xf32>
    %84 = arith.mulf %75, %27 : vector<32x8xf32>
    %85 = arith.addf %83, %84 : vector<32x8xf32>
    %c8 = arith.constant 8 : index
    %c0_31 = arith.constant 0 : index
    %86 = vector.load %arg8[%c8, %c0_31] : memref<176x96xf32, #tpu.memory_space<vmem>>, vector<8x96xf32>
    %cst_32 = arith.constant dense<0.000000e+00> : vector<8x96xf32>
    %87 = tpu.matmul %59, %18, %cst_32 {dimension_numbers = #tpu.dot_dimension_numbers<[1], [0], [0], [1], [0, 0, 1, 1], [], []>} : vector<8x32xf32>, vector<32x96xf32>, vector<8x96xf32> -> vector<8x96xf32>
    %88 = arith.addf %87, %22 : vector<8x96xf32>
    %c32 = arith.constant 32 : index
    %c0_33 = arith.constant 0 : index
    %89 = vector.load %arg9[%c32, %c0_33] : memref<160x24xf32, #tpu.memory_space<vmem>>, vector<32x24xf32>
    %cst_34 = arith.constant dense<0.000000e+00> : vector<32x24xf32>
    %90 = tpu.matmul %85, %19, %cst_34 {dimension_numbers = #tpu.dot_dimension_numbers<[1], [0], [0], [1], [0, 0, 1, 1], [], []>} : vector<32x8xf32>, vector<8x24xf32>, vector<32x24xf32> -> vector<32x24xf32>
    %91 = arith.addf %90, %25 : vector<32x24xf32>
    %92 = vector.extract_strided_slice %86 {offsets = [0, 0], sizes = [8, 32], strides = [1, 1]} : vector<8x96xf32> to vector<8x32xf32>
    %93 = vector.extract_strided_slice %88 {offsets = [0, 0], sizes = [8, 32], strides = [1, 1]} : vector<8x96xf32> to vector<8x32xf32>
    %94 = arith.addf %92, %93 : vector<8x32xf32>
    %95 = arith.negf %94 : vector<8x32xf32>
    %96 = math.exp %95 : vector<8x32xf32>
    %cst_35 = arith.constant 1.000000e+00 : f32
    %97 = vector.broadcast %cst_35 : f32 to vector<8x32xf32>
    %98 = arith.addf %97, %96 : vector<8x32xf32>
    %99 = arith.divf %97, %98 : vector<8x32xf32>
    %100 = vector.extract_strided_slice %86 {offsets = [0, 32], sizes = [8, 32], strides = [1, 1]} : vector<8x96xf32> to vector<8x32xf32>
    %101 = vector.extract_strided_slice %88 {offsets = [0, 32], sizes = [8, 32], strides = [1, 1]} : vector<8x96xf32> to vector<8x32xf32>
    %102 = arith.addf %100, %101 : vector<8x32xf32>
    %103 = arith.negf %102 : vector<8x32xf32>
    %104 = math.exp %103 : vector<8x32xf32>
    %cst_36 = arith.constant 1.000000e+00 : f32
    %105 = vector.broadcast %cst_36 : f32 to vector<8x32xf32>
    %106 = arith.addf %105, %104 : vector<8x32xf32>
    %107 = arith.divf %105, %106 : vector<8x32xf32>
    %108 = vector.extract_strided_slice %86 {offsets = [0, 64], sizes = [8, 32], strides = [1, 1]} : vector<8x96xf32> to vector<8x32xf32>
    %109 = vector.extract_strided_slice %88 {offsets = [0, 64], sizes = [8, 32], strides = [1, 1]} : vector<8x96xf32> to vector<8x32xf32>
    %110 = arith.mulf %99, %109 : vector<8x32xf32>
    %111 = arith.addf %108, %110 : vector<8x32xf32>
    %112 = math.tanh %111 : vector<8x32xf32>
    %cst_37 = arith.constant 1.000000e+00 : f32
    %113 = vector.broadcast %cst_37 : f32 to vector<8x32xf32>
    %114 = arith.subf %113, %107 : vector<8x32xf32>
    %115 = arith.mulf %114, %112 : vector<8x32xf32>
    %116 = arith.mulf %107, %59 : vector<8x32xf32>
    %117 = arith.addf %115, %116 : vector<8x32xf32>
    %118 = vector.extract_strided_slice %89 {offsets = [0, 0], sizes = [32, 8], strides = [1, 1]} : vector<32x24xf32> to vector<32x8xf32>
    %119 = vector.extract_strided_slice %91 {offsets = [0, 0], sizes = [32, 8], strides = [1, 1]} : vector<32x24xf32> to vector<32x8xf32>
    %120 = arith.addf %118, %119 : vector<32x8xf32>
    %121 = arith.negf %120 : vector<32x8xf32>
    %122 = math.exp %121 : vector<32x8xf32>
    %cst_38 = arith.constant 1.000000e+00 : f32
    %123 = vector.broadcast %cst_38 : f32 to vector<32x8xf32>
    %124 = arith.addf %123, %122 : vector<32x8xf32>
    %125 = arith.divf %123, %124 : vector<32x8xf32>
    %126 = vector.extract_strided_slice %89 {offsets = [0, 8], sizes = [32, 8], strides = [1, 1]} : vector<32x24xf32> to vector<32x8xf32>
    %127 = vector.extract_strided_slice %91 {offsets = [0, 8], sizes = [32, 8], strides = [1, 1]} : vector<32x24xf32> to vector<32x8xf32>
    %128 = arith.addf %126, %127 : vector<32x8xf32>
    %129 = arith.negf %128 : vector<32x8xf32>
    %130 = math.exp %129 : vector<32x8xf32>
    %cst_39 = arith.constant 1.000000e+00 : f32
    %131 = vector.broadcast %cst_39 : f32 to vector<32x8xf32>
    %132 = arith.addf %131, %130 : vector<32x8xf32>
    %133 = arith.divf %131, %132 : vector<32x8xf32>
    %134 = vector.extract_strided_slice %89 {offsets = [0, 16], sizes = [32, 8], strides = [1, 1]} : vector<32x24xf32> to vector<32x8xf32>
    %135 = vector.extract_strided_slice %91 {offsets = [0, 16], sizes = [32, 8], strides = [1, 1]} : vector<32x24xf32> to vector<32x8xf32>
    %136 = arith.mulf %125, %135 : vector<32x8xf32>
    %137 = arith.addf %134, %136 : vector<32x8xf32>
    %138 = math.tanh %137 : vector<32x8xf32>
    %cst_40 = arith.constant 1.000000e+00 : f32
    %139 = vector.broadcast %cst_40 : f32 to vector<32x8xf32>
    %140 = arith.subf %139, %133 : vector<32x8xf32>
    %141 = arith.mulf %140, %138 : vector<32x8xf32>
    %142 = arith.mulf %133, %85 : vector<32x8xf32>
    %143 = arith.addf %141, %142 : vector<32x8xf32>
    %c16 = arith.constant 16 : index
    %c0_41 = arith.constant 0 : index
    %144 = vector.load %arg8[%c16, %c0_41] : memref<176x96xf32, #tpu.memory_space<vmem>>, vector<8x96xf32>
    %cst_42 = arith.constant dense<0.000000e+00> : vector<8x96xf32>
    %145 = tpu.matmul %117, %18, %cst_42 {dimension_numbers = #tpu.dot_dimension_numbers<[1], [0], [0], [1], [0, 0, 1, 1], [], []>} : vector<8x32xf32>, vector<32x96xf32>, vector<8x96xf32> -> vector<8x96xf32>
    %146 = arith.addf %145, %22 : vector<8x96xf32>
    %c64 = arith.constant 64 : index
    %c0_43 = arith.constant 0 : index
    %147 = vector.load %arg9[%c64, %c0_43] : memref<160x24xf32, #tpu.memory_space<vmem>>, vector<32x24xf32>
    %cst_44 = arith.constant dense<0.000000e+00> : vector<32x24xf32>
    %148 = tpu.matmul %143, %19, %cst_44 {dimension_numbers = #tpu.dot_dimension_numbers<[1], [0], [0], [1], [0, 0, 1, 1], [], []>} : vector<32x8xf32>, vector<8x24xf32>, vector<32x24xf32> -> vector<32x24xf32>
    %149 = arith.addf %148, %25 : vector<32x24xf32>
    %150 = vector.extract_strided_slice %144 {offsets = [0, 0], sizes = [8, 32], strides = [1, 1]} : vector<8x96xf32> to vector<8x32xf32>
    %151 = vector.extract_strided_slice %146 {offsets = [0, 0], sizes = [8, 32], strides = [1, 1]} : vector<8x96xf32> to vector<8x32xf32>
    %152 = arith.addf %150, %151 : vector<8x32xf32>
    %153 = arith.negf %152 : vector<8x32xf32>
    %154 = math.exp %153 : vector<8x32xf32>
    %cst_45 = arith.constant 1.000000e+00 : f32
    %155 = vector.broadcast %cst_45 : f32 to vector<8x32xf32>
    %156 = arith.addf %155, %154 : vector<8x32xf32>
    %157 = arith.divf %155, %156 : vector<8x32xf32>
    %158 = vector.extract_strided_slice %144 {offsets = [0, 32], sizes = [8, 32], strides = [1, 1]} : vector<8x96xf32> to vector<8x32xf32>
    %159 = vector.extract_strided_slice %146 {offsets = [0, 32], sizes = [8, 32], strides = [1, 1]} : vector<8x96xf32> to vector<8x32xf32>
    %160 = arith.addf %158, %159 : vector<8x32xf32>
    %161 = arith.negf %160 : vector<8x32xf32>
    %162 = math.exp %161 : vector<8x32xf32>
    %cst_46 = arith.constant 1.000000e+00 : f32
    %163 = vector.broadcast %cst_46 : f32 to vector<8x32xf32>
    %164 = arith.addf %163, %162 : vector<8x32xf32>
    %165 = arith.divf %163, %164 : vector<8x32xf32>
    %166 = vector.extract_strided_slice %144 {offsets = [0, 64], sizes = [8, 32], strides = [1, 1]} : vector<8x96xf32> to vector<8x32xf32>
    %167 = vector.extract_strided_slice %146 {offsets = [0, 64], sizes = [8, 32], strides = [1, 1]} : vector<8x96xf32> to vector<8x32xf32>
    %168 = arith.mulf %157, %167 : vector<8x32xf32>
    %169 = arith.addf %166, %168 : vector<8x32xf32>
    %170 = math.tanh %169 : vector<8x32xf32>
    %cst_47 = arith.constant 1.000000e+00 : f32
    %171 = vector.broadcast %cst_47 : f32 to vector<8x32xf32>
    %172 = arith.subf %171, %165 : vector<8x32xf32>
    %173 = arith.mulf %172, %170 : vector<8x32xf32>
    %174 = arith.mulf %165, %117 : vector<8x32xf32>
    %175 = arith.addf %173, %174 : vector<8x32xf32>
    %176 = vector.extract_strided_slice %147 {offsets = [0, 0], sizes = [32, 8], strides = [1, 1]} : vector<32x24xf32> to vector<32x8xf32>
    %177 = vector.extract_strided_slice %149 {offsets = [0, 0], sizes = [32, 8], strides = [1, 1]} : vector<32x24xf32> to vector<32x8xf32>
    %178 = arith.addf %176, %177 : vector<32x8xf32>
    %179 = arith.negf %178 : vector<32x8xf32>
    %180 = math.exp %179 : vector<32x8xf32>
    %cst_48 = arith.constant 1.000000e+00 : f32
    %181 = vector.broadcast %cst_48 : f32 to vector<32x8xf32>
    %182 = arith.addf %181, %180 : vector<32x8xf32>
    %183 = arith.divf %181, %182 : vector<32x8xf32>
    %184 = vector.extract_strided_slice %147 {offsets = [0, 8], sizes = [32, 8], strides = [1, 1]} : vector<32x24xf32> to vector<32x8xf32>
    %185 = vector.extract_strided_slice %149 {offsets = [0, 8], sizes = [32, 8], strides = [1, 1]} : vector<32x24xf32> to vector<32x8xf32>
    %186 = arith.addf %184, %185 : vector<32x8xf32>
    %187 = arith.negf %186 : vector<32x8xf32>
    %188 = math.exp %187 : vector<32x8xf32>
    %cst_49 = arith.constant 1.000000e+00 : f32
    %189 = vector.broadcast %cst_49 : f32 to vector<32x8xf32>
    %190 = arith.addf %189, %188 : vector<32x8xf32>
    %191 = arith.divf %189, %190 : vector<32x8xf32>
    %192 = vector.extract_strided_slice %147 {offsets = [0, 16], sizes = [32, 8], strides = [1, 1]} : vector<32x24xf32> to vector<32x8xf32>
    %193 = vector.extract_strided_slice %149 {offsets = [0, 16], sizes = [32, 8], strides = [1, 1]} : vector<32x24xf32> to vector<32x8xf32>
    %194 = arith.mulf %183, %193 : vector<32x8xf32>
    %195 = arith.addf %192, %194 : vector<32x8xf32>
    %196 = math.tanh %195 : vector<32x8xf32>
    %cst_50 = arith.constant 1.000000e+00 : f32
    %197 = vector.broadcast %cst_50 : f32 to vector<32x8xf32>
    %198 = arith.subf %197, %191 : vector<32x8xf32>
    %199 = arith.mulf %198, %196 : vector<32x8xf32>
    %200 = arith.mulf %191, %143 : vector<32x8xf32>
    %201 = arith.addf %199, %200 : vector<32x8xf32>
    %c24 = arith.constant 24 : index
    %c0_51 = arith.constant 0 : index
    %202 = vector.load %arg8[%c24, %c0_51] : memref<176x96xf32, #tpu.memory_space<vmem>>, vector<8x96xf32>
    %cst_52 = arith.constant dense<0.000000e+00> : vector<8x96xf32>
    %203 = tpu.matmul %175, %18, %cst_52 {dimension_numbers = #tpu.dot_dimension_numbers<[1], [0], [0], [1], [0, 0, 1, 1], [], []>} : vector<8x32xf32>, vector<32x96xf32>, vector<8x96xf32> -> vector<8x96xf32>
    %204 = arith.addf %203, %22 : vector<8x96xf32>
    %c96 = arith.constant 96 : index
    %c0_53 = arith.constant 0 : index
    %205 = vector.load %arg9[%c96, %c0_53] : memref<160x24xf32, #tpu.memory_space<vmem>>, vector<32x24xf32>
    %cst_54 = arith.constant dense<0.000000e+00> : vector<32x24xf32>
    %206 = tpu.matmul %201, %19, %cst_54 {dimension_numbers = #tpu.dot_dimension_numbers<[1], [0], [0], [1], [0, 0, 1, 1], [], []>} : vector<32x8xf32>, vector<8x24xf32>, vector<32x24xf32> -> vector<32x24xf32>
    %207 = arith.addf %206, %25 : vector<32x24xf32>
    %208 = vector.extract_strided_slice %202 {offsets = [0, 0], sizes = [8, 32], strides = [1, 1]} : vector<8x96xf32> to vector<8x32xf32>
    %209 = vector.extract_strided_slice %204 {offsets = [0, 0], sizes = [8, 32], strides = [1, 1]} : vector<8x96xf32> to vector<8x32xf32>
    %210 = arith.addf %208, %209 : vector<8x32xf32>
    %211 = arith.negf %210 : vector<8x32xf32>
    %212 = math.exp %211 : vector<8x32xf32>
    %cst_55 = arith.constant 1.000000e+00 : f32
    %213 = vector.broadcast %cst_55 : f32 to vector<8x32xf32>
    %214 = arith.addf %213, %212 : vector<8x32xf32>
    %215 = arith.divf %213, %214 : vector<8x32xf32>
    %216 = vector.extract_strided_slice %202 {offsets = [0, 32], sizes = [8, 32], strides = [1, 1]} : vector<8x96xf32> to vector<8x32xf32>
    %217 = vector.extract_strided_slice %204 {offsets = [0, 32], sizes = [8, 32], strides = [1, 1]} : vector<8x96xf32> to vector<8x32xf32>
    %218 = arith.addf %216, %217 : vector<8x32xf32>
    %219 = arith.negf %218 : vector<8x32xf32>
    %220 = math.exp %219 : vector<8x32xf32>
    %cst_56 = arith.constant 1.000000e+00 : f32
    %221 = vector.broadcast %cst_56 : f32 to vector<8x32xf32>
    %222 = arith.addf %221, %220 : vector<8x32xf32>
    %223 = arith.divf %221, %222 : vector<8x32xf32>
    %224 = vector.extract_strided_slice %202 {offsets = [0, 64], sizes = [8, 32], strides = [1, 1]} : vector<8x96xf32> to vector<8x32xf32>
    %225 = vector.extract_strided_slice %204 {offsets = [0, 64], sizes = [8, 32], strides = [1, 1]} : vector<8x96xf32> to vector<8x32xf32>
    %226 = arith.mulf %215, %225 : vector<8x32xf32>
    %227 = arith.addf %224, %226 : vector<8x32xf32>
    %228 = math.tanh %227 : vector<8x32xf32>
    %cst_57 = arith.constant 1.000000e+00 : f32
    %229 = vector.broadcast %cst_57 : f32 to vector<8x32xf32>
    %230 = arith.subf %229, %223 : vector<8x32xf32>
    %231 = arith.mulf %230, %228 : vector<8x32xf32>
    %232 = arith.mulf %223, %175 : vector<8x32xf32>
    %233 = arith.addf %231, %232 : vector<8x32xf32>
    %234 = vector.extract_strided_slice %205 {offsets = [0, 0], sizes = [32, 8], strides = [1, 1]} : vector<32x24xf32> to vector<32x8xf32>
    %235 = vector.extract_strided_slice %207 {offsets = [0, 0], sizes = [32, 8], strides = [1, 1]} : vector<32x24xf32> to vector<32x8xf32>
    %236 = arith.addf %234, %235 : vector<32x8xf32>
    %237 = arith.negf %236 : vector<32x8xf32>
    %238 = math.exp %237 : vector<32x8xf32>
    %cst_58 = arith.constant 1.000000e+00 : f32
    %239 = vector.broadcast %cst_58 : f32 to vector<32x8xf32>
    %240 = arith.addf %239, %238 : vector<32x8xf32>
    %241 = arith.divf %239, %240 : vector<32x8xf32>
    %242 = vector.extract_strided_slice %205 {offsets = [0, 8], sizes = [32, 8], strides = [1, 1]} : vector<32x24xf32> to vector<32x8xf32>
    %243 = vector.extract_strided_slice %207 {offsets = [0, 8], sizes = [32, 8], strides = [1, 1]} : vector<32x24xf32> to vector<32x8xf32>
    %244 = arith.addf %242, %243 : vector<32x8xf32>
    %245 = arith.negf %244 : vector<32x8xf32>
    %246 = math.exp %245 : vector<32x8xf32>
    %cst_59 = arith.constant 1.000000e+00 : f32
    %247 = vector.broadcast %cst_59 : f32 to vector<32x8xf32>
    %248 = arith.addf %247, %246 : vector<32x8xf32>
    %249 = arith.divf %247, %248 : vector<32x8xf32>
    %250 = vector.extract_strided_slice %205 {offsets = [0, 16], sizes = [32, 8], strides = [1, 1]} : vector<32x24xf32> to vector<32x8xf32>
    %251 = vector.extract_strided_slice %207 {offsets = [0, 16], sizes = [32, 8], strides = [1, 1]} : vector<32x24xf32> to vector<32x8xf32>
    %252 = arith.mulf %241, %251 : vector<32x8xf32>
    %253 = arith.addf %250, %252 : vector<32x8xf32>
    %254 = math.tanh %253 : vector<32x8xf32>
    %cst_60 = arith.constant 1.000000e+00 : f32
    %255 = vector.broadcast %cst_60 : f32 to vector<32x8xf32>
    %256 = arith.subf %255, %249 : vector<32x8xf32>
    %257 = arith.mulf %256, %254 : vector<32x8xf32>
    %258 = arith.mulf %249, %201 : vector<32x8xf32>
    %259 = arith.addf %257, %258 : vector<32x8xf32>
    %c32_61 = arith.constant 32 : index
    %c0_62 = arith.constant 0 : index
    %260 = vector.load %arg8[%c32_61, %c0_62] : memref<176x96xf32, #tpu.memory_space<vmem>>, vector<8x96xf32>
    %cst_63 = arith.constant dense<0.000000e+00> : vector<8x96xf32>
    %261 = tpu.matmul %233, %18, %cst_63 {dimension_numbers = #tpu.dot_dimension_numbers<[1], [0], [0], [1], [0, 0, 1, 1], [], []>} : vector<8x32xf32>, vector<32x96xf32>, vector<8x96xf32> -> vector<8x96xf32>
    %262 = arith.addf %261, %22 : vector<8x96xf32>
    %c128 = arith.constant 128 : index
    %c0_64 = arith.constant 0 : index
    %263 = vector.load %arg9[%c128, %c0_64] : memref<160x24xf32, #tpu.memory_space<vmem>>, vector<32x24xf32>
    %cst_65 = arith.constant dense<0.000000e+00> : vector<32x24xf32>
    %264 = tpu.matmul %259, %19, %cst_65 {dimension_numbers = #tpu.dot_dimension_numbers<[1], [0], [0], [1], [0, 0, 1, 1], [], []>} : vector<32x8xf32>, vector<8x24xf32>, vector<32x24xf32> -> vector<32x24xf32>
    %265 = arith.addf %264, %25 : vector<32x24xf32>
    %266 = vector.extract_strided_slice %260 {offsets = [0, 0], sizes = [8, 32], strides = [1, 1]} : vector<8x96xf32> to vector<8x32xf32>
    %267 = vector.extract_strided_slice %262 {offsets = [0, 0], sizes = [8, 32], strides = [1, 1]} : vector<8x96xf32> to vector<8x32xf32>
    %268 = arith.addf %266, %267 : vector<8x32xf32>
    %269 = arith.negf %268 : vector<8x32xf32>
    %270 = math.exp %269 : vector<8x32xf32>
    %cst_66 = arith.constant 1.000000e+00 : f32
    %271 = vector.broadcast %cst_66 : f32 to vector<8x32xf32>
    %272 = arith.addf %271, %270 : vector<8x32xf32>
    %273 = arith.divf %271, %272 : vector<8x32xf32>
    %274 = vector.extract_strided_slice %260 {offsets = [0, 32], sizes = [8, 32], strides = [1, 1]} : vector<8x96xf32> to vector<8x32xf32>
    %275 = vector.extract_strided_slice %262 {offsets = [0, 32], sizes = [8, 32], strides = [1, 1]} : vector<8x96xf32> to vector<8x32xf32>
    %276 = arith.addf %274, %275 : vector<8x32xf32>
    %277 = arith.negf %276 : vector<8x32xf32>
    %278 = math.exp %277 : vector<8x32xf32>
    %cst_67 = arith.constant 1.000000e+00 : f32
    %279 = vector.broadcast %cst_67 : f32 to vector<8x32xf32>
    %280 = arith.addf %279, %278 : vector<8x32xf32>
    %281 = arith.divf %279, %280 : vector<8x32xf32>
    %282 = vector.extract_strided_slice %260 {offsets = [0, 64], sizes = [8, 32], strides = [1, 1]} : vector<8x96xf32> to vector<8x32xf32>
    %283 = vector.extract_strided_slice %262 {offsets = [0, 64], sizes = [8, 32], strides = [1, 1]} : vector<8x96xf32> to vector<8x32xf32>
    %284 = arith.mulf %273, %283 : vector<8x32xf32>
    %285 = arith.addf %282, %284 : vector<8x32xf32>
    %286 = math.tanh %285 : vector<8x32xf32>
    %cst_68 = arith.constant 1.000000e+00 : f32
    %287 = vector.broadcast %cst_68 : f32 to vector<8x32xf32>
    %288 = arith.subf %287, %281 : vector<8x32xf32>
    %289 = arith.mulf %288, %286 : vector<8x32xf32>
    %290 = arith.mulf %281, %233 : vector<8x32xf32>
    %291 = arith.addf %289, %290 : vector<8x32xf32>
    %292 = vector.extract_strided_slice %263 {offsets = [0, 0], sizes = [32, 8], strides = [1, 1]} : vector<32x24xf32> to vector<32x8xf32>
    %293 = vector.extract_strided_slice %265 {offsets = [0, 0], sizes = [32, 8], strides = [1, 1]} : vector<32x24xf32> to vector<32x8xf32>
    %294 = arith.addf %292, %293 : vector<32x8xf32>
    %295 = arith.negf %294 : vector<32x8xf32>
    %296 = math.exp %295 : vector<32x8xf32>
    %cst_69 = arith.constant 1.000000e+00 : f32
    %297 = vector.broadcast %cst_69 : f32 to vector<32x8xf32>
    %298 = arith.addf %297, %296 : vector<32x8xf32>
    %299 = arith.divf %297, %298 : vector<32x8xf32>
    %300 = vector.extract_strided_slice %263 {offsets = [0, 8], sizes = [32, 8], strides = [1, 1]} : vector<32x24xf32> to vector<32x8xf32>
    %301 = vector.extract_strided_slice %265 {offsets = [0, 8], sizes = [32, 8], strides = [1, 1]} : vector<32x24xf32> to vector<32x8xf32>
    %302 = arith.addf %300, %301 : vector<32x8xf32>
    %303 = arith.negf %302 : vector<32x8xf32>
    %304 = math.exp %303 : vector<32x8xf32>
    %cst_70 = arith.constant 1.000000e+00 : f32
    %305 = vector.broadcast %cst_70 : f32 to vector<32x8xf32>
    %306 = arith.addf %305, %304 : vector<32x8xf32>
    %307 = arith.divf %305, %306 : vector<32x8xf32>
    %308 = vector.extract_strided_slice %263 {offsets = [0, 16], sizes = [32, 8], strides = [1, 1]} : vector<32x24xf32> to vector<32x8xf32>
    %309 = vector.extract_strided_slice %265 {offsets = [0, 16], sizes = [32, 8], strides = [1, 1]} : vector<32x24xf32> to vector<32x8xf32>
    %310 = arith.mulf %299, %309 : vector<32x8xf32>
    %311 = arith.addf %308, %310 : vector<32x8xf32>
    %312 = math.tanh %311 : vector<32x8xf32>
    %cst_71 = arith.constant 1.000000e+00 : f32
    %313 = vector.broadcast %cst_71 : f32 to vector<32x8xf32>
    %314 = arith.subf %313, %307 : vector<32x8xf32>
    %315 = arith.mulf %314, %312 : vector<32x8xf32>
    %316 = arith.mulf %307, %259 : vector<32x8xf32>
    %317 = arith.addf %315, %316 : vector<32x8xf32>
    %c40 = arith.constant 40 : index
    %c0_72 = arith.constant 0 : index
    %318 = vector.load %arg8[%c40, %c0_72] : memref<176x96xf32, #tpu.memory_space<vmem>>, vector<8x96xf32>
    %cst_73 = arith.constant dense<0.000000e+00> : vector<8x96xf32>
    %319 = tpu.matmul %291, %18, %cst_73 {dimension_numbers = #tpu.dot_dimension_numbers<[1], [0], [0], [1], [0, 0, 1, 1], [], []>} : vector<8x32xf32>, vector<32x96xf32>, vector<8x96xf32> -> vector<8x96xf32>
    %320 = arith.addf %319, %22 : vector<8x96xf32>
    %321 = vector.extract_strided_slice %318 {offsets = [0, 0], sizes = [8, 32], strides = [1, 1]} : vector<8x96xf32> to vector<8x32xf32>
    %322 = vector.extract_strided_slice %320 {offsets = [0, 0], sizes = [8, 32], strides = [1, 1]} : vector<8x96xf32> to vector<8x32xf32>
    %323 = arith.addf %321, %322 : vector<8x32xf32>
    %324 = arith.negf %323 : vector<8x32xf32>
    %325 = math.exp %324 : vector<8x32xf32>
    %cst_74 = arith.constant 1.000000e+00 : f32
    %326 = vector.broadcast %cst_74 : f32 to vector<8x32xf32>
    %327 = arith.addf %326, %325 : vector<8x32xf32>
    %328 = arith.divf %326, %327 : vector<8x32xf32>
    %329 = vector.extract_strided_slice %318 {offsets = [0, 32], sizes = [8, 32], strides = [1, 1]} : vector<8x96xf32> to vector<8x32xf32>
    %330 = vector.extract_strided_slice %320 {offsets = [0, 32], sizes = [8, 32], strides = [1, 1]} : vector<8x96xf32> to vector<8x32xf32>
    %331 = arith.addf %329, %330 : vector<8x32xf32>
    %332 = arith.negf %331 : vector<8x32xf32>
    %333 = math.exp %332 : vector<8x32xf32>
    %cst_75 = arith.constant 1.000000e+00 : f32
    %334 = vector.broadcast %cst_75 : f32 to vector<8x32xf32>
    %335 = arith.addf %334, %333 : vector<8x32xf32>
    %336 = arith.divf %334, %335 : vector<8x32xf32>
    %337 = vector.extract_strided_slice %318 {offsets = [0, 64], sizes = [8, 32], strides = [1, 1]} : vector<8x96xf32> to vector<8x32xf32>
    %338 = vector.extract_strided_slice %320 {offsets = [0, 64], sizes = [8, 32], strides = [1, 1]} : vector<8x96xf32> to vector<8x32xf32>
    %339 = arith.mulf %328, %338 : vector<8x32xf32>
    %340 = arith.addf %337, %339 : vector<8x32xf32>
    %341 = math.tanh %340 : vector<8x32xf32>
    %cst_76 = arith.constant 1.000000e+00 : f32
    %342 = vector.broadcast %cst_76 : f32 to vector<8x32xf32>
    %343 = arith.subf %342, %336 : vector<8x32xf32>
    %344 = arith.mulf %343, %341 : vector<8x32xf32>
    %345 = arith.mulf %336, %291 : vector<8x32xf32>
    %346 = arith.addf %344, %345 : vector<8x32xf32>
    %c48 = arith.constant 48 : index
    %c0_77 = arith.constant 0 : index
    %347 = vector.load %arg8[%c48, %c0_77] : memref<176x96xf32, #tpu.memory_space<vmem>>, vector<8x96xf32>
    %cst_78 = arith.constant dense<0.000000e+00> : vector<8x96xf32>
    %348 = tpu.matmul %346, %18, %cst_78 {dimension_numbers = #tpu.dot_dimension_numbers<[1], [0], [0], [1], [0, 0, 1, 1], [], []>} : vector<8x32xf32>, vector<32x96xf32>, vector<8x96xf32> -> vector<8x96xf32>
    %349 = arith.addf %348, %22 : vector<8x96xf32>
    %350 = vector.extract_strided_slice %347 {offsets = [0, 0], sizes = [8, 32], strides = [1, 1]} : vector<8x96xf32> to vector<8x32xf32>
    %351 = vector.extract_strided_slice %349 {offsets = [0, 0], sizes = [8, 32], strides = [1, 1]} : vector<8x96xf32> to vector<8x32xf32>
    %352 = arith.addf %350, %351 : vector<8x32xf32>
    %353 = arith.negf %352 : vector<8x32xf32>
    %354 = math.exp %353 : vector<8x32xf32>
    %cst_79 = arith.constant 1.000000e+00 : f32
    %355 = vector.broadcast %cst_79 : f32 to vector<8x32xf32>
    %356 = arith.addf %355, %354 : vector<8x32xf32>
    %357 = arith.divf %355, %356 : vector<8x32xf32>
    %358 = vector.extract_strided_slice %347 {offsets = [0, 32], sizes = [8, 32], strides = [1, 1]} : vector<8x96xf32> to vector<8x32xf32>
    %359 = vector.extract_strided_slice %349 {offsets = [0, 32], sizes = [8, 32], strides = [1, 1]} : vector<8x96xf32> to vector<8x32xf32>
    %360 = arith.addf %358, %359 : vector<8x32xf32>
    %361 = arith.negf %360 : vector<8x32xf32>
    %362 = math.exp %361 : vector<8x32xf32>
    %cst_80 = arith.constant 1.000000e+00 : f32
    %363 = vector.broadcast %cst_80 : f32 to vector<8x32xf32>
    %364 = arith.addf %363, %362 : vector<8x32xf32>
    %365 = arith.divf %363, %364 : vector<8x32xf32>
    %366 = vector.extract_strided_slice %347 {offsets = [0, 64], sizes = [8, 32], strides = [1, 1]} : vector<8x96xf32> to vector<8x32xf32>
    %367 = vector.extract_strided_slice %349 {offsets = [0, 64], sizes = [8, 32], strides = [1, 1]} : vector<8x96xf32> to vector<8x32xf32>
    %368 = arith.mulf %357, %367 : vector<8x32xf32>
    %369 = arith.addf %366, %368 : vector<8x32xf32>
    %370 = math.tanh %369 : vector<8x32xf32>
    %cst_81 = arith.constant 1.000000e+00 : f32
    %371 = vector.broadcast %cst_81 : f32 to vector<8x32xf32>
    %372 = arith.subf %371, %365 : vector<8x32xf32>
    %373 = arith.mulf %372, %370 : vector<8x32xf32>
    %374 = arith.mulf %365, %346 : vector<8x32xf32>
    %375 = arith.addf %373, %374 : vector<8x32xf32>
    %c56 = arith.constant 56 : index
    %c0_82 = arith.constant 0 : index
    %376 = vector.load %arg8[%c56, %c0_82] : memref<176x96xf32, #tpu.memory_space<vmem>>, vector<8x96xf32>
    %cst_83 = arith.constant dense<0.000000e+00> : vector<8x96xf32>
    %377 = tpu.matmul %375, %18, %cst_83 {dimension_numbers = #tpu.dot_dimension_numbers<[1], [0], [0], [1], [0, 0, 1, 1], [], []>} : vector<8x32xf32>, vector<32x96xf32>, vector<8x96xf32> -> vector<8x96xf32>
    %378 = arith.addf %377, %22 : vector<8x96xf32>
    %379 = vector.extract_strided_slice %376 {offsets = [0, 0], sizes = [8, 32], strides = [1, 1]} : vector<8x96xf32> to vector<8x32xf32>
    %380 = vector.extract_strided_slice %378 {offsets = [0, 0], sizes = [8, 32], strides = [1, 1]} : vector<8x96xf32> to vector<8x32xf32>
    %381 = arith.addf %379, %380 : vector<8x32xf32>
    %382 = arith.negf %381 : vector<8x32xf32>
    %383 = math.exp %382 : vector<8x32xf32>
    %cst_84 = arith.constant 1.000000e+00 : f32
    %384 = vector.broadcast %cst_84 : f32 to vector<8x32xf32>
    %385 = arith.addf %384, %383 : vector<8x32xf32>
    %386 = arith.divf %384, %385 : vector<8x32xf32>
    %387 = vector.extract_strided_slice %376 {offsets = [0, 32], sizes = [8, 32], strides = [1, 1]} : vector<8x96xf32> to vector<8x32xf32>
    %388 = vector.extract_strided_slice %378 {offsets = [0, 32], sizes = [8, 32], strides = [1, 1]} : vector<8x96xf32> to vector<8x32xf32>
    %389 = arith.addf %387, %388 : vector<8x32xf32>
    %390 = arith.negf %389 : vector<8x32xf32>
    %391 = math.exp %390 : vector<8x32xf32>
    %cst_85 = arith.constant 1.000000e+00 : f32
    %392 = vector.broadcast %cst_85 : f32 to vector<8x32xf32>
    %393 = arith.addf %392, %391 : vector<8x32xf32>
    %394 = arith.divf %392, %393 : vector<8x32xf32>
    %395 = vector.extract_strided_slice %376 {offsets = [0, 64], sizes = [8, 32], strides = [1, 1]} : vector<8x96xf32> to vector<8x32xf32>
    %396 = vector.extract_strided_slice %378 {offsets = [0, 64], sizes = [8, 32], strides = [1, 1]} : vector<8x96xf32> to vector<8x32xf32>
    %397 = arith.mulf %386, %396 : vector<8x32xf32>
    %398 = arith.addf %395, %397 : vector<8x32xf32>
    %399 = math.tanh %398 : vector<8x32xf32>
    %cst_86 = arith.constant 1.000000e+00 : f32
    %400 = vector.broadcast %cst_86 : f32 to vector<8x32xf32>
    %401 = arith.subf %400, %394 : vector<8x32xf32>
    %402 = arith.mulf %401, %399 : vector<8x32xf32>
    %403 = arith.mulf %394, %375 : vector<8x32xf32>
    %404 = arith.addf %402, %403 : vector<8x32xf32>
    %c64_87 = arith.constant 64 : index
    %c0_88 = arith.constant 0 : index
    %405 = vector.load %arg8[%c64_87, %c0_88] : memref<176x96xf32, #tpu.memory_space<vmem>>, vector<8x96xf32>
    %cst_89 = arith.constant dense<0.000000e+00> : vector<8x96xf32>
    %406 = tpu.matmul %404, %18, %cst_89 {dimension_numbers = #tpu.dot_dimension_numbers<[1], [0], [0], [1], [0, 0, 1, 1], [], []>} : vector<8x32xf32>, vector<32x96xf32>, vector<8x96xf32> -> vector<8x96xf32>
    %407 = arith.addf %406, %22 : vector<8x96xf32>
    %408 = vector.extract_strided_slice %405 {offsets = [0, 0], sizes = [8, 32], strides = [1, 1]} : vector<8x96xf32> to vector<8x32xf32>
    %409 = vector.extract_strided_slice %407 {offsets = [0, 0], sizes = [8, 32], strides = [1, 1]} : vector<8x96xf32> to vector<8x32xf32>
    %410 = arith.addf %408, %409 : vector<8x32xf32>
    %411 = arith.negf %410 : vector<8x32xf32>
    %412 = math.exp %411 : vector<8x32xf32>
    %cst_90 = arith.constant 1.000000e+00 : f32
    %413 = vector.broadcast %cst_90 : f32 to vector<8x32xf32>
    %414 = arith.addf %413, %412 : vector<8x32xf32>
    %415 = arith.divf %413, %414 : vector<8x32xf32>
    %416 = vector.extract_strided_slice %405 {offsets = [0, 32], sizes = [8, 32], strides = [1, 1]} : vector<8x96xf32> to vector<8x32xf32>
    %417 = vector.extract_strided_slice %407 {offsets = [0, 32], sizes = [8, 32], strides = [1, 1]} : vector<8x96xf32> to vector<8x32xf32>
    %418 = arith.addf %416, %417 : vector<8x32xf32>
    %419 = arith.negf %418 : vector<8x32xf32>
    %420 = math.exp %419 : vector<8x32xf32>
    %cst_91 = arith.constant 1.000000e+00 : f32
    %421 = vector.broadcast %cst_91 : f32 to vector<8x32xf32>
    %422 = arith.addf %421, %420 : vector<8x32xf32>
    %423 = arith.divf %421, %422 : vector<8x32xf32>
    %424 = vector.extract_strided_slice %405 {offsets = [0, 64], sizes = [8, 32], strides = [1, 1]} : vector<8x96xf32> to vector<8x32xf32>
    %425 = vector.extract_strided_slice %407 {offsets = [0, 64], sizes = [8, 32], strides = [1, 1]} : vector<8x96xf32> to vector<8x32xf32>
    %426 = arith.mulf %415, %425 : vector<8x32xf32>
    %427 = arith.addf %424, %426 : vector<8x32xf32>
    %428 = math.tanh %427 : vector<8x32xf32>
    %cst_92 = arith.constant 1.000000e+00 : f32
    %429 = vector.broadcast %cst_92 : f32 to vector<8x32xf32>
    %430 = arith.subf %429, %423 : vector<8x32xf32>
    %431 = arith.mulf %430, %428 : vector<8x32xf32>
    %432 = arith.mulf %423, %404 : vector<8x32xf32>
    %433 = arith.addf %431, %432 : vector<8x32xf32>
    %c72 = arith.constant 72 : index
    %c0_93 = arith.constant 0 : index
    %434 = vector.load %arg8[%c72, %c0_93] : memref<176x96xf32, #tpu.memory_space<vmem>>, vector<8x96xf32>
    %cst_94 = arith.constant dense<0.000000e+00> : vector<8x96xf32>
    %435 = tpu.matmul %433, %18, %cst_94 {dimension_numbers = #tpu.dot_dimension_numbers<[1], [0], [0], [1], [0, 0, 1, 1], [], []>} : vector<8x32xf32>, vector<32x96xf32>, vector<8x96xf32> -> vector<8x96xf32>
    %436 = arith.addf %435, %22 : vector<8x96xf32>
    %437 = vector.extract_strided_slice %434 {offsets = [0, 0], sizes = [8, 32], strides = [1, 1]} : vector<8x96xf32> to vector<8x32xf32>
    %438 = vector.extract_strided_slice %436 {offsets = [0, 0], sizes = [8, 32], strides = [1, 1]} : vector<8x96xf32> to vector<8x32xf32>
    %439 = arith.addf %437, %438 : vector<8x32xf32>
    %440 = arith.negf %439 : vector<8x32xf32>
    %441 = math.exp %440 : vector<8x32xf32>
    %cst_95 = arith.constant 1.000000e+00 : f32
    %442 = vector.broadcast %cst_95 : f32 to vector<8x32xf32>
    %443 = arith.addf %442, %441 : vector<8x32xf32>
    %444 = arith.divf %442, %443 : vector<8x32xf32>
    %445 = vector.extract_strided_slice %434 {offsets = [0, 32], sizes = [8, 32], strides = [1, 1]} : vector<8x96xf32> to vector<8x32xf32>
    %446 = vector.extract_strided_slice %436 {offsets = [0, 32], sizes = [8, 32], strides = [1, 1]} : vector<8x96xf32> to vector<8x32xf32>
    %447 = arith.addf %445, %446 : vector<8x32xf32>
    %448 = arith.negf %447 : vector<8x32xf32>
    %449 = math.exp %448 : vector<8x32xf32>
    %cst_96 = arith.constant 1.000000e+00 : f32
    %450 = vector.broadcast %cst_96 : f32 to vector<8x32xf32>
    %451 = arith.addf %450, %449 : vector<8x32xf32>
    %452 = arith.divf %450, %451 : vector<8x32xf32>
    %453 = vector.extract_strided_slice %434 {offsets = [0, 64], sizes = [8, 32], strides = [1, 1]} : vector<8x96xf32> to vector<8x32xf32>
    %454 = vector.extract_strided_slice %436 {offsets = [0, 64], sizes = [8, 32], strides = [1, 1]} : vector<8x96xf32> to vector<8x32xf32>
    %455 = arith.mulf %444, %454 : vector<8x32xf32>
    %456 = arith.addf %453, %455 : vector<8x32xf32>
    %457 = math.tanh %456 : vector<8x32xf32>
    %cst_97 = arith.constant 1.000000e+00 : f32
    %458 = vector.broadcast %cst_97 : f32 to vector<8x32xf32>
    %459 = arith.subf %458, %452 : vector<8x32xf32>
    %460 = arith.mulf %459, %457 : vector<8x32xf32>
    %461 = arith.mulf %452, %433 : vector<8x32xf32>
    %462 = arith.addf %460, %461 : vector<8x32xf32>
    %c80 = arith.constant 80 : index
    %c0_98 = arith.constant 0 : index
    %463 = vector.load %arg8[%c80, %c0_98] : memref<176x96xf32, #tpu.memory_space<vmem>>, vector<8x96xf32>
    %cst_99 = arith.constant dense<0.000000e+00> : vector<8x96xf32>
    %464 = tpu.matmul %462, %18, %cst_99 {dimension_numbers = #tpu.dot_dimension_numbers<[1], [0], [0], [1], [0, 0, 1, 1], [], []>} : vector<8x32xf32>, vector<32x96xf32>, vector<8x96xf32> -> vector<8x96xf32>
    %465 = arith.addf %464, %22 : vector<8x96xf32>
    %466 = vector.extract_strided_slice %463 {offsets = [0, 0], sizes = [8, 32], strides = [1, 1]} : vector<8x96xf32> to vector<8x32xf32>
    %467 = vector.extract_strided_slice %465 {offsets = [0, 0], sizes = [8, 32], strides = [1, 1]} : vector<8x96xf32> to vector<8x32xf32>
    %468 = arith.addf %466, %467 : vector<8x32xf32>
    %469 = arith.negf %468 : vector<8x32xf32>
    %470 = math.exp %469 : vector<8x32xf32>
    %cst_100 = arith.constant 1.000000e+00 : f32
    %471 = vector.broadcast %cst_100 : f32 to vector<8x32xf32>
    %472 = arith.addf %471, %470 : vector<8x32xf32>
    %473 = arith.divf %471, %472 : vector<8x32xf32>
    %474 = vector.extract_strided_slice %463 {offsets = [0, 32], sizes = [8, 32], strides = [1, 1]} : vector<8x96xf32> to vector<8x32xf32>
    %475 = vector.extract_strided_slice %465 {offsets = [0, 32], sizes = [8, 32], strides = [1, 1]} : vector<8x96xf32> to vector<8x32xf32>
    %476 = arith.addf %474, %475 : vector<8x32xf32>
    %477 = arith.negf %476 : vector<8x32xf32>
    %478 = math.exp %477 : vector<8x32xf32>
    %cst_101 = arith.constant 1.000000e+00 : f32
    %479 = vector.broadcast %cst_101 : f32 to vector<8x32xf32>
    %480 = arith.addf %479, %478 : vector<8x32xf32>
    %481 = arith.divf %479, %480 : vector<8x32xf32>
    %482 = vector.extract_strided_slice %463 {offsets = [0, 64], sizes = [8, 32], strides = [1, 1]} : vector<8x96xf32> to vector<8x32xf32>
    %483 = vector.extract_strided_slice %465 {offsets = [0, 64], sizes = [8, 32], strides = [1, 1]} : vector<8x96xf32> to vector<8x32xf32>
    %484 = arith.mulf %473, %483 : vector<8x32xf32>
    %485 = arith.addf %482, %484 : vector<8x32xf32>
    %486 = math.tanh %485 : vector<8x32xf32>
    %cst_102 = arith.constant 1.000000e+00 : f32
    %487 = vector.broadcast %cst_102 : f32 to vector<8x32xf32>
    %488 = arith.subf %487, %481 : vector<8x32xf32>
    %489 = arith.mulf %488, %486 : vector<8x32xf32>
    %490 = arith.mulf %481, %462 : vector<8x32xf32>
    %491 = arith.addf %489, %490 : vector<8x32xf32>
    %c88 = arith.constant 88 : index
    %c0_103 = arith.constant 0 : index
    %492 = vector.load %arg8[%c88, %c0_103] : memref<176x96xf32, #tpu.memory_space<vmem>>, vector<8x96xf32>
    %cst_104 = arith.constant dense<0.000000e+00> : vector<8x96xf32>
    %493 = tpu.matmul %491, %18, %cst_104 {dimension_numbers = #tpu.dot_dimension_numbers<[1], [0], [0], [1], [0, 0, 1, 1], [], []>} : vector<8x32xf32>, vector<32x96xf32>, vector<8x96xf32> -> vector<8x96xf32>
    %494 = arith.addf %493, %22 : vector<8x96xf32>
    %495 = vector.extract_strided_slice %492 {offsets = [0, 0], sizes = [8, 32], strides = [1, 1]} : vector<8x96xf32> to vector<8x32xf32>
    %496 = vector.extract_strided_slice %494 {offsets = [0, 0], sizes = [8, 32], strides = [1, 1]} : vector<8x96xf32> to vector<8x32xf32>
    %497 = arith.addf %495, %496 : vector<8x32xf32>
    %498 = arith.negf %497 : vector<8x32xf32>
    %499 = math.exp %498 : vector<8x32xf32>
    %cst_105 = arith.constant 1.000000e+00 : f32
    %500 = vector.broadcast %cst_105 : f32 to vector<8x32xf32>
    %501 = arith.addf %500, %499 : vector<8x32xf32>
    %502 = arith.divf %500, %501 : vector<8x32xf32>
    %503 = vector.extract_strided_slice %492 {offsets = [0, 32], sizes = [8, 32], strides = [1, 1]} : vector<8x96xf32> to vector<8x32xf32>
    %504 = vector.extract_strided_slice %494 {offsets = [0, 32], sizes = [8, 32], strides = [1, 1]} : vector<8x96xf32> to vector<8x32xf32>
    %505 = arith.addf %503, %504 : vector<8x32xf32>
    %506 = arith.negf %505 : vector<8x32xf32>
    %507 = math.exp %506 : vector<8x32xf32>
    %cst_106 = arith.constant 1.000000e+00 : f32
    %508 = vector.broadcast %cst_106 : f32 to vector<8x32xf32>
    %509 = arith.addf %508, %507 : vector<8x32xf32>
    %510 = arith.divf %508, %509 : vector<8x32xf32>
    %511 = vector.extract_strided_slice %492 {offsets = [0, 64], sizes = [8, 32], strides = [1, 1]} : vector<8x96xf32> to vector<8x32xf32>
    %512 = vector.extract_strided_slice %494 {offsets = [0, 64], sizes = [8, 32], strides = [1, 1]} : vector<8x96xf32> to vector<8x32xf32>
    %513 = arith.mulf %502, %512 : vector<8x32xf32>
    %514 = arith.addf %511, %513 : vector<8x32xf32>
    %515 = math.tanh %514 : vector<8x32xf32>
    %cst_107 = arith.constant 1.000000e+00 : f32
    %516 = vector.broadcast %cst_107 : f32 to vector<8x32xf32>
    %517 = arith.subf %516, %510 : vector<8x32xf32>
    %518 = arith.mulf %517, %515 : vector<8x32xf32>
    %519 = arith.mulf %510, %491 : vector<8x32xf32>
    %520 = arith.addf %518, %519 : vector<8x32xf32>
    %c96_108 = arith.constant 96 : index
    %c0_109 = arith.constant 0 : index
    %521 = vector.load %arg8[%c96_108, %c0_109] : memref<176x96xf32, #tpu.memory_space<vmem>>, vector<8x96xf32>
    %cst_110 = arith.constant dense<0.000000e+00> : vector<8x96xf32>
    %522 = tpu.matmul %520, %18, %cst_110 {dimension_numbers = #tpu.dot_dimension_numbers<[1], [0], [0], [1], [0, 0, 1, 1], [], []>} : vector<8x32xf32>, vector<32x96xf32>, vector<8x96xf32> -> vector<8x96xf32>
    %523 = arith.addf %522, %22 : vector<8x96xf32>
    %524 = vector.extract_strided_slice %521 {offsets = [0, 0], sizes = [8, 32], strides = [1, 1]} : vector<8x96xf32> to vector<8x32xf32>
    %525 = vector.extract_strided_slice %523 {offsets = [0, 0], sizes = [8, 32], strides = [1, 1]} : vector<8x96xf32> to vector<8x32xf32>
    %526 = arith.addf %524, %525 : vector<8x32xf32>
    %527 = arith.negf %526 : vector<8x32xf32>
    %528 = math.exp %527 : vector<8x32xf32>
    %cst_111 = arith.constant 1.000000e+00 : f32
    %529 = vector.broadcast %cst_111 : f32 to vector<8x32xf32>
    %530 = arith.addf %529, %528 : vector<8x32xf32>
    %531 = arith.divf %529, %530 : vector<8x32xf32>
    %532 = vector.extract_strided_slice %521 {offsets = [0, 32], sizes = [8, 32], strides = [1, 1]} : vector<8x96xf32> to vector<8x32xf32>
    %533 = vector.extract_strided_slice %523 {offsets = [0, 32], sizes = [8, 32], strides = [1, 1]} : vector<8x96xf32> to vector<8x32xf32>
    %534 = arith.addf %532, %533 : vector<8x32xf32>
    %535 = arith.negf %534 : vector<8x32xf32>
    %536 = math.exp %535 : vector<8x32xf32>
    %cst_112 = arith.constant 1.000000e+00 : f32
    %537 = vector.broadcast %cst_112 : f32 to vector<8x32xf32>
    %538 = arith.addf %537, %536 : vector<8x32xf32>
    %539 = arith.divf %537, %538 : vector<8x32xf32>
    %540 = vector.extract_strided_slice %521 {offsets = [0, 64], sizes = [8, 32], strides = [1, 1]} : vector<8x96xf32> to vector<8x32xf32>
    %541 = vector.extract_strided_slice %523 {offsets = [0, 64], sizes = [8, 32], strides = [1, 1]} : vector<8x96xf32> to vector<8x32xf32>
    %542 = arith.mulf %531, %541 : vector<8x32xf32>
    %543 = arith.addf %540, %542 : vector<8x32xf32>
    %544 = math.tanh %543 : vector<8x32xf32>
    %cst_113 = arith.constant 1.000000e+00 : f32
    %545 = vector.broadcast %cst_113 : f32 to vector<8x32xf32>
    %546 = arith.subf %545, %539 : vector<8x32xf32>
    %547 = arith.mulf %546, %544 : vector<8x32xf32>
    %548 = arith.mulf %539, %520 : vector<8x32xf32>
    %549 = arith.addf %547, %548 : vector<8x32xf32>
    %c104 = arith.constant 104 : index
    %c0_114 = arith.constant 0 : index
    %550 = vector.load %arg8[%c104, %c0_114] : memref<176x96xf32, #tpu.memory_space<vmem>>, vector<8x96xf32>
    %cst_115 = arith.constant dense<0.000000e+00> : vector<8x96xf32>
    %551 = tpu.matmul %549, %18, %cst_115 {dimension_numbers = #tpu.dot_dimension_numbers<[1], [0], [0], [1], [0, 0, 1, 1], [], []>} : vector<8x32xf32>, vector<32x96xf32>, vector<8x96xf32> -> vector<8x96xf32>
    %552 = arith.addf %551, %22 : vector<8x96xf32>
    %553 = vector.extract_strided_slice %550 {offsets = [0, 0], sizes = [8, 32], strides = [1, 1]} : vector<8x96xf32> to vector<8x32xf32>
    %554 = vector.extract_strided_slice %552 {offsets = [0, 0], sizes = [8, 32], strides = [1, 1]} : vector<8x96xf32> to vector<8x32xf32>
    %555 = arith.addf %553, %554 : vector<8x32xf32>
    %556 = arith.negf %555 : vector<8x32xf32>
    %557 = math.exp %556 : vector<8x32xf32>
    %cst_116 = arith.constant 1.000000e+00 : f32
    %558 = vector.broadcast %cst_116 : f32 to vector<8x32xf32>
    %559 = arith.addf %558, %557 : vector<8x32xf32>
    %560 = arith.divf %558, %559 : vector<8x32xf32>
    %561 = vector.extract_strided_slice %550 {offsets = [0, 32], sizes = [8, 32], strides = [1, 1]} : vector<8x96xf32> to vector<8x32xf32>
    %562 = vector.extract_strided_slice %552 {offsets = [0, 32], sizes = [8, 32], strides = [1, 1]} : vector<8x96xf32> to vector<8x32xf32>
    %563 = arith.addf %561, %562 : vector<8x32xf32>
    %564 = arith.negf %563 : vector<8x32xf32>
    %565 = math.exp %564 : vector<8x32xf32>
    %cst_117 = arith.constant 1.000000e+00 : f32
    %566 = vector.broadcast %cst_117 : f32 to vector<8x32xf32>
    %567 = arith.addf %566, %565 : vector<8x32xf32>
    %568 = arith.divf %566, %567 : vector<8x32xf32>
    %569 = vector.extract_strided_slice %550 {offsets = [0, 64], sizes = [8, 32], strides = [1, 1]} : vector<8x96xf32> to vector<8x32xf32>
    %570 = vector.extract_strided_slice %552 {offsets = [0, 64], sizes = [8, 32], strides = [1, 1]} : vector<8x96xf32> to vector<8x32xf32>
    %571 = arith.mulf %560, %570 : vector<8x32xf32>
    %572 = arith.addf %569, %571 : vector<8x32xf32>
    %573 = math.tanh %572 : vector<8x32xf32>
    %cst_118 = arith.constant 1.000000e+00 : f32
    %574 = vector.broadcast %cst_118 : f32 to vector<8x32xf32>
    %575 = arith.subf %574, %568 : vector<8x32xf32>
    %576 = arith.mulf %575, %573 : vector<8x32xf32>
    %577 = arith.mulf %568, %549 : vector<8x32xf32>
    %578 = arith.addf %576, %577 : vector<8x32xf32>
    %c112 = arith.constant 112 : index
    %c0_119 = arith.constant 0 : index
    %579 = vector.load %arg8[%c112, %c0_119] : memref<176x96xf32, #tpu.memory_space<vmem>>, vector<8x96xf32>
    %cst_120 = arith.constant dense<0.000000e+00> : vector<8x96xf32>
    %580 = tpu.matmul %578, %18, %cst_120 {dimension_numbers = #tpu.dot_dimension_numbers<[1], [0], [0], [1], [0, 0, 1, 1], [], []>} : vector<8x32xf32>, vector<32x96xf32>, vector<8x96xf32> -> vector<8x96xf32>
    %581 = arith.addf %580, %22 : vector<8x96xf32>
    %582 = vector.extract_strided_slice %579 {offsets = [0, 0], sizes = [8, 32], strides = [1, 1]} : vector<8x96xf32> to vector<8x32xf32>
    %583 = vector.extract_strided_slice %581 {offsets = [0, 0], sizes = [8, 32], strides = [1, 1]} : vector<8x96xf32> to vector<8x32xf32>
    %584 = arith.addf %582, %583 : vector<8x32xf32>
    %585 = arith.negf %584 : vector<8x32xf32>
    %586 = math.exp %585 : vector<8x32xf32>
    %cst_121 = arith.constant 1.000000e+00 : f32
    %587 = vector.broadcast %cst_121 : f32 to vector<8x32xf32>
    %588 = arith.addf %587, %586 : vector<8x32xf32>
    %589 = arith.divf %587, %588 : vector<8x32xf32>
    %590 = vector.extract_strided_slice %579 {offsets = [0, 32], sizes = [8, 32], strides = [1, 1]} : vector<8x96xf32> to vector<8x32xf32>
    %591 = vector.extract_strided_slice %581 {offsets = [0, 32], sizes = [8, 32], strides = [1, 1]} : vector<8x96xf32> to vector<8x32xf32>
    %592 = arith.addf %590, %591 : vector<8x32xf32>
    %593 = arith.negf %592 : vector<8x32xf32>
    %594 = math.exp %593 : vector<8x32xf32>
    %cst_122 = arith.constant 1.000000e+00 : f32
    %595 = vector.broadcast %cst_122 : f32 to vector<8x32xf32>
    %596 = arith.addf %595, %594 : vector<8x32xf32>
    %597 = arith.divf %595, %596 : vector<8x32xf32>
    %598 = vector.extract_strided_slice %579 {offsets = [0, 64], sizes = [8, 32], strides = [1, 1]} : vector<8x96xf32> to vector<8x32xf32>
    %599 = vector.extract_strided_slice %581 {offsets = [0, 64], sizes = [8, 32], strides = [1, 1]} : vector<8x96xf32> to vector<8x32xf32>
    %600 = arith.mulf %589, %599 : vector<8x32xf32>
    %601 = arith.addf %598, %600 : vector<8x32xf32>
    %602 = math.tanh %601 : vector<8x32xf32>
    %cst_123 = arith.constant 1.000000e+00 : f32
    %603 = vector.broadcast %cst_123 : f32 to vector<8x32xf32>
    %604 = arith.subf %603, %597 : vector<8x32xf32>
    %605 = arith.mulf %604, %602 : vector<8x32xf32>
    %606 = arith.mulf %597, %578 : vector<8x32xf32>
    %607 = arith.addf %605, %606 : vector<8x32xf32>
    %c120 = arith.constant 120 : index
    %c0_124 = arith.constant 0 : index
    %608 = vector.load %arg8[%c120, %c0_124] : memref<176x96xf32, #tpu.memory_space<vmem>>, vector<8x96xf32>
    %cst_125 = arith.constant dense<0.000000e+00> : vector<8x96xf32>
    %609 = tpu.matmul %607, %18, %cst_125 {dimension_numbers = #tpu.dot_dimension_numbers<[1], [0], [0], [1], [0, 0, 1, 1], [], []>} : vector<8x32xf32>, vector<32x96xf32>, vector<8x96xf32> -> vector<8x96xf32>
    %610 = arith.addf %609, %22 : vector<8x96xf32>
    %611 = vector.extract_strided_slice %608 {offsets = [0, 0], sizes = [8, 32], strides = [1, 1]} : vector<8x96xf32> to vector<8x32xf32>
    %612 = vector.extract_strided_slice %610 {offsets = [0, 0], sizes = [8, 32], strides = [1, 1]} : vector<8x96xf32> to vector<8x32xf32>
    %613 = arith.addf %611, %612 : vector<8x32xf32>
    %614 = arith.negf %613 : vector<8x32xf32>
    %615 = math.exp %614 : vector<8x32xf32>
    %cst_126 = arith.constant 1.000000e+00 : f32
    %616 = vector.broadcast %cst_126 : f32 to vector<8x32xf32>
    %617 = arith.addf %616, %615 : vector<8x32xf32>
    %618 = arith.divf %616, %617 : vector<8x32xf32>
    %619 = vector.extract_strided_slice %608 {offsets = [0, 32], sizes = [8, 32], strides = [1, 1]} : vector<8x96xf32> to vector<8x32xf32>
    %620 = vector.extract_strided_slice %610 {offsets = [0, 32], sizes = [8, 32], strides = [1, 1]} : vector<8x96xf32> to vector<8x32xf32>
    %621 = arith.addf %619, %620 : vector<8x32xf32>
    %622 = arith.negf %621 : vector<8x32xf32>
    %623 = math.exp %622 : vector<8x32xf32>
    %cst_127 = arith.constant 1.000000e+00 : f32
    %624 = vector.broadcast %cst_127 : f32 to vector<8x32xf32>
    %625 = arith.addf %624, %623 : vector<8x32xf32>
    %626 = arith.divf %624, %625 : vector<8x32xf32>
    %627 = vector.extract_strided_slice %608 {offsets = [0, 64], sizes = [8, 32], strides = [1, 1]} : vector<8x96xf32> to vector<8x32xf32>
    %628 = vector.extract_strided_slice %610 {offsets = [0, 64], sizes = [8, 32], strides = [1, 1]} : vector<8x96xf32> to vector<8x32xf32>
    %629 = arith.mulf %618, %628 : vector<8x32xf32>
    %630 = arith.addf %627, %629 : vector<8x32xf32>
    %631 = math.tanh %630 : vector<8x32xf32>
    %cst_128 = arith.constant 1.000000e+00 : f32
    %632 = vector.broadcast %cst_128 : f32 to vector<8x32xf32>
    %633 = arith.subf %632, %626 : vector<8x32xf32>
    %634 = arith.mulf %633, %631 : vector<8x32xf32>
    %635 = arith.mulf %626, %607 : vector<8x32xf32>
    %636 = arith.addf %634, %635 : vector<8x32xf32>
    %c128_129 = arith.constant 128 : index
    %c0_130 = arith.constant 0 : index
    %637 = vector.load %arg8[%c128_129, %c0_130] : memref<176x96xf32, #tpu.memory_space<vmem>>, vector<8x96xf32>
    %cst_131 = arith.constant dense<0.000000e+00> : vector<8x96xf32>
    %638 = tpu.matmul %636, %18, %cst_131 {dimension_numbers = #tpu.dot_dimension_numbers<[1], [0], [0], [1], [0, 0, 1, 1], [], []>} : vector<8x32xf32>, vector<32x96xf32>, vector<8x96xf32> -> vector<8x96xf32>
    %639 = arith.addf %638, %22 : vector<8x96xf32>
    %640 = vector.extract_strided_slice %637 {offsets = [0, 0], sizes = [8, 32], strides = [1, 1]} : vector<8x96xf32> to vector<8x32xf32>
    %641 = vector.extract_strided_slice %639 {offsets = [0, 0], sizes = [8, 32], strides = [1, 1]} : vector<8x96xf32> to vector<8x32xf32>
    %642 = arith.addf %640, %641 : vector<8x32xf32>
    %643 = arith.negf %642 : vector<8x32xf32>
    %644 = math.exp %643 : vector<8x32xf32>
    %cst_132 = arith.constant 1.000000e+00 : f32
    %645 = vector.broadcast %cst_132 : f32 to vector<8x32xf32>
    %646 = arith.addf %645, %644 : vector<8x32xf32>
    %647 = arith.divf %645, %646 : vector<8x32xf32>
    %648 = vector.extract_strided_slice %637 {offsets = [0, 32], sizes = [8, 32], strides = [1, 1]} : vector<8x96xf32> to vector<8x32xf32>
    %649 = vector.extract_strided_slice %639 {offsets = [0, 32], sizes = [8, 32], strides = [1, 1]} : vector<8x96xf32> to vector<8x32xf32>
    %650 = arith.addf %648, %649 : vector<8x32xf32>
    %651 = arith.negf %650 : vector<8x32xf32>
    %652 = math.exp %651 : vector<8x32xf32>
    %cst_133 = arith.constant 1.000000e+00 : f32
    %653 = vector.broadcast %cst_133 : f32 to vector<8x32xf32>
    %654 = arith.addf %653, %652 : vector<8x32xf32>
    %655 = arith.divf %653, %654 : vector<8x32xf32>
    %656 = vector.extract_strided_slice %637 {offsets = [0, 64], sizes = [8, 32], strides = [1, 1]} : vector<8x96xf32> to vector<8x32xf32>
    %657 = vector.extract_strided_slice %639 {offsets = [0, 64], sizes = [8, 32], strides = [1, 1]} : vector<8x96xf32> to vector<8x32xf32>
    %658 = arith.mulf %647, %657 : vector<8x32xf32>
    %659 = arith.addf %656, %658 : vector<8x32xf32>
    %660 = math.tanh %659 : vector<8x32xf32>
    %cst_134 = arith.constant 1.000000e+00 : f32
    %661 = vector.broadcast %cst_134 : f32 to vector<8x32xf32>
    %662 = arith.subf %661, %655 : vector<8x32xf32>
    %663 = arith.mulf %662, %660 : vector<8x32xf32>
    %664 = arith.mulf %655, %636 : vector<8x32xf32>
    %665 = arith.addf %663, %664 : vector<8x32xf32>
    %c136 = arith.constant 136 : index
    %c0_135 = arith.constant 0 : index
    %666 = vector.load %arg8[%c136, %c0_135] : memref<176x96xf32, #tpu.memory_space<vmem>>, vector<8x96xf32>
    %cst_136 = arith.constant dense<0.000000e+00> : vector<8x96xf32>
    %667 = tpu.matmul %665, %18, %cst_136 {dimension_numbers = #tpu.dot_dimension_numbers<[1], [0], [0], [1], [0, 0, 1, 1], [], []>} : vector<8x32xf32>, vector<32x96xf32>, vector<8x96xf32> -> vector<8x96xf32>
    %668 = arith.addf %667, %22 : vector<8x96xf32>
    %669 = vector.extract_strided_slice %666 {offsets = [0, 0], sizes = [8, 32], strides = [1, 1]} : vector<8x96xf32> to vector<8x32xf32>
    %670 = vector.extract_strided_slice %668 {offsets = [0, 0], sizes = [8, 32], strides = [1, 1]} : vector<8x96xf32> to vector<8x32xf32>
    %671 = arith.addf %669, %670 : vector<8x32xf32>
    %672 = arith.negf %671 : vector<8x32xf32>
    %673 = math.exp %672 : vector<8x32xf32>
    %cst_137 = arith.constant 1.000000e+00 : f32
    %674 = vector.broadcast %cst_137 : f32 to vector<8x32xf32>
    %675 = arith.addf %674, %673 : vector<8x32xf32>
    %676 = arith.divf %674, %675 : vector<8x32xf32>
    %677 = vector.extract_strided_slice %666 {offsets = [0, 32], sizes = [8, 32], strides = [1, 1]} : vector<8x96xf32> to vector<8x32xf32>
    %678 = vector.extract_strided_slice %668 {offsets = [0, 32], sizes = [8, 32], strides = [1, 1]} : vector<8x96xf32> to vector<8x32xf32>
    %679 = arith.addf %677, %678 : vector<8x32xf32>
    %680 = arith.negf %679 : vector<8x32xf32>
    %681 = math.exp %680 : vector<8x32xf32>
    %cst_138 = arith.constant 1.000000e+00 : f32
    %682 = vector.broadcast %cst_138 : f32 to vector<8x32xf32>
    %683 = arith.addf %682, %681 : vector<8x32xf32>
    %684 = arith.divf %682, %683 : vector<8x32xf32>
    %685 = vector.extract_strided_slice %666 {offsets = [0, 64], sizes = [8, 32], strides = [1, 1]} : vector<8x96xf32> to vector<8x32xf32>
    %686 = vector.extract_strided_slice %668 {offsets = [0, 64], sizes = [8, 32], strides = [1, 1]} : vector<8x96xf32> to vector<8x32xf32>
    %687 = arith.mulf %676, %686 : vector<8x32xf32>
    %688 = arith.addf %685, %687 : vector<8x32xf32>
    %689 = math.tanh %688 : vector<8x32xf32>
    %cst_139 = arith.constant 1.000000e+00 : f32
    %690 = vector.broadcast %cst_139 : f32 to vector<8x32xf32>
    %691 = arith.subf %690, %684 : vector<8x32xf32>
    %692 = arith.mulf %691, %689 : vector<8x32xf32>
    %693 = arith.mulf %684, %665 : vector<8x32xf32>
    %694 = arith.addf %692, %693 : vector<8x32xf32>
    %c144 = arith.constant 144 : index
    %c0_140 = arith.constant 0 : index
    %695 = vector.load %arg8[%c144, %c0_140] : memref<176x96xf32, #tpu.memory_space<vmem>>, vector<8x96xf32>
    %cst_141 = arith.constant dense<0.000000e+00> : vector<8x96xf32>
    %696 = tpu.matmul %694, %18, %cst_141 {dimension_numbers = #tpu.dot_dimension_numbers<[1], [0], [0], [1], [0, 0, 1, 1], [], []>} : vector<8x32xf32>, vector<32x96xf32>, vector<8x96xf32> -> vector<8x96xf32>
    %697 = arith.addf %696, %22 : vector<8x96xf32>
    %698 = vector.extract_strided_slice %695 {offsets = [0, 0], sizes = [8, 32], strides = [1, 1]} : vector<8x96xf32> to vector<8x32xf32>
    %699 = vector.extract_strided_slice %697 {offsets = [0, 0], sizes = [8, 32], strides = [1, 1]} : vector<8x96xf32> to vector<8x32xf32>
    %700 = arith.addf %698, %699 : vector<8x32xf32>
    %701 = arith.negf %700 : vector<8x32xf32>
    %702 = math.exp %701 : vector<8x32xf32>
    %cst_142 = arith.constant 1.000000e+00 : f32
    %703 = vector.broadcast %cst_142 : f32 to vector<8x32xf32>
    %704 = arith.addf %703, %702 : vector<8x32xf32>
    %705 = arith.divf %703, %704 : vector<8x32xf32>
    %706 = vector.extract_strided_slice %695 {offsets = [0, 32], sizes = [8, 32], strides = [1, 1]} : vector<8x96xf32> to vector<8x32xf32>
    %707 = vector.extract_strided_slice %697 {offsets = [0, 32], sizes = [8, 32], strides = [1, 1]} : vector<8x96xf32> to vector<8x32xf32>
    %708 = arith.addf %706, %707 : vector<8x32xf32>
    %709 = arith.negf %708 : vector<8x32xf32>
    %710 = math.exp %709 : vector<8x32xf32>
    %cst_143 = arith.constant 1.000000e+00 : f32
    %711 = vector.broadcast %cst_143 : f32 to vector<8x32xf32>
    %712 = arith.addf %711, %710 : vector<8x32xf32>
    %713 = arith.divf %711, %712 : vector<8x32xf32>
    %714 = vector.extract_strided_slice %695 {offsets = [0, 64], sizes = [8, 32], strides = [1, 1]} : vector<8x96xf32> to vector<8x32xf32>
    %715 = vector.extract_strided_slice %697 {offsets = [0, 64], sizes = [8, 32], strides = [1, 1]} : vector<8x96xf32> to vector<8x32xf32>
    %716 = arith.mulf %705, %715 : vector<8x32xf32>
    %717 = arith.addf %714, %716 : vector<8x32xf32>
    %718 = math.tanh %717 : vector<8x32xf32>
    %cst_144 = arith.constant 1.000000e+00 : f32
    %719 = vector.broadcast %cst_144 : f32 to vector<8x32xf32>
    %720 = arith.subf %719, %713 : vector<8x32xf32>
    %721 = arith.mulf %720, %718 : vector<8x32xf32>
    %722 = arith.mulf %713, %694 : vector<8x32xf32>
    %723 = arith.addf %721, %722 : vector<8x32xf32>
    %c152 = arith.constant 152 : index
    %c0_145 = arith.constant 0 : index
    %724 = vector.load %arg8[%c152, %c0_145] : memref<176x96xf32, #tpu.memory_space<vmem>>, vector<8x96xf32>
    %cst_146 = arith.constant dense<0.000000e+00> : vector<8x96xf32>
    %725 = tpu.matmul %723, %18, %cst_146 {dimension_numbers = #tpu.dot_dimension_numbers<[1], [0], [0], [1], [0, 0, 1, 1], [], []>} : vector<8x32xf32>, vector<32x96xf32>, vector<8x96xf32> -> vector<8x96xf32>
    %726 = arith.addf %725, %22 : vector<8x96xf32>
    %727 = vector.extract_strided_slice %724 {offsets = [0, 0], sizes = [8, 32], strides = [1, 1]} : vector<8x96xf32> to vector<8x32xf32>
    %728 = vector.extract_strided_slice %726 {offsets = [0, 0], sizes = [8, 32], strides = [1, 1]} : vector<8x96xf32> to vector<8x32xf32>
    %729 = arith.addf %727, %728 : vector<8x32xf32>
    %730 = arith.negf %729 : vector<8x32xf32>
    %731 = math.exp %730 : vector<8x32xf32>
    %cst_147 = arith.constant 1.000000e+00 : f32
    %732 = vector.broadcast %cst_147 : f32 to vector<8x32xf32>
    %733 = arith.addf %732, %731 : vector<8x32xf32>
    %734 = arith.divf %732, %733 : vector<8x32xf32>
    %735 = vector.extract_strided_slice %724 {offsets = [0, 32], sizes = [8, 32], strides = [1, 1]} : vector<8x96xf32> to vector<8x32xf32>
    %736 = vector.extract_strided_slice %726 {offsets = [0, 32], sizes = [8, 32], strides = [1, 1]} : vector<8x96xf32> to vector<8x32xf32>
    %737 = arith.addf %735, %736 : vector<8x32xf32>
    %738 = arith.negf %737 : vector<8x32xf32>
    %739 = math.exp %738 : vector<8x32xf32>
    %cst_148 = arith.constant 1.000000e+00 : f32
    %740 = vector.broadcast %cst_148 : f32 to vector<8x32xf32>
    %741 = arith.addf %740, %739 : vector<8x32xf32>
    %742 = arith.divf %740, %741 : vector<8x32xf32>
    %743 = vector.extract_strided_slice %724 {offsets = [0, 64], sizes = [8, 32], strides = [1, 1]} : vector<8x96xf32> to vector<8x32xf32>
    %744 = vector.extract_strided_slice %726 {offsets = [0, 64], sizes = [8, 32], strides = [1, 1]} : vector<8x96xf32> to vector<8x32xf32>
    %745 = arith.mulf %734, %744 : vector<8x32xf32>
    %746 = arith.addf %743, %745 : vector<8x32xf32>
    %747 = math.tanh %746 : vector<8x32xf32>
    %cst_149 = arith.constant 1.000000e+00 : f32
    %748 = vector.broadcast %cst_149 : f32 to vector<8x32xf32>
    %749 = arith.subf %748, %742 : vector<8x32xf32>
    %750 = arith.mulf %749, %747 : vector<8x32xf32>
    %751 = arith.mulf %742, %723 : vector<8x32xf32>
    %752 = arith.addf %750, %751 : vector<8x32xf32>
    %c160 = arith.constant 160 : index
    %c0_150 = arith.constant 0 : index
    %753 = vector.load %arg8[%c160, %c0_150] : memref<176x96xf32, #tpu.memory_space<vmem>>, vector<8x96xf32>
    %cst_151 = arith.constant dense<0.000000e+00> : vector<8x96xf32>
    %754 = tpu.matmul %752, %18, %cst_151 {dimension_numbers = #tpu.dot_dimension_numbers<[1], [0], [0], [1], [0, 0, 1, 1], [], []>} : vector<8x32xf32>, vector<32x96xf32>, vector<8x96xf32> -> vector<8x96xf32>
    %755 = arith.addf %754, %22 : vector<8x96xf32>
    %756 = vector.extract_strided_slice %753 {offsets = [0, 0], sizes = [8, 32], strides = [1, 1]} : vector<8x96xf32> to vector<8x32xf32>
    %757 = vector.extract_strided_slice %755 {offsets = [0, 0], sizes = [8, 32], strides = [1, 1]} : vector<8x96xf32> to vector<8x32xf32>
    %758 = arith.addf %756, %757 : vector<8x32xf32>
    %759 = arith.negf %758 : vector<8x32xf32>
    %760 = math.exp %759 : vector<8x32xf32>
    %cst_152 = arith.constant 1.000000e+00 : f32
    %761 = vector.broadcast %cst_152 : f32 to vector<8x32xf32>
    %762 = arith.addf %761, %760 : vector<8x32xf32>
    %763 = arith.divf %761, %762 : vector<8x32xf32>
    %764 = vector.extract_strided_slice %753 {offsets = [0, 32], sizes = [8, 32], strides = [1, 1]} : vector<8x96xf32> to vector<8x32xf32>
    %765 = vector.extract_strided_slice %755 {offsets = [0, 32], sizes = [8, 32], strides = [1, 1]} : vector<8x96xf32> to vector<8x32xf32>
    %766 = arith.addf %764, %765 : vector<8x32xf32>
    %767 = arith.negf %766 : vector<8x32xf32>
    %768 = math.exp %767 : vector<8x32xf32>
    %cst_153 = arith.constant 1.000000e+00 : f32
    %769 = vector.broadcast %cst_153 : f32 to vector<8x32xf32>
    %770 = arith.addf %769, %768 : vector<8x32xf32>
    %771 = arith.divf %769, %770 : vector<8x32xf32>
    %772 = vector.extract_strided_slice %753 {offsets = [0, 64], sizes = [8, 32], strides = [1, 1]} : vector<8x96xf32> to vector<8x32xf32>
    %773 = vector.extract_strided_slice %755 {offsets = [0, 64], sizes = [8, 32], strides = [1, 1]} : vector<8x96xf32> to vector<8x32xf32>
    %774 = arith.mulf %763, %773 : vector<8x32xf32>
    %775 = arith.addf %772, %774 : vector<8x32xf32>
    %776 = math.tanh %775 : vector<8x32xf32>
    %cst_154 = arith.constant 1.000000e+00 : f32
    %777 = vector.broadcast %cst_154 : f32 to vector<8x32xf32>
    %778 = arith.subf %777, %771 : vector<8x32xf32>
    %779 = arith.mulf %778, %776 : vector<8x32xf32>
    %780 = arith.mulf %771, %752 : vector<8x32xf32>
    %781 = arith.addf %779, %780 : vector<8x32xf32>
    %c168 = arith.constant 168 : index
    %c0_155 = arith.constant 0 : index
    %782 = vector.load %arg8[%c168, %c0_155] : memref<176x96xf32, #tpu.memory_space<vmem>>, vector<8x96xf32>
    %cst_156 = arith.constant dense<0.000000e+00> : vector<8x96xf32>
    %783 = tpu.matmul %781, %18, %cst_156 {dimension_numbers = #tpu.dot_dimension_numbers<[1], [0], [0], [1], [0, 0, 1, 1], [], []>} : vector<8x32xf32>, vector<32x96xf32>, vector<8x96xf32> -> vector<8x96xf32>
    %784 = arith.addf %783, %22 : vector<8x96xf32>
    %785 = vector.extract_strided_slice %782 {offsets = [0, 0], sizes = [8, 32], strides = [1, 1]} : vector<8x96xf32> to vector<8x32xf32>
    %786 = vector.extract_strided_slice %784 {offsets = [0, 0], sizes = [8, 32], strides = [1, 1]} : vector<8x96xf32> to vector<8x32xf32>
    %787 = arith.addf %785, %786 : vector<8x32xf32>
    %788 = arith.negf %787 : vector<8x32xf32>
    %789 = math.exp %788 : vector<8x32xf32>
    %cst_157 = arith.constant 1.000000e+00 : f32
    %790 = vector.broadcast %cst_157 : f32 to vector<8x32xf32>
    %791 = arith.addf %790, %789 : vector<8x32xf32>
    %792 = arith.divf %790, %791 : vector<8x32xf32>
    %793 = vector.extract_strided_slice %782 {offsets = [0, 32], sizes = [8, 32], strides = [1, 1]} : vector<8x96xf32> to vector<8x32xf32>
    %794 = vector.extract_strided_slice %784 {offsets = [0, 32], sizes = [8, 32], strides = [1, 1]} : vector<8x96xf32> to vector<8x32xf32>
    %795 = arith.addf %793, %794 : vector<8x32xf32>
    %796 = arith.negf %795 : vector<8x32xf32>
    %797 = math.exp %796 : vector<8x32xf32>
    %cst_158 = arith.constant 1.000000e+00 : f32
    %798 = vector.broadcast %cst_158 : f32 to vector<8x32xf32>
    %799 = arith.addf %798, %797 : vector<8x32xf32>
    %800 = arith.divf %798, %799 : vector<8x32xf32>
    %801 = vector.extract_strided_slice %782 {offsets = [0, 64], sizes = [8, 32], strides = [1, 1]} : vector<8x96xf32> to vector<8x32xf32>
    %802 = vector.extract_strided_slice %784 {offsets = [0, 64], sizes = [8, 32], strides = [1, 1]} : vector<8x96xf32> to vector<8x32xf32>
    %803 = arith.mulf %792, %802 : vector<8x32xf32>
    %804 = arith.addf %801, %803 : vector<8x32xf32>
    %805 = math.tanh %804 : vector<8x32xf32>
    %cst_159 = arith.constant 1.000000e+00 : f32
    %806 = vector.broadcast %cst_159 : f32 to vector<8x32xf32>
    %807 = arith.subf %806, %800 : vector<8x32xf32>
    %808 = arith.mulf %807, %805 : vector<8x32xf32>
    %809 = arith.mulf %800, %781 : vector<8x32xf32>
    %810 = arith.addf %808, %809 : vector<8x32xf32>
    %c0_160 = arith.constant 0 : index
    %c0_161 = arith.constant 0 : index
    %811 = vector.load %arg5[%c0_160, %c0_161] : memref<96x16xf32, #tpu.memory_space<vmem>>, vector<32x16xf32>
    %cst_162 = arith.constant dense<0.000000e+00> : vector<8x16xf32>
    %812 = tpu.matmul %810, %811, %cst_162 {dimension_numbers = #tpu.dot_dimension_numbers<[1], [0], [0], [1], [0, 0, 1, 1], [], []>} : vector<8x32xf32>, vector<32x16xf32>, vector<8x16xf32> -> vector<8x16xf32>
    %813 = vector.extract_strided_slice %317 {offsets = [0, 0], sizes = [8, 8], strides = [1, 1]} : vector<32x8xf32> to vector<8x8xf32>
    %c32_163 = arith.constant 32 : index
    %c0_164 = arith.constant 0 : index
    %814 = vector.load %arg5[%c32_163, %c0_164] : memref<96x16xf32, #tpu.memory_space<vmem>>, vector<8x16xf32>
    %cst_165 = arith.constant dense<0.000000e+00> : vector<8x16xf32>
    %815 = tpu.matmul %813, %814, %cst_165 {dimension_numbers = #tpu.dot_dimension_numbers<[1], [0], [0], [1], [0, 0, 1, 1], [], []>} : vector<8x8xf32>, vector<8x16xf32>, vector<8x16xf32> -> vector<8x16xf32>
    %816 = arith.addf %812, %815 : vector<8x16xf32>
    %817 = vector.extract_strided_slice %317 {offsets = [8, 0], sizes = [8, 8], strides = [1, 1]} : vector<32x8xf32> to vector<8x8xf32>
    %c40_166 = arith.constant 40 : index
    %c0_167 = arith.constant 0 : index
    %818 = vector.load %arg5[%c40_166, %c0_167] : memref<96x16xf32, #tpu.memory_space<vmem>>, vector<8x16xf32>
    %cst_168 = arith.constant dense<0.000000e+00> : vector<8x16xf32>
    %819 = tpu.matmul %817, %818, %cst_168 {dimension_numbers = #tpu.dot_dimension_numbers<[1], [0], [0], [1], [0, 0, 1, 1], [], []>} : vector<8x8xf32>, vector<8x16xf32>, vector<8x16xf32> -> vector<8x16xf32>
    %820 = arith.addf %816, %819 : vector<8x16xf32>
    %821 = vector.extract_strided_slice %317 {offsets = [16, 0], sizes = [8, 8], strides = [1, 1]} : vector<32x8xf32> to vector<8x8xf32>
    %c48_169 = arith.constant 48 : index
    %c0_170 = arith.constant 0 : index
    %822 = vector.load %arg5[%c48_169, %c0_170] : memref<96x16xf32, #tpu.memory_space<vmem>>, vector<8x16xf32>
    %cst_171 = arith.constant dense<0.000000e+00> : vector<8x16xf32>
    %823 = tpu.matmul %821, %822, %cst_171 {dimension_numbers = #tpu.dot_dimension_numbers<[1], [0], [0], [1], [0, 0, 1, 1], [], []>} : vector<8x8xf32>, vector<8x16xf32>, vector<8x16xf32> -> vector<8x16xf32>
    %824 = arith.addf %820, %823 : vector<8x16xf32>
    %825 = vector.extract_strided_slice %317 {offsets = [24, 0], sizes = [8, 8], strides = [1, 1]} : vector<32x8xf32> to vector<8x8xf32>
    %c56_172 = arith.constant 56 : index
    %c0_173 = arith.constant 0 : index
    %826 = vector.load %arg5[%c56_172, %c0_173] : memref<96x16xf32, #tpu.memory_space<vmem>>, vector<8x16xf32>
    %cst_174 = arith.constant dense<0.000000e+00> : vector<8x16xf32>
    %827 = tpu.matmul %825, %826, %cst_174 {dimension_numbers = #tpu.dot_dimension_numbers<[1], [0], [0], [1], [0, 0, 1, 1], [], []>} : vector<8x8xf32>, vector<8x16xf32>, vector<8x16xf32> -> vector<8x16xf32>
    %828 = arith.addf %824, %827 : vector<8x16xf32>
    %c176 = arith.constant 176 : index
    %c0_175 = arith.constant 0 : index
    %829 = vector.load %arg0[%c176, %c0_175] : memref<184x32xf32, #tpu.memory_space<vmem>>, vector<8x32xf32>
    %c64_176 = arith.constant 64 : index
    %c0_177 = arith.constant 0 : index
    %830 = vector.load %arg5[%c64_176, %c0_177] : memref<96x16xf32, #tpu.memory_space<vmem>>, vector<32x16xf32>
    %cst_178 = arith.constant dense<0.000000e+00> : vector<8x16xf32>
    %831 = tpu.matmul %829, %830, %cst_178 {dimension_numbers = #tpu.dot_dimension_numbers<[1], [0], [0], [1], [0, 0, 1, 1], [], []>} : vector<8x32xf32>, vector<32x16xf32>, vector<8x16xf32> -> vector<8x16xf32>
    %832 = arith.addf %828, %831 : vector<8x16xf32>
    %833 = vector.extract_strided_slice %0 {offsets = [4, 0], sizes = [1, 16], strides = [1, 1]} : vector<8x96xf32> to vector<1x16xf32>
    %834 = vector.broadcast %833 : vector<1x16xf32> to vector<8x16xf32>
    %835 = arith.addf %832, %834 : vector<8x16xf32>
    %836 = arith.negf %835 : vector<8x16xf32>
    %837 = math.exp %836 : vector<8x16xf32>
    %cst_179 = arith.constant 1.000000e+00 : f32
    %838 = vector.broadcast %cst_179 : f32 to vector<8x16xf32>
    %839 = arith.addf %838, %837 : vector<8x16xf32>
    %840 = arith.divf %838, %839 : vector<8x16xf32>
    %c0_180 = arith.constant 0 : index
    %c0_181 = arith.constant 0 : index
    %841 = vector.load %arg7[%c0_180, %c0_181] : memref<8x16xf32, #tpu.memory_space<vmem>>, vector<8x16xf32>
    tpu.vector_store %arg7[%c0_180, %c0_181], %840 {strides = array<i32>} : memref<8x16xf32, #tpu.memory_space<vmem>>, vector<8x16xf32>,
    return
  }
}

</mosaic_0001>

<llo_original>
// kernel: tile.8
$region0: #{tile.8}
  #allocation0 [shape = 's32[1]{0}', space=sflag, size = 0x4, scoped, tag = 'scoped memory for tile.8']
  %s0 = inlined_call_operand.vmem [shape: f32[2], index: 0, kind: input, shape index: {}]
  %s1 = inlined_call_operand.vmem [shape: f32[8,2], index: 1, kind: output, shape index: {}]
  // Predicated region
  $region2: #{tile.8} parent=0 // pred_check
    _
  $region3: #{tile.8} parent=0 // pred_check_branch
    %3 = sbr.rel (0) target = $region5
  $region4: #{tile.8} parent=0 // pred_region
    _
  $region5: #{tile.8} parent=0 // pred_fallthru
    _
  %v4 = vld [vmem:[%s0] ss:$0 sm:$0xff]
  %5 = vst [vmem:[%s1] sm:$0xff] %v4

// kernel: tile.9
$region0: #{tile.9}
  %s0 = inlined_call_operand.vmem [shape: f32[8,2], index: 0, kind: input, shape index: {}]
  %s1 = inlined_call_operand.vmem [shape: f32[16], index: 1, kind: output, shape index: {}]
  $region1: #{tile.9} parent=0
    #allocation0 [shape = 'u8[4096]{0}', space=vmem, size = 0x1000, scoped, tag = 'scoped mem for output reshape']
    %v2 = vld [vmem:[%s0] sm:$0x1]
    %vm3 = vcmask 15360
    %4 = vst.msk [vmem:[#allocation0] sm:$0x1] %vm3, %v2
    %s5 = scalar_lea.vmem %s0, 7
    %v6 = vld [vmem:[%s5] sm:$0x1]
    %7 = vrot.lane.b32.xlu0 %v6, 14
    %v8 = vpop.permute.xlu0 %7
    %vm9 = vcmask 130160
    %10 = vst.msk [vmem:[#allocation0] sm:$0x1] %vm9, %v8
    %s11 = scalar_lea.vmem %s0, 6
    %v12 = vld [vmem:[%s11] sm:$0x1]
    %13 = vrot.lane.b32.xlu0 %v12, 12
    %v14 = vpop.permute.xlu0 %13
    %vm15 = vcmask 113760
    %16 = vst.msk [vmem:[#allocation0] sm:$0x1] %vm15, %v14
    %s17 = scalar_lea.vmem %s0, 5
    %v18 = vld [vmem:[%s17] sm:$0x1]
    %19 = vrot.lane.b32.xlu0 %v18, 10
    %v20 = vpop.permute.xlu0 %19
    %vm21 = vcmask 97360
    %22 = vst.msk [vmem:[#allocation0] sm:$0x1] %vm21, %v20
    %s23 = scalar_lea.vmem %s0, 4
    %v24 = vld [vmem:[%s23] sm:$0x1]
    %25 = vrot.lane.b32.xlu0 %v24, 8
    %v26 = vpop.permute.xlu0 %25
    %vm27 = vcmask 80960
    %28 = vst.msk [vmem:[#allocation0] sm:$0x1] %vm27, %v26
    %s29 = scalar_lea.vmem %s0, 3
    %v30 = vld [vmem:[%s29] sm:$0x1]
    %31 = vrot.lane.b32.xlu0 %v30, 6
    %v32 = vpop.permute.xlu0 %31
    %vm33 = vcmask 64560
    %34 = vst.msk [vmem:[#allocation0] sm:$0x1] %vm33, %v32
    %s35 = scalar_lea.vmem %s0, 2
    %v36 = vld [vmem:[%s35] sm:$0x1]
    %37 = vrot.lane.b32.xlu0 %v36, 4
    %v38 = vpop.permute.xlu0 %37
    %vm39 = vcmask 48160
    %40 = vst.msk [vmem:[#allocation0] sm:$0x1] %vm39, %v38
    %s41 = scalar_lea.vmem %s0, 1
    %v42 = vld [vmem:[%s41] sm:$0x1]
    %43 = vrot.lane.b32.xlu0 %v42, 2
    %v44 = vpop.permute.xlu0 %43
    %vm45 = vcmask 31760
    %46 = vst.msk [vmem:[#allocation0] sm:$0x1] %vm45, %v44
    %s48 = sshllo.u32 0, 1
    %v50 = vld [vmem:[#allocation0] sm:%s48]
    %s51 = sshllo.u32 0, 1
    %52 = vst [vmem:[%s1] sm:%s51] %v50

// kernel: lstnet_forward.1
$region0: #{lstnet_forward.1}
  #allocation0 [shape = 'u32[]', space=smem, size = 0x4, offset = 0x4, fixed_abs, tag = 'smem constant byte address 0x4 - core index']
  #allocation1 [shape = 'u32[144,128]{1,0:T(1,128)}', space=vmem, size = 0x12000, scoped, tag = 'internal scratch']
  #allocation2 [shape = 'f32[176,96]{1,0:T(8,128)}', space=vmem, size = 0x16000, scoped, tag = 'scratch operand']
  #allocation3 [shape = 'f32[160,24]{1,0:T(8,128)}', space=vmem, size = 0x14000, scoped, tag = 'scratch operand']
  %s0 = inlined_call_operand.vmem [shape: f32[184,32], index: 0, kind: input, shape index: {}]
  %s1 = inlined_call_operand.vmem [shape: f32[32,16], index: 1, kind: input, shape index: {}]
  %s2 = inlined_call_operand.vmem [shape: f32[16,120], index: 2, kind: input, shape index: {}]
  %s3 = inlined_call_operand.vmem [shape: f32[32,96], index: 3, kind: input, shape index: {}]
  %s4 = inlined_call_operand.vmem [shape: f32[8,24], index: 4, kind: input, shape index: {}]
  %s5 = inlined_call_operand.vmem [shape: f32[96,16], index: 5, kind: input, shape index: {}]
  %s6 = inlined_call_operand.vmem [shape: f32[8,96], index: 6, kind: input, shape index: {}]
  %s7 = inlined_call_operand.vmem [shape: f32[8,16], index: 7, kind: output, shape index: {}]
  %s8 = sld [smem:[#allocation0]]
  $region38: #{lstnet_forward.1} parent=0
    _
  %s10 = ssub.s32 1, %s8
  %s11 = scalar_select 0, %s10, %s8
  // Predicated region
  $region2: #{lstnet_forward.1} parent=0 // pred_check
    _
  $region3: #{lstnet_forward.1} parent=0 // pred_check_branch
    %13 = sbr.rel (0) target = $region5
  $region4: #{lstnet_forward.1} parent=0 // pred_region
    _
  $region5: #{lstnet_forward.1} parent=0 // pred_fallthru
    _
  // Predicated region
  $region6: #{lstnet_forward.1} parent=0 // pred_check
    _
  $region7: #{lstnet_forward.1} parent=0 // pred_check_branch
    %15 = sbr.rel (0) target = $region9
  $region8: #{lstnet_forward.1} parent=0 // pred_region
    _
  $region9: #{lstnet_forward.1} parent=0 // pred_fallthru
    _
  // Predicated region
  $region10: #{lstnet_forward.1} parent=0 // pred_check
    _
  $region11: #{lstnet_forward.1} parent=0 // pred_check_branch
    %17 = sbr.rel (0) target = $region13
  $region12: #{lstnet_forward.1} parent=0 // pred_region
    _
  $region13: #{lstnet_forward.1} parent=0 // pred_fallthru
    _
  // Predicated region
  $region14: #{lstnet_forward.1} parent=0 // pred_check
    _
  $region15: #{lstnet_forward.1} parent=0 // pred_check_branch
    %19 = sbr.rel (0) target = $region17
  $region16: #{lstnet_forward.1} parent=0 // pred_region
    _
  $region17: #{lstnet_forward.1} parent=0 // pred_fallthru
    _
  // Predicated region
  $region18: #{lstnet_forward.1} parent=0 // pred_check
    _
  $region19: #{lstnet_forward.1} parent=0 // pred_check_branch
    %21 = sbr.rel (0) target = $region21
  $region20: #{lstnet_forward.1} parent=0 // pred_region
    _
  $region21: #{lstnet_forward.1} parent=0 // pred_fallthru
    _
  // Predicated region
  $region22: #{lstnet_forward.1} parent=0 // pred_check
    _
  $region23: #{lstnet_forward.1} parent=0 // pred_check_branch
    %23 = sbr.rel (0) target = $region25
  $region24: #{lstnet_forward.1} parent=0 // pred_region
    _
  $region25: #{lstnet_forward.1} parent=0 // pred_fallthru
    _
  // Predicated region
  $region26: #{lstnet_forward.1} parent=0 // pred_check
    _
  $region27: #{lstnet_forward.1} parent=0 // pred_check_branch
    %25 = sbr.rel (0) target = $region29
  $region28: #{lstnet_forward.1} parent=0 // pred_region
    _
  $region29: #{lstnet_forward.1} parent=0 // pred_fallthru
    _
  %v26 = vld [vmem:[%s6] sm:$0xff]
  %v27 = vld [vmem:[%s0] sm:$0xff]
  %v28 = vld [vmem:[%s0 + $0x8] sm:$0xff]
  %v29 = vld [vmem:[%s0 + $0x10] sm:$0xff]
  %v30 = vld [vmem:[%s0 + $0x18] sm:$0xff]
  %v31 = vld [vmem:[%s0 + $0x20] sm:$0xff]
  %v32 = vld [vmem:[%s0 + $0x28] sm:$0xff]
  %v33 = vld [vmem:[%s0 + $0x30] sm:$0xff]
  %v34 = vld [vmem:[%s0 + $0x38] sm:$0xff]
  %v35 = vld [vmem:[%s0 + $0x40] sm:$0xff]
  %v36 = vld [vmem:[%s0 + $0x48] sm:$0xff]
  %v37 = vld [vmem:[%s0 + $0x50] sm:$0xff]
  %v38 = vld [vmem:[%s0 + $0x58] sm:$0xff]
  %v39 = vld [vmem:[%s0 + $0x60] sm:$0xff]
  %v40 = vld [vmem:[%s0 + $0x68] sm:$0xff]
  %v41 = vld [vmem:[%s0 + $0x70] sm:$0xff]
  %v42 = vld [vmem:[%s0 + $0x78] sm:$0xff]
  %v43 = vld [vmem:[%s0 + $0x80] sm:$0xff]
  %v44 = vld [vmem:[%s0 + $0x88] sm:$0xff]
  %v45 = vld [vmem:[%s0 + $0x90] sm:$0xff]
  %v46 = vld [vmem:[%s0 + $0x98] sm:$0xff]
  %v47 = vld [vmem:[%s0 + $0xa0] sm:$0xff]
  %v48 = vld [vmem:[%s0 + $0xa8] sm:$0xff]
  %v49 = vld [vmem:[%s1] sm:$0xff]
  %v50 = vld [vmem:[%s1 + $0x8] sm:$0xff]
  %v51 = vld [vmem:[%s1 + $0x10] sm:$0xff]
  %v52 = vld [vmem:[%s1 + $0x18] sm:$0xff]
  %vm53 = vcmask 261120
  %v55 = vsel %vm53, %v27, 0
  %v58 = vsel %vm53, %v28, 0
  %v61 = vsel %vm53, %v29, 0
  %v64 = vsel %vm53, %v30, 0
  %v67 = vsel %vm53, %v31, 0
  %v70 = vsel %vm53, %v32, 0
  %v73 = vsel %vm53, %v33, 0
  %v76 = vsel %vm53, %v34, 0
  %v79 = vsel %vm53, %v35, 0
  %v82 = vsel %vm53, %v36, 0
  %v85 = vsel %vm53, %v37, 0
  %v88 = vsel %vm53, %v38, 0
  %v91 = vsel %vm53, %v39, 0
  %v94 = vsel %vm53, %v40, 0
  %v97 = vsel %vm53, %v41, 0
  %v100 = vsel %vm53, %v42, 0
  %v103 = vsel %vm53, %v43, 0
  %v106 = vsel %vm53, %v44, 0
  %v109 = vsel %vm53, %v45, 0
  %v112 = vsel %vm53, %v46, 0
  %v115 = vsel %vm53, %v47, 0
  %v118 = vsel %vm53, %v48, 0
  %120 = vmatprep.subr.mxu0 0.0
  %121 = vmatpush1.msra.mxu0 %v49
  %122 = vmatprep.subr.mxu0 0.0
  %123 = vmatpush1.msra.mxu0 %v50
  %124 = vmatprep.subr.mxu0 0.0
  %125 = vmatpush1.msra.mxu0 %v51
  %126 = vmatprep.subr.mxu0 0.0
  %127 = vmatpush1.msra.mxu0 %v52
  %128 = vmatprep.subr.mxu0 0.0
  %129 = vmatpush1.msra.mxu0 0.0
  %130 = vmatprep.subr.mxu0 0.0
  %131 = vmatpush1.msra.mxu0 0.0
  %132 = vmatprep.subr.mxu0 0.0
  %133 = vmatpush1.msra.mxu0 0.0
  %134 = vmatprep.subr.mxu0 0.0
  %135 = vmatpush1.msra.mxu0 0.0
  %136 = vmatprep.subr.mxu0 0.0
  %137 = vmatpush1.msra.mxu0 0.0
  %138 = vmatprep.subr.mxu0 0.0
  %139 = vmatpush1.msra.mxu0 0.0
  %140 = vmatprep.subr.mxu0 0.0
  %141 = vmatpush1.msra.mxu0 0.0
  %142 = vmatprep.subr.mxu0 0.0
  %143 = vmatpush1.msra.mxu0 0.0
  %144 = vmatprep.subr.mxu0 0.0
  %145 = vmatpush1.msra.mxu0 0.0
  %146 = vmatprep.subr.mxu0 0.0
  %147 = vmatpush1.msra.mxu0 0.0
  %148 = vmatprep.subr.mxu0 0.0
  %149 = vmatpush1.msra.mxu0 0.0
  %150 = vmatprep.subr.mxu0 0.0
  %151 = vmatpush1.msra.mxu0 0.0
  %152 = vmatprep.subr.mxu0 0.0
  %153 = vmatpush1.msra.mxu0 0.0
  %154 = vmatprep.subr.mxu0 0.0
  %155 = vmatpush1.msra.mxu0 0.0
  %156 = vmatprep.subr.mxu0 0.0
  %157 = vmatpush1.msra.mxu0 0.0
  %158 = vmatprep.subr.mxu0 0.0
  %159 = vmatpush1.msra.mxu0 0.0
  %160 = vmatprep.subr.mxu0 0.0
  %161 = vmatpush1.msra.mxu0 0.0
  %162 = vmatprep.subr.mxu0 0.0
  %163 = vmatpush1.msra.mxu0 0.0
  %164 = vmatprep.subr.mxu0 0.0
  %165 = vmatpush1.msra.mxu0 0.0
  %166 = vmatprep.subr.mxu0 0.0
  %167 = vmatpush1.msra.mxu0 0.0
  %168 = vmatprep.subr.mxu0 0.0
  %169 = vmatpush1.msra.mxu0 0.0
  %170 = vmatprep.subr.mxu0 0.0
  %171 = vmatpush1.msra.mxu0 0.0
  %172 = vmatprep.subr.mxu0 0.0
  %173 = vmatpush1.msra.mxu0 0.0
  %174 = vmatprep.subr.mxu0 0.0
  %175 = vmatpush1.msra.mxu0 0.0
  %176 = vmatprep.subr.mxu0 0.0
  %177 = vmatpush1.msra.mxu0 0.0
  %178 = vmatprep.subr.mxu0 0.0
  %179 = vmatpush1.msra.mxu0 0.0
  %180 = vmatprep.subr.mxu0 0.0
  %181 = vmatpush1.msra.mxu0 0.0
  %182 = vmatprep.subr.mxu0 0.0
  %183 = vmatpush1.msra.mxu0 0.0
  %184 = vmatprep.mubr.f32.mxu0 0.0
  %185 = vmatmul.mubr.f32.gmra.mrb[0].mxu0 %v55
  %v186 = vpop.f32.mrb[0].mxu0
  %v187 = vadd.f32 0.0, %v186
  %v188 = vpop.f32.mrb[0].mxu0
  %189 = vmatprep.mubr.f32.mxu0 0.0
  %190 = vmatmul.mubr.f32.gmra.mrb[0].mxu0 %v58
  %v191 = vpop.f32.mrb[0].mxu0
  %v192 = vadd.f32 0.0, %v191
  %v193 = vpop.f32.mrb[0].mxu0
  %194 = vmatprep.mubr.f32.mxu0 0.0
  %195 = vmatmul.mubr.f32.gmra.mrb[0].mxu0 %v61
  %v196 = vpop.f32.mrb[0].mxu0
  %v197 = vadd.f32 0.0, %v196
  %v198 = vpop.f32.mrb[0].mxu0
  %199 = vmatprep.mubr.f32.mxu0 0.0
  %200 = vmatmul.mubr.f32.gmra.mrb[0].mxu0 %v64
  %v201 = vpop.f32.mrb[0].mxu0
  %v202 = vadd.f32 0.0, %v201
  %v203 = vpop.f32.mrb[0].mxu0
  %204 = vmatprep.mubr.f32.mxu0 0.0
  %205 = vmatmul.mubr.f32.gmra.mrb[0].mxu0 %v67
  %v206 = vpop.f32.mrb[0].mxu0
  %v207 = vadd.f32 0.0, %v206
  %v208 = vpop.f32.mrb[0].mxu0
  %209 = vmatprep.mubr.f32.mxu0 0.0
  %210 = vmatmul.mubr.f32.gmra.mrb[0].mxu0 %v70
  %v211 = vpop.f32.mrb[0].mxu0
  %v212 = vadd.f32 0.0, %v211
  %v213 = vpop.f32.mrb[0].mxu0
  %214 = vmatprep.mubr.f32.mxu0 0.0
  %215 = vmatmul.mubr.f32.gmra.mrb[0].mxu0 %v73
  %v216 = vpop.f32.mrb[0].mxu0
  %v217 = vadd.f32 0.0, %v216
  %v218 = vpop.f32.mrb[0].mxu0
  %219 = vmatprep.mubr.f32.mxu0 0.0
  %220 = vmatmul.mubr.f32.gmra.mrb[0].mxu0 %v76
  %v221 = vpop.f32.mrb[0].mxu0
  %v222 = vadd.f32 0.0, %v221
  %v223 = vpop.f32.mrb[0].mxu0
  %224 = vmatprep.mubr.f32.mxu0 0.0
  %225 = vmatmul.mubr.f32.gmra.mrb[0].mxu0 %v79
  %v226 = vpop.f32.mrb[0].mxu0
  %v227 = vadd.f32 0.0, %v226
  %v228 = vpop.f32.mrb[0].mxu0
  %229 = vmatprep.mubr.f32.mxu0 0.0
  %230 = vmatmul.mubr.f32.gmra.mrb[0].mxu0 %v82
  %v231 = vpop.f32.mrb[0].mxu0
  %v232 = vadd.f32 0.0, %v231
  %v233 = vpop.f32.mrb[0].mxu0
  %234 = vmatprep.mubr.f32.mxu0 0.0
  %235 = vmatmul.mubr.f32.gmra.mrb[0].mxu0 %v85
  %v236 = vpop.f32.mrb[0].mxu0
  %v237 = vadd.f32 0.0, %v236
  %v238 = vpop.f32.mrb[0].mxu0
  %239 = vmatprep.mubr.f32.mxu0 0.0
  %240 = vmatmul.mubr.f32.gmra.mrb[0].mxu0 %v88
  %v241 = vpop.f32.mrb[0].mxu0
  %v242 = vadd.f32 0.0, %v241
  %v243 = vpop.f32.mrb[0].mxu0
  %244 = vmatprep.mubr.f32.mxu0 0.0
  %245 = vmatmul.mubr.f32.gmra.mrb[0].mxu0 %v91
  %v246 = vpop.f32.mrb[0].mxu0
  %v247 = vadd.f32 0.0, %v246
  %v248 = vpop.f32.mrb[0].mxu0
  %249 = vmatprep.mubr.f32.mxu0 0.0
  %250 = vmatmul.mubr.f32.gmra.mrb[0].mxu0 %v94
  %v251 = vpop.f32.mrb[0].mxu0
  %v252 = vadd.f32 0.0, %v251
  %v253 = vpop.f32.mrb[0].mxu0
  %254 = vmatprep.mubr.f32.mxu0 0.0
  %255 = vmatmul.mubr.f32.gmra.mrb[0].mxu0 %v97
  %v256 = vpop.f32.mrb[0].mxu0
  %v257 = vadd.f32 0.0, %v256
  %v258 = vpop.f32.mrb[0].mxu0
  %259 = vmatprep.mubr.f32.mxu0 0.0
  %260 = vmatmul.mubr.f32.gmra.mrb[0].mxu0 %v100
  %v261 = vpop.f32.mrb[0].mxu0
  %v262 = vadd.f32 0.0, %v261
  %v263 = vpop.f32.mrb[0].mxu0
  %264 = vmatprep.mubr.f32.mxu0 0.0
  %265 = vmatmul.mubr.f32.gmra.mrb[0].mxu0 %v103
  %v266 = vpop.f32.mrb[0].mxu0
  %v267 = vadd.f32 0.0, %v266
  %v268 = vpop.f32.mrb[0].mxu0
  %269 = vmatprep.mubr.f32.mxu0 0.0
  %270 = vmatmul.mubr.f32.gmra.mrb[0].mxu0 %v106
  %v271 = vpop.f32.mrb[0].mxu0
  %v272 = vadd.f32 0.0, %v271
  %v273 = vpop.f32.mrb[0].mxu0
  %274 = vmatprep.mubr.f32.mxu0 0.0
  %275 = vmatmul.mubr.f32.gmra.mrb[0].mxu0 %v109
  %v276 = vpop.f32.mrb[0].mxu0
  %v277 = vadd.f32 0.0, %v276
  %v278 = vpop.f32.mrb[0].mxu0
  %279 = vmatprep.mubr.f32.mxu0 0.0
  %280 = vmatmul.mubr.f32.gmra.mrb[0].mxu0 %v112
  %v281 = vpop.f32.mrb[0].mxu0
  %v282 = vadd.f32 0.0, %v281
  %v283 = vpop.f32.mrb[0].mxu0
  %284 = vmatprep.mubr.f32.mxu0 0.0
  %285 = vmatmul.mubr.f32.gmra.mrb[0].mxu0 %v115
  %v286 = vpop.f32.mrb[0].mxu0
  %v287 = vadd.f32 0.0, %v286
  %v288 = vpop.f32.mrb[0].mxu0
  %289 = vmatprep.mubr.f32.mxu0 0.0
  %290 = vmatmul.mubr.f32.gmra.mrb[0].mxu0 %v118
  %v291 = vpop.f32.mrb[0].mxu0
  %v292 = vadd.f32 0.0, %v291
  %v293 = vpop.f32.mrb[0].mxu0
  %294 = vdwg.mxu0
  %v295 = vmax.f32 %v187, 0.0
  %v296 = vmax.f32 %v192, 0.0
  %v297 = vmax.f32 %v197, 0.0
  %v298 = vmax.f32 %v202, 0.0
  %v299 = vmax.f32 %v207, 0.0
  %v300 = vmax.f32 %v212, 0.0
  %v301 = vmax.f32 %v217, 0.0
  %v302 = vmax.f32 %v222, 0.0
  %v303 = vmax.f32 %v227, 0.0
  %v304 = vmax.f32 %v232, 0.0
  %v305 = vmax.f32 %v237, 0.0
  %v306 = vmax.f32 %v242, 0.0
  %v307 = vmax.f32 %v247, 0.0
  %v308 = vmax.f32 %v252, 0.0
  %v309 = vmax.f32 %v257, 0.0
  %v310 = vmax.f32 %v262, 0.0
  %v311 = vmax.f32 %v267, 0.0
  %v312 = vmax.f32 %v272, 0.0
  %v313 = vmax.f32 %v277, 0.0
  %v314 = vmax.f32 %v282, 0.0
  %v315 = vmax.f32 %v287, 0.0
  %v316 = vmax.f32 %v292, 0.0
  %v317 = vld [vmem:[%s2] sm:$0xff]
  %v318 = vld [vmem:[%s2 + $0x8] sm:$0xff]
  %vm319 = vcmask 130048
  %v321 = vsel %vm319, %v295, 0
  %v324 = vsel %vm319, %v296, 0
  %v327 = vsel %vm319, %v297, 0
  %v330 = vsel %vm319, %v298, 0
  %v333 = vsel %vm319, %v299, 0
  %v336 = vsel %vm319, %v300, 0
  %v339 = vsel %vm319, %v301, 0
  %v342 = vsel %vm319, %v302, 0
  %v345 = vsel %vm319, %v303, 0
  %v348 = vsel %vm319, %v304, 0
  %v351 = vsel %vm319, %v305, 0
  %v354 = vsel %vm319, %v306, 0
  %v357 = vsel %vm319, %v307, 0
  %v360 = vsel %vm319, %v308, 0
  %v363 = vsel %vm319, %v309, 0
  %v366 = vsel %vm319, %v310, 0
  %v369 = vsel %vm319, %v311, 0
  %v372 = vsel %vm319, %v312, 0
  %v375 = vsel %vm319, %v313, 0
  %v378 = vsel %vm319, %v314, 0
  %v381 = vsel %vm319, %v315, 0
  %v384 = vsel %vm319, %v316, 0
  %386 = vmatprep.subr.mxu0 0.0
  %387 = vmatpush1.msra.mxu0 %v317
  %388 = vmatprep.subr.mxu0 0.0
  %389 = vmatpush1.msra.mxu0 %v318
  %390 = vmatprep.subr.mxu0 0.0
  %391 = vmatpush1.msra.mxu0 0.0
  %392 = vmatprep.subr.mxu0 0.0
  %393 = vmatpush1.msra.mxu0 0.0
  %394 = vmatprep.subr.mxu0 0.0
  %395 = vmatpush1.msra.mxu0 0.0
  %396 = vmatprep.subr.mxu0 0.0
  %397 = vmatpush1.msra.mxu0 0.0
  %398 = vmatprep.subr.mxu0 0.0
  %399 = vmatpush1.msra.mxu0 0.0
  %400 = vmatprep.subr.mxu0 0.0
  %401 = vmatpush1.msra.mxu0 0.0
  %402 = vmatprep.subr.mxu0 0.0
  %403 = vmatpush1.msra.mxu0 0.0
  %404 = vmatprep.subr.mxu0 0.0
  %405 = vmatpush1.msra.mxu0 0.0
  %406 = vmatprep.subr.mxu0 0.0
  %407 = vmatpush1.msra.mxu0 0.0
  %408 = vmatprep.subr.mxu0 0.0
  %409 = vmatpush1.msra.mxu0 0.0
  %410 = vmatprep.subr.mxu0 0.0
  %411 = vmatpush1.msra.mxu0 0.0
  %412 = vmatprep.subr.mxu0 0.0
  %413 = vmatpush1.msra.mxu0 0.0
  %414 = vmatprep.subr.mxu0 0.0
  %415 = vmatpush1.msra.mxu0 0.0
  %416 = vmatprep.subr.mxu0 0.0
  %417 = vmatpush1.msra.mxu0 0.0
  %418 = vmatprep.subr.mxu0 0.0
  %419 = vmatpush1.msra.mxu0 0.0
  %420 = vmatprep.subr.mxu0 0.0
  %421 = vmatpush1.msra.mxu0 0.0
  %422 = vmatprep.subr.mxu0 0.0
  %423 = vmatpush1.msra.mxu0 0.0
  %424 = vmatprep.subr.mxu0 0.0
  %425 = vmatpush1.msra.mxu0 0.0
  %426 = vmatprep.subr.mxu0 0.0
  %427 = vmatpush1.msra.mxu0 0.0
  %428 = vmatprep.subr.mxu0 0.0
  %429 = vmatpush1.msra.mxu0 0.0
  %430 = vmatprep.subr.mxu0 0.0
  %431 = vmatpush1.msra.mxu0 0.0
  %432 = vmatprep.subr.mxu0 0.0
  %433 = vmatpush1.msra.mxu0 0.0
  %434 = vmatprep.subr.mxu0 0.0
  %435 = vmatpush1.msra.mxu0 0.0
  %436 = vmatprep.subr.mxu0 0.0
  %437 = vmatpush1.msra.mxu0 0.0
  %438 = vmatprep.subr.mxu0 0.0
  %439 = vmatpush1.msra.mxu0 0.0
  %440 = vmatprep.subr.mxu0 0.0
  %441 = vmatpush1.msra.mxu0 0.0
  %442 = vmatprep.subr.mxu0 0.0
  %443 = vmatpush1.msra.mxu0 0.0
  %444 = vmatprep.subr.mxu0 0.0
  %445 = vmatpush1.msra.mxu0 0.0
  %446 = vmatprep.subr.mxu0 0.0
  %447 = vmatpush1.msra.mxu0 0.0
  %448 = vmatprep.subr.mxu0 0.0
  %449 = vmatpush1.msra.mxu0 0.0
  %450 = vmatprep.mubr.f32.mxu0 0.0
  %451 = vmatmul.mubr.f32.gmra.mrb[0].mxu0 %v321
  %v452 = vpop.f32.mrb[0].mxu0
  %v453 = vadd.f32 0.0, %v452
  %v454 = vpop.f32.mrb[0].mxu0
  %455 = vmatprep.mubr.f32.mxu0 0.0
  %456 = vmatmul.mubr.f32.gmra.mrb[0].mxu0 %v324
  %v457 = vpop.f32.mrb[0].mxu0
  %v458 = vadd.f32 0.0, %v457
  %v459 = vpop.f32.mrb[0].mxu0
  %460 = vmatprep.mubr.f32.mxu0 0.0
  %461 = vmatmul.mubr.f32.gmra.mrb[0].mxu0 %v327
  %v462 = vpop.f32.mrb[0].mxu0
  %v463 = vadd.f32 0.0, %v462
  %v464 = vpop.f32.mrb[0].mxu0
  %465 = vmatprep.mubr.f32.mxu0 0.0
  %466 = vmatmul.mubr.f32.gmra.mrb[0].mxu0 %v330
  %v467 = vpop.f32.mrb[0].mxu0
  %v468 = vadd.f32 0.0, %v467
  %v469 = vpop.f32.mrb[0].mxu0
  %470 = vmatprep.mubr.f32.mxu0 0.0
  %471 = vmatmul.mubr.f32.gmra.mrb[0].mxu0 %v333
  %v472 = vpop.f32.mrb[0].mxu0
  %v473 = vadd.f32 0.0, %v472
  %v474 = vpop.f32.mrb[0].mxu0
  %475 = vmatprep.mubr.f32.mxu0 0.0
  %476 = vmatmul.mubr.f32.gmra.mrb[0].mxu0 %v336
  %v477 = vpop.f32.mrb[0].mxu0
  %v478 = vadd.f32 0.0, %v477
  %v479 = vpop.f32.mrb[0].mxu0
  %480 = vmatprep.mubr.f32.mxu0 0.0
  %481 = vmatmul.mubr.f32.gmra.mrb[0].mxu0 %v339
  %v482 = vpop.f32.mrb[0].mxu0
  %v483 = vadd.f32 0.0, %v482
  %v484 = vpop.f32.mrb[0].mxu0
  %485 = vmatprep.mubr.f32.mxu0 0.0
  %486 = vmatmul.mubr.f32.gmra.mrb[0].mxu0 %v342
  %v487 = vpop.f32.mrb[0].mxu0
  %v488 = vadd.f32 0.0, %v487
  %v489 = vpop.f32.mrb[0].mxu0
  %490 = vmatprep.mubr.f32.mxu0 0.0
  %491 = vmatmul.mubr.f32.gmra.mrb[0].mxu0 %v345
  %v492 = vpop.f32.mrb[0].mxu0
  %v493 = vadd.f32 0.0, %v492
  %v494 = vpop.f32.mrb[0].mxu0
  %495 = vmatprep.mubr.f32.mxu0 0.0
  %496 = vmatmul.mubr.f32.gmra.mrb[0].mxu0 %v348
  %v497 = vpop.f32.mrb[0].mxu0
  %v498 = vadd.f32 0.0, %v497
  %v499 = vpop.f32.mrb[0].mxu0
  %500 = vmatprep.mubr.f32.mxu0 0.0
  %501 = vmatmul.mubr.f32.gmra.mrb[0].mxu0 %v351
  %v502 = vpop.f32.mrb[0].mxu0
  %v503 = vadd.f32 0.0, %v502
  %v504 = vpop.f32.mrb[0].mxu0
  %505 = vmatprep.mubr.f32.mxu0 0.0
  %506 = vmatmul.mubr.f32.gmra.mrb[0].mxu0 %v354
  %v507 = vpop.f32.mrb[0].mxu0
  %v508 = vadd.f32 0.0, %v507
  %v509 = vpop.f32.mrb[0].mxu0
  %510 = vmatprep.mubr.f32.mxu0 0.0
  %511 = vmatmul.mubr.f32.gmra.mrb[0].mxu0 %v357
  %v512 = vpop.f32.mrb[0].mxu0
  %v513 = vadd.f32 0.0, %v512
  %v514 = vpop.f32.mrb[0].mxu0
  %515 = vmatprep.mubr.f32.mxu0 0.0
  %516 = vmatmul.mubr.f32.gmra.mrb[0].mxu0 %v360
  %v517 = vpop.f32.mrb[0].mxu0
  %v518 = vadd.f32 0.0, %v517
  %v519 = vpop.f32.mrb[0].mxu0
  %520 = vmatprep.mubr.f32.mxu0 0.0
  %521 = vmatmul.mubr.f32.gmra.mrb[0].mxu0 %v363
  %v522 = vpop.f32.mrb[0].mxu0
  %v523 = vadd.f32 0.0, %v522
  %v524 = vpop.f32.mrb[0].mxu0
  %525 = vmatprep.mubr.f32.mxu0 0.0
  %526 = vmatmul.mubr.f32.gmra.mrb[0].mxu0 %v366
  %v527 = vpop.f32.mrb[0].mxu0
  %v528 = vadd.f32 0.0, %v527
  %v529 = vpop.f32.mrb[0].mxu0
  %530 = vmatprep.mubr.f32.mxu0 0.0
  %531 = vmatmul.mubr.f32.gmra.mrb[0].mxu0 %v369
  %v532 = vpop.f32.mrb[0].mxu0
  %v533 = vadd.f32 0.0, %v532
  %v534 = vpop.f32.mrb[0].mxu0
  %535 = vmatprep.mubr.f32.mxu0 0.0
  %536 = vmatmul.mubr.f32.gmra.mrb[0].mxu0 %v372
  %v537 = vpop.f32.mrb[0].mxu0
  %v538 = vadd.f32 0.0, %v537
  %v539 = vpop.f32.mrb[0].mxu0
  %540 = vmatprep.mubr.f32.mxu0 0.0
  %541 = vmatmul.mubr.f32.gmra.mrb[0].mxu0 %v375
  %v542 = vpop.f32.mrb[0].mxu0
  %v543 = vadd.f32 0.0, %v542
  %v544 = vpop.f32.mrb[0].mxu0
  %545 = vmatprep.mubr.f32.mxu0 0.0
  %546 = vmatmul.mubr.f32.gmra.mrb[0].mxu0 %v378
  %v547 = vpop.f32.mrb[0].mxu0
  %v548 = vadd.f32 0.0, %v547
  %v549 = vpop.f32.mrb[0].mxu0
  %550 = vmatprep.mubr.f32.mxu0 0.0
  %551 = vmatmul.mubr.f32.gmra.mrb[0].mxu0 %v381
  %v552 = vpop.f32.mrb[0].mxu0
  %v553 = vadd.f32 0.0, %v552
  %v554 = vpop.f32.mrb[0].mxu0
  %555 = vmatprep.mubr.f32.mxu0 0.0
  %556 = vmatmul.mubr.f32.gmra.mrb[0].mxu0 %v384
  %v557 = vpop.f32.mrb[0].mxu0
  %v558 = vadd.f32 0.0, %v557
  %v559 = vpop.f32.mrb[0].mxu0
  %560 = vdwg.mxu0
  %v561 = vlaneseq
  %v562 = vshrl.u32 %v561, 7
  %v563 = vsub.s32 0, %v562
  %v564 = vrot.slane %v26, %v563
  %v565 = vadd.f32 %v453, %v564
  %v566 = vadd.f32 %v458, %v564
  %v567 = vadd.f32 %v463, %v564
  %v568 = vadd.f32 %v468, %v564
  %v569 = vadd.f32 %v473, %v564
  %v570 = vadd.f32 %v478, %v564
  %v571 = vadd.f32 %v483, %v564
  %v572 = vadd.f32 %v488, %v564
  %v573 = vadd.f32 %v493, %v564
  %v574 = vadd.f32 %v498, %v564
  %v575 = vadd.f32 %v503, %v564
  %v576 = vadd.f32 %v508, %v564
  %v577 = vadd.f32 %v513, %v564
  %v578 = vadd.f32 %v518, %v564
  %v579 = vadd.f32 %v523, %v564
  %v580 = vadd.f32 %v528, %v564
  %v581 = vadd.f32 %v533, %v564
  %v582 = vadd.f32 %v538, %v564
  %v583 = vadd.f32 %v543, %v564
  %v584 = vadd.f32 %v548, %v564
  %v585 = vadd.f32 %v553, %v564
  %v586 = vadd.f32 %v558, %v564
  %vm587 = vcmask 785408
  %588 = vst.msk [vmem:[#allocation2] sm:$0xff] %vm587, %v565
  %589 = vst.msk [vmem:[#allocation2 + $0x8] sm:$0xff] %vm587, %v566
  %590 = vst.msk [vmem:[#allocation2 + $0x10] sm:$0xff] %vm587, %v567
  %591 = vst.msk [vmem:[#allocation2 + $0x18] sm:$0xff] %vm587, %v568
  %592 = vst.msk [vmem:[#allocation2 + $0x20] sm:$0xff] %vm587, %v569
  %593 = vst.msk [vmem:[#allocation2 + $0x28] sm:$0xff] %vm587, %v570
  %594 = vst.msk [vmem:[#allocation2 + $0x30] sm:$0xff] %vm587, %v571
  %595 = vst.msk [vmem:[#allocation2 + $0x38] sm:$0xff] %vm587, %v572
  %596 = vst.msk [vmem:[#allocation2 + $0x40] sm:$0xff] %vm587, %v573
  %597 = vst.msk [vmem:[#allocation2 + $0x48] sm:$0xff] %vm587, %v574
  %598 = vst.msk [vmem:[#allocation2 + $0x50] sm:$0xff] %vm587, %v575
  %599 = vst.msk [vmem:[#allocation2 + $0x58] sm:$0xff] %vm587, %v576
  %600 = vst.msk [vmem:[#allocation2 + $0x60] sm:$0xff] %vm587, %v577
  %601 = vst.msk [vmem:[#allocation2 + $0x68] sm:$0xff] %vm587, %v578
  %602 = vst.msk [vmem:[#allocation2 + $0x70] sm:$0xff] %vm587, %v579
  %603 = vst.msk [vmem:[#allocation2 + $0x78] sm:$0xff] %vm587, %v580
  %604 = vst.msk [vmem:[#allocation2 + $0x80] sm:$0xff] %vm587, %v581
  %605 = vst.msk [vmem:[#allocation2 + $0x88] sm:$0xff] %vm587, %v582
  %606 = vst.msk [vmem:[#allocation2 + $0x90] sm:$0xff] %vm587, %v583
  %607 = vst.msk [vmem:[#allocation2 + $0x98] sm:$0xff] %vm587, %v584
  %608 = vst.msk [vmem:[#allocation2 + $0xa0] sm:$0xff] %vm587, %v585
  %609 = vst.msk [vmem:[#allocation2 + $0xa8] sm:$0xff] %vm587, %v586
  %v610 = vlaneseq
  %v611 = vshrl.u32 %v610, 7
  %v612 = vsub.s32 2, %v611
  %v613 = vrot.slane %v26, %v612
  %615 = vrot.lane.b32.xlu0 %v613, 96
  %v616 = vpop.permute.xlu0 %615
  %v618 = vadd.f32 %v463, %v616
  %v619 = vadd.f32 %v468, %v616
  %v620 = vadd.f32 %v473, %v616
  %v621 = vadd.f32 %v478, %v616
  %v622 = vadd.f32 %v483, %v616
  %v623 = vadd.f32 %v488, %v616
  %v624 = vadd.f32 %v493, %v616
  %v625 = vadd.f32 %v498, %v616
  %v626 = vadd.f32 %v503, %v616
  %v627 = vadd.f32 %v508, %v616
  %v628 = vadd.f32 %v513, %v616
  %v629 = vadd.f32 %v518, %v616
  %v630 = vadd.f32 %v523, %v616
  %v631 = vadd.f32 %v528, %v616
  %v632 = vadd.f32 %v533, %v616
  %v633 = vadd.f32 %v538, %v616
  %v634 = vadd.f32 %v543, %v616
  %v635 = vadd.f32 %v548, %v616
  %v636 = vadd.f32 %v553, %v616
  %v637 = vadd.f32 %v558, %v616
  %658 = vrot.lane.b32.xlu0 %v618, 32
  %v659 = vpop.permute.xlu0 %658
  %660 = vrot.lane.b32.xlu0 %v619, 32
  %v661 = vpop.permute.xlu0 %660
  %662 = vrot.lane.b32.xlu0 %v620, 32
  %v663 = vpop.permute.xlu0 %662
  %664 = vrot.lane.b32.xlu0 %v621, 32
  %v665 = vpop.permute.xlu0 %664
  %666 = vrot.lane.b32.xlu0 %v622, 32
  %v667 = vpop.permute.xlu0 %666
  %668 = vrot.lane.b32.xlu0 %v623, 32
  %v669 = vpop.permute.xlu0 %668
  %670 = vrot.lane.b32.xlu0 %v624, 32
  %v671 = vpop.permute.xlu0 %670
  %672 = vrot.lane.b32.xlu0 %v625, 32
  %v673 = vpop.permute.xlu0 %672
  %674 = vrot.lane.b32.xlu0 %v626, 32
  %v675 = vpop.permute.xlu0 %674
  %676 = vrot.lane.b32.xlu0 %v627, 32
  %v677 = vpop.permute.xlu0 %676
  %678 = vrot.lane.b32.xlu0 %v628, 32
  %v679 = vpop.permute.xlu0 %678
  %680 = vrot.lane.b32.xlu0 %v629, 32
  %v681 = vpop.permute.xlu0 %680
  %682 = vrot.lane.b32.xlu0 %v630, 32
  %v683 = vpop.permute.xlu0 %682
  %684 = vrot.lane.b32.xlu0 %v631, 32
  %v685 = vpop.permute.xlu0 %684
  %686 = vrot.lane.b32.xlu0 %v632, 32
  %v687 = vpop.permute.xlu0 %686
  %688 = vrot.lane.b32.xlu0 %v633, 32
  %v689 = vpop.permute.xlu0 %688
  %690 = vrot.lane.b32.xlu0 %v634, 32
  %v691 = vpop.permute.xlu0 %690
  %692 = vrot.lane.b32.xlu0 %v635, 32
  %v693 = vpop.permute.xlu0 %692
  %694 = vrot.lane.b32.xlu0 %v636, 32
  %v695 = vpop.permute.xlu0 %694
  %696 = vrot.lane.b32.xlu0 %v637, 32
  %v697 = vpop.permute.xlu0 %696
  %vm718 = vcmask 195584
  %719 = vst.msk [vmem:[#allocation3] sm:$0xff] %vm718, %v659
  %720 = vst.msk [vmem:[#allocation3 + $0x8] sm:$0xff] %vm718, %v661
  %721 = vst.msk [vmem:[#allocation3 + $0x10] sm:$0xff] %vm718, %v663
  %722 = vst.msk [vmem:[#allocation3 + $0x18] sm:$0xff] %vm718, %v665
  %723 = vst.msk [vmem:[#allocation3 + $0x20] sm:$0xff] %vm718, %v667
  %724 = vst.msk [vmem:[#allocation3 + $0x28] sm:$0xff] %vm718, %v669
  %725 = vst.msk [vmem:[#allocation3 + $0x30] sm:$0xff] %vm718, %v671
  %726 = vst.msk [vmem:[#allocation3 + $0x38] sm:$0xff] %vm718, %v673
  %727 = vst.msk [vmem:[#allocation3 + $0x40] sm:$0xff] %vm718, %v675
  %728 = vst.msk [vmem:[#allocation3 + $0x48] sm:$0xff] %vm718, %v677
  %729 = vst.msk [vmem:[#allocation3 + $0x50] sm:$0xff] %vm718, %v679
  %730 = vst.msk [vmem:[#allocation3 + $0x58] sm:$0xff] %vm718, %v681
  %731 = vst.msk [vmem:[#allocation3 + $0x60] sm:$0xff] %vm718, %v683
  %732 = vst.msk [vmem:[#allocation3 + $0x68] sm:$0xff] %vm718, %v685
  %733 = vst.msk [vmem:[#allocation3 + $0x70] sm:$0xff] %vm718, %v687
  %734 = vst.msk [vmem:[#allocation3 + $0x78] sm:$0xff] %vm718, %v689
  %735 = vst.msk [vmem:[#allocation3 + $0x80] sm:$0xff] %vm718, %v691
  %736 = vst.msk [vmem:[#allocation3 + $0x88] sm:$0xff] %vm718, %v693
  %737 = vst.msk [vmem:[#allocation3 + $0x90] sm:$0xff] %vm718, %v695
  %738 = vst.msk [vmem:[#allocation3 + $0x98] sm:$0xff] %vm718, %v697
  %v739 = vld [vmem:[%s3] sm:$0xff]
  %v740 = vld [vmem:[%s3 + $0x8] sm:$0xff]
  %v741 = vld [vmem:[%s3 + $0x10] sm:$0xff]
  %v742 = vld [vmem:[%s3 + $0x18] sm:$0xff]
  %v743 = vld [vmem:[%s4] sm:$0xff]
  %v744 = vlaneseq
  %v745 = vshrl.u32 %v744, 7
  %v746 = vsub.s32 1, %v745
  %v747 = vrot.slane %v26, %v746
  %v748 = vlaneseq
  %v749 = vshrl.u32 %v748, 7
  %v750 = vsub.s32 3, %v749
  %v751 = vrot.slane %v26, %v750
  %v752 = vld [vmem:[#allocation2] sm:$0xff]
  %v754 = vsel %vm53, 0.0, 0
  %756 = vmatprep.subr.mxu0 0.0
  %757 = vmatpush1.msra.mxu0 %v739
  %758 = vmatprep.subr.mxu0 0.0
  %759 = vmatpush1.msra.mxu0 %v740
  %760 = vmatprep.subr.mxu0 0.0
  %761 = vmatpush1.msra.mxu0 %v741
  %762 = vmatprep.subr.mxu0 0.0
  %763 = vmatpush1.msra.mxu0 %v742
  %764 = vmatprep.subr.mxu0 0.0
  %765 = vmatpush1.msra.mxu0 0.0
  %766 = vmatprep.subr.mxu0 0.0
  %767 = vmatpush1.msra.mxu0 0.0
  %768 = vmatprep.subr.mxu0 0.0
  %769 = vmatpush1.msra.mxu0 0.0
  %770 = vmatprep.subr.mxu0 0.0
  %771 = vmatpush1.msra.mxu0 0.0
  %772 = vmatprep.subr.mxu0 0.0
  %773 = vmatpush1.msra.mxu0 0.0
  %774 = vmatprep.subr.mxu0 0.0
  %775 = vmatpush1.msra.mxu0 0.0
  %776 = vmatprep.subr.mxu0 0.0
  %777 = vmatpush1.msra.mxu0 0.0
  %778 = vmatprep.subr.mxu0 0.0
  %779 = vmatpush1.msra.mxu0 0.0
  %780 = vmatprep.subr.mxu0 0.0
  %781 = vmatpush1.msra.mxu0 0.0
  %782 = vmatprep.subr.mxu0 0.0
  %783 = vmatpush1.msra.mxu0 0.0
  %784 = vmatprep.subr.mxu0 0.0
  %785 = vmatpush1.msra.mxu0 0.0
  %786 = vmatprep.subr.mxu0 0.0
  %787 = vmatpush1.msra.mxu0 0.0
  %788 = vmatprep.subr.mxu0 0.0
  %789 = vmatpush1.msra.mxu0 0.0
  %790 = vmatprep.subr.mxu0 0.0
  %791 = vmatpush1.msra.mxu0 0.0
  %792 = vmatprep.subr.mxu0 0.0
  %793 = vmatpush1.msra.mxu0 0.0
  %794 = vmatprep.subr.mxu0 0.0
  %795 = vmatpush1.msra.mxu0 0.0
  %796 = vmatprep.subr.mxu0 0.0
  %797 = vmatpush1.msra.mxu0 0.0
  %798 = vmatprep.subr.mxu0 0.0
  %799 = vmatpush1.msra.mxu0 0.0
  %800 = vmatprep.subr.mxu0 0.0
  %801 = vmatpush1.msra.mxu0 0.0
  %802 = vmatprep.subr.mxu0 0.0
  %803 = vmatpush1.msra.mxu0 0.0
  %804 = vmatprep.subr.mxu0 0.0
  %805 = vmatpush1.msra.mxu0 0.0
  %806 = vmatprep.subr.mxu0 0.0
  %807 = vmatpush1.msra.mxu0 0.0
  %808 = vmatprep.subr.mxu0 0.0
  %809 = vmatpush1.msra.mxu0 0.0
  %810 = vmatprep.subr.mxu0 0.0
  %811 = vmatpush1.msra.mxu0 0.0
  %812 = vmatprep.subr.mxu0 0.0
  %813 = vmatpush1.msra.mxu0 0.0
  %814 = vmatprep.subr.mxu0 0.0
  %815 = vmatpush1.msra.mxu0 0.0
  %816 = vmatprep.subr.mxu0 0.0
  %817 = vmatpush1.msra.mxu0 0.0
  %818 = vmatprep.subr.mxu0 0.0
  %819 = vmatpush1.msra.mxu0 0.0
  %820 = vmatprep.mubr.f32.mxu0 0.0
  %821 = vmatmul.mubr.f32.gmra.mrb[0].mxu0 %v754
  %v822 = vpop.f32.mrb[0].mxu0
  %v823 = vadd.f32 %v747, %v822
  %v824 = vpop.f32.mrb[0].mxu0
  %825 = vdwg.mxu0
  %v826 = vld [vmem:[#allocation3] sm:$0xff]
  %v827 = vld [vmem:[#allocation3 + $0x8] sm:$0xff]
  %v828 = vld [vmem:[#allocation3 + $0x10] sm:$0xff]
  %v829 = vld [vmem:[#allocation3 + $0x18] sm:$0xff]
  %vm830 = vcmask 64512
  %v831 = vsel %vm830, 0.0, 0
  %833 = vmatprep.subr.mxu0 0.0
  %834 = vmatpush1.msra.mxu0 %v743
  %835 = vmatprep.subr.mxu0 0.0
  %836 = vmatpush1.msra.mxu0 0.0
  %837 = vmatprep.subr.mxu0 0.0
  %838 = vmatpush1.msra.mxu0 0.0
  %839 = vmatprep.subr.mxu0 0.0
  %840 = vmatpush1.msra.mxu0 0.0
  %841 = vmatprep.subr.mxu0 0.0
  %842 = vmatpush1.msra.mxu0 0.0
  %843 = vmatprep.subr.mxu0 0.0
  %844 = vmatpush1.msra.mxu0 0.0
  %845 = vmatprep.subr.mxu0 0.0
  %846 = vmatpush1.msra.mxu0 0.0
  %847 = vmatprep.subr.mxu0 0.0
  %848 = vmatpush1.msra.mxu0 0.0
  %849 = vmatprep.subr.mxu0 0.0
  %850 = vmatpush1.msra.mxu0 0.0
  %851 = vmatprep.subr.mxu0 0.0
  %852 = vmatpush1.msra.mxu0 0.0
  %853 = vmatprep.subr.mxu0 0.0
  %854 = vmatpush1.msra.mxu0 0.0
  %855 = vmatprep.subr.mxu0 0.0
  %856 = vmatpush1.msra.mxu0 0.0
  %857 = vmatprep.subr.mxu0 0.0
  %858 = vmatpush1.msra.mxu0 0.0
  %859 = vmatprep.subr.mxu0 0.0
  %860 = vmatpush1.msra.mxu0 0.0
  %861 = vmatprep.subr.mxu0 0.0
  %862 = vmatpush1.msra.mxu0 0.0
  %863 = vmatprep.subr.mxu0 0.0
  %864 = vmatpush1.msra.mxu0 0.0
  %865 = vmatprep.subr.mxu0 0.0
  %866 = vmatpush1.msra.mxu0 0.0
  %867 = vmatprep.subr.mxu0 0.0
  %868 = vmatpush1.msra.mxu0 0.0
  %869 = vmatprep.subr.mxu0 0.0
  %870 = vmatpush1.msra.mxu0 0.0
  %871 = vmatprep.subr.mxu0 0.0
  %872 = vmatpush1.msra.mxu0 0.0
  %873 = vmatprep.subr.mxu0 0.0
  %874 = vmatpush1.msra.mxu0 0.0
  %875 = vmatprep.subr.mxu0 0.0
  %876 = vmatpush1.msra.mxu0 0.0
  %877 = vmatprep.subr.mxu0 0.0
  %878 = vmatpush1.msra.mxu0 0.0
  %879 = vmatprep.subr.mxu0 0.0
  %880 = vmatpush1.msra.mxu0 0.0
  %881 = vmatprep.subr.mxu0 0.0
  %882 = vmatpush1.msra.mxu0 0.0
  %883 = vmatprep.subr.mxu0 0.0
  %884 = vmatpush1.msra.mxu0 0.0
  %885 = vmatprep.subr.mxu0 0.0
  %886 = vmatpush1.msra.mxu0 0.0
  %887 = vmatprep.subr.mxu0 0.0
  %888 = vmatpush1.msra.mxu0 0.0
  %889 = vmatprep.subr.mxu0 0.0
  %890 = vmatpush1.msra.mxu0 0.0
  %891 = vmatprep.subr.mxu0 0.0
  %892 = vmatpush1.msra.mxu0 0.0
  %893 = vmatprep.subr.mxu0 0.0
  %894 = vmatpush1.msra.mxu0 0.0
  %895 = vmatprep.subr.mxu0 0.0
  %896 = vmatpush1.msra.mxu0 0.0
  %897 = vmatprep.mubr.f32.mxu0 0.0
  %898 = vmatmul.mubr.f32.gmra.mrb[0].mxu0 %v831
  %v899 = vpop.f32.mrb[0].mxu0
  %v900 = vadd.f32 %v751, %v899
  %v901 = vpop.f32.mrb[0].mxu0
  %902 = vmatprep.mubr.f32.mxu0 0.0
  %903 = vmatmul.mubr.f32.gmra.mrb[0].mxu0 %v831
  %v904 = vpop.f32.mrb[0].mxu0
  %v905 = vadd.f32 %v751, %v904
  %v906 = vpop.f32.mrb[0].mxu0
  %907 = vmatprep.mubr.f32.mxu0 0.0
  %908 = vmatmul.mubr.f32.gmra.mrb[0].mxu0 %v831
  %v909 = vpop.f32.mrb[0].mxu0
  %v910 = vadd.f32 %v751, %v909
  %v911 = vpop.f32.mrb[0].mxu0
  %912 = vmatprep.mubr.f32.mxu0 0.0
  %913 = vmatmul.mubr.f32.gmra.mrb[0].mxu0 %v831
  %v914 = vpop.f32.mrb[0].mxu0
  %v915 = vadd.f32 %v751, %v914
  %v916 = vpop.f32.mrb[0].mxu0
  %917 = vdwg.mxu0
  %v918 = vadd.f32 %v752, %v823
  %v919 = vxor.u32 %v918, 2147483648
  %v920 = vmul.f32 %v919, 1.442695
  %v921 = vpow.pop %v920
  %v922 = vadd.f32 %v921, 1.0
  %v923 = vrcp.pop %v922
  %v924 = vmul.f32 1.0, %v923
  %926 = vrot.lane.b32.xlu0 %v823, 64
  %v927 = vpop.permute.xlu0 %926
  %v929 = vmul.f32 %v924, %v927
  %931 = vrot.lane.b32.xlu0 %v929, 64
  %v932 = vpop.permute.xlu0 %931
  %v934 = vadd.f32 %v752, %v932
  %v935 = vtanh.pop %v934
  %v936 = vsub.f32 1.0, %v924
  %938 = vrot.lane.b32.xlu0 %v935, 96
  %v939 = vpop.permute.xlu0 %938
  %v941 = vmul.f32 %v936, %v939
  %v942 = vmul.f32 %v924, 0.0
  %v943 = vadd.f32 %v941, %v942
  %v944 = vadd.f32 %v826, %v900
  %v945 = vadd.f32 %v827, %v905
  %v946 = vadd.f32 %v828, %v910
  %v947 = vadd.f32 %v829, %v915
  %v948 = vxor.u32 %v944, 2147483648
  %v949 = vxor.u32 %v945, 2147483648
  %v950 = vxor.u32 %v946, 2147483648
  %v951 = vxor.u32 %v947, 2147483648
  %v952 = vmul.f32 %v948, 1.442695
  %v953 = vpow.pop %v952
  %v954 = vmul.f32 %v949, 1.442695
  %v955 = vpow.pop %v954
  %v956 = vmul.f32 %v950, 1.442695
  %v957 = vpow.pop %v956
  %v958 = vmul.f32 %v951, 1.442695
  %v959 = vpow.pop %v958
  %v960 = vadd.f32 %v953, 1.0
  %v961 = vadd.f32 %v955, 1.0
  %v962 = vadd.f32 %v957, 1.0
  %v963 = vadd.f32 %v959, 1.0
  %v964 = vrcp.pop %v960
  %v965 = vmul.f32 1.0, %v964
  %v966 = vrcp.pop %v961
  %v967 = vmul.f32 1.0, %v966
  %v968 = vrcp.pop %v962
  %v969 = vmul.f32 1.0, %v968
  %v970 = vrcp.pop %v963
  %v971 = vmul.f32 1.0, %v970
  %976 = vrot.lane.b32.xlu0 %v900, 112
  %v977 = vpop.permute.xlu0 %976
  %978 = vrot.lane.b32.xlu0 %v905, 112
  %v979 = vpop.permute.xlu0 %978
  %980 = vrot.lane.b32.xlu0 %v910, 112
  %v981 = vpop.permute.xlu0 %980
  %982 = vrot.lane.b32.xlu0 %v915, 112
  %v983 = vpop.permute.xlu0 %982
  %v988 = vmul.f32 %v965, %v977
  %v989 = vmul.f32 %v967, %v979
  %v990 = vmul.f32 %v969, %v981
  %v991 = vmul.f32 %v971, %v983
  %996 = vrot.lane.b32.xlu0 %v988, 16
  %v997 = vpop.permute.xlu0 %996
  %998 = vrot.lane.b32.xlu0 %v989, 16
  %v999 = vpop.permute.xlu0 %998
  %1000 = vrot.lane.b32.xlu0 %v990, 16
  %v1001 = vpop.permute.xlu0 %1000
  %1002 = vrot.lane.b32.xlu0 %v991, 16
  %v1003 = vpop.permute.xlu0 %1002
  %v1008 = vadd.f32 %v826, %v997
  %v1009 = vadd.f32 %v827, %v999
  %v1010 = vadd.f32 %v828, %v1001
  %v1011 = vadd.f32 %v829, %v1003
  %v1012 = vtanh.pop %v1008
  %v1013 = vtanh.pop %v1009
  %v1014 = vtanh.pop %v1010
  %v1015 = vtanh.pop %v1011
  %v1016 = vsub.f32 1.0, %v965
  %v1017 = vsub.f32 1.0, %v967
  %v1018 = vsub.f32 1.0, %v969
  %v1019 = vsub.f32 1.0, %v971
  %1024 = vrot.lane.b32.xlu0 %v1012, 120
  %v1025 = vpop.permute.xlu0 %1024
  %1026 = vrot.lane.b32.xlu0 %v1013, 120
  %v1027 = vpop.permute.xlu0 %1026
  %1028 = vrot.lane.b32.xlu0 %v1014, 120
  %v1029 = vpop.permute.xlu0 %1028
  %1030 = vrot.lane.b32.xlu0 %v1015, 120
  %v1031 = vpop.permute.xlu0 %1030
  %v1036 = vmul.f32 %v1016, %v1025
  %v1037 = vmul.f32 %v1017, %v1027
  %v1038 = vmul.f32 %v1018, %v1029
  %v1039 = vmul.f32 %v1019, %v1031
  %v1040 = vmul.f32 %v965, 0.0
  %v1041 = vmul.f32 %v967, 0.0
  %v1042 = vmul.f32 %v969, 0.0
  %v1043 = vmul.f32 %v971, 0.0
  %v1044 = vadd.f32 %v1036, %v1040
  %v1045 = vadd.f32 %v1037, %v1041
  %v1046 = vadd.f32 %v1038, %v1042
  %v1047 = vadd.f32 %v1039, %v1043
  %v1048 = vld [vmem:[#allocation2 + $0x8] sm:$0xff]
  %1050 = vrot.lane.b32.xlu0 %v943, 96
  %v1051 = vpop.permute.xlu0 %1050
  %v1052 = vsel %vm53, %v1051, 0
  %1054 = vmatprep.subr.mxu0 0.0
  %1055 = vmatpush1.msra.mxu0 %v739
  %1056 = vmatprep.subr.mxu0 0.0
  %1057 = vmatpush1.msra.mxu0 %v740
  %1058 = vmatprep.subr.mxu0 0.0
  %1059 = vmatpush1.msra.mxu0 %v741
  %1060 = vmatprep.subr.mxu0 0.0
  %1061 = vmatpush1.msra.mxu0 %v742
  %1062 = vmatprep.subr.mxu0 0.0
  %1063 = vmatpush1.msra.mxu0 0.0
  %1064 = vmatprep.subr.mxu0 0.0
  %1065 = vmatpush1.msra.mxu0 0.0
  %1066 = vmatprep.subr.mxu0 0.0
  %1067 = vmatpush1.msra.mxu0 0.0
  %1068 = vmatprep.subr.mxu0 0.0
  %1069 = vmatpush1.msra.mxu0 0.0
  %1070 = vmatprep.subr.mxu0 0.0
  %1071 = vmatpush1.msra.mxu0 0.0
  %1072 = vmatprep.subr.mxu0 0.0
  %1073 = vmatpush1.msra.mxu0 0.0
  %1074 = vmatprep.subr.mxu0 0.0
  %1075 = vmatpush1.msra.mxu0 0.0
  %1076 = vmatprep.subr.mxu0 0.0
  %1077 = vmatpush1.msra.mxu0 0.0
  %1078 = vmatprep.subr.mxu0 0.0
  %1079 = vmatpush1.msra.mxu0 0.0
  %1080 = vmatprep.subr.mxu0 0.0
  %1081 = vmatpush1.msra.mxu0 0.0
  %1082 = vmatprep.subr.mxu0 0.0
  %1083 = vmatpush1.msra.mxu0 0.0
  %1084 = vmatprep.subr.mxu0 0.0
  %1085 = vmatpush1.msra.mxu0 0.0
  %1086 = vmatprep.subr.mxu0 0.0
  %1087 = vmatpush1.msra.mxu0 0.0
  %1088 = vmatprep.subr.mxu0 0.0
  %1089 = vmatpush1.msra.mxu0 0.0
  %1090 = vmatprep.subr.mxu0 0.0
  %1091 = vmatpush1.msra.mxu0 0.0
  %1092 = vmatprep.subr.mxu0 0.0
  %1093 = vmatpush1.msra.mxu0 0.0
  %1094 = vmatprep.subr.mxu0 0.0
  %1095 = vmatpush1.msra.mxu0 0.0
  %1096 = vmatprep.subr.mxu0 0.0
  %1097 = vmatpush1.msra.mxu0 0.0
  %1098 = vmatprep.subr.mxu0 0.0
  %1099 = vmatpush1.msra.mxu0 0.0
  %1100 = vmatprep.subr.mxu0 0.0
  %1101 = vmatpush1.msra.mxu0 0.0
  %1102 = vmatprep.subr.mxu0 0.0
  %1103 = vmatpush1.msra.mxu0 0.0
  %1104 = vmatprep.subr.mxu0 0.0
  %1105 = vmatpush1.msra.mxu0 0.0
  %1106 = vmatprep.subr.mxu0 0.0
  %1107 = vmatpush1.msra.mxu0 0.0
  %1108 = vmatprep.subr.mxu0 0.0
  %1109 = vmatpush1.msra.mxu0 0.0
  %1110 = vmatprep.subr.mxu0 0.0
  %1111 = vmatpush1.msra.mxu0 0.0
  %1112 = vmatprep.subr.mxu0 0.0
  %1113 = vmatpush1.msra.mxu0 0.0
  %1114 = vmatprep.subr.mxu0 0.0
  %1115 = vmatpush1.msra.mxu0 0.0
  %1116 = vmatprep.subr.mxu0 0.0
  %1117 = vmatpush1.msra.mxu0 0.0
  %1118 = vmatprep.mubr.f32.mxu0 0.0
  %1119 = vmatmul.mubr.f32.gmra.mrb[0].mxu0 %v1052
  %v1120 = vpop.f32.mrb[0].mxu0
  %v1121 = vadd.f32 %v747, %v1120
  %v1122 = vpop.f32.mrb[0].mxu0
  %1123 = vdwg.mxu0
  %v1124 = vld [vmem:[#allocation3 + $0x20] sm:$0xff]
  %v1125 = vld [vmem:[#allocation3 + $0x28] sm:$0xff]
  %v1126 = vld [vmem:[#allocation3 + $0x30] sm:$0xff]
  %v1127 = vld [vmem:[#allocation3 + $0x38] sm:$0xff]
  %1132 = vrot.lane.b32.xlu0 %v1044, 120
  %v1133 = vpop.permute.xlu0 %1132
  %1134 = vrot.lane.b32.xlu0 %v1045, 120
  %v1135 = vpop.permute.xlu0 %1134
  %1136 = vrot.lane.b32.xlu0 %v1046, 120
  %v1137 = vpop.permute.xlu0 %1136
  %1138 = vrot.lane.b32.xlu0 %v1047, 120
  %v1139 = vpop.permute.xlu0 %1138
  %v1140 = vsel %vm830, %v1133, 0
  %v1142 = vsel %vm830, %v1135, 0
  %v1144 = vsel %vm830, %v1137, 0
  %v1146 = vsel %vm830, %v1139, 0
  %1148 = vmatprep.subr.mxu0 0.0
  %1149 = vmatpush1.msra.mxu0 %v743
  %1150 = vmatprep.subr.mxu0 0.0
  %1151 = vmatpush1.msra.mxu0 0.0
  %1152 = vmatprep.subr.mxu0 0.0
  %1153 = vmatpush1.msra.mxu0 0.0
  %1154 = vmatprep.subr.mxu0 0.0
  %1155 = vmatpush1.msra.mxu0 0.0
  %1156 = vmatprep.subr.mxu0 0.0
  %1157 = vmatpush1.msra.mxu0 0.0
  %1158 = vmatprep.subr.mxu0 0.0
  %1159 = vmatpush1.msra.mxu0 0.0
  %1160 = vmatprep.subr.mxu0 0.0
  %1161 = vmatpush1.msra.mxu0 0.0
  %1162 = vmatprep.subr.mxu0 0.0
  %1163 = vmatpush1.msra.mxu0 0.0
  %1164 = vmatprep.subr.mxu0 0.0
  %1165 = vmatpush1.msra.mxu0 0.0
  %1166 = vmatprep.subr.mxu0 0.0
  %1167 = vmatpush1.msra.mxu0 0.0
  %1168 = vmatprep.subr.mxu0 0.0
  %1169 = vmatpush1.msra.mxu0 0.0
  %1170 = vmatprep.subr.mxu0 0.0
  %1171 = vmatpush1.msra.mxu0 0.0
  %1172 = vmatprep.subr.mxu0 0.0
  %1173 = vmatpush1.msra.mxu0 0.0
  %1174 = vmatprep.subr.mxu0 0.0
  %1175 = vmatpush1.msra.mxu0 0.0
  %1176 = vmatprep.subr.mxu0 0.0
  %1177 = vmatpush1.msra.mxu0 0.0
  %1178 = vmatprep.subr.mxu0 0.0
  %1179 = vmatpush1.msra.mxu0 0.0
  %1180 = vmatprep.subr.mxu0 0.0
  %1181 = vmatpush1.msra.mxu0 0.0
  %1182 = vmatprep.subr.mxu0 0.0
  %1183 = vmatpush1.msra.mxu0 0.0
  %1184 = vmatprep.subr.mxu0 0.0
  %1185 = vmatpush1.msra.mxu0 0.0
  %1186 = vmatprep.subr.mxu0 0.0
  %1187 = vmatpush1.msra.mxu0 0.0
  %1188 = vmatprep.subr.mxu0 0.0
  %1189 = vmatpush1.msra.mxu0 0.0
  %1190 = vmatprep.subr.mxu0 0.0
  %1191 = vmatpush1.msra.mxu0 0.0
  %1192 = vmatprep.subr.mxu0 0.0
  %1193 = vmatpush1.msra.mxu0 0.0
  %1194 = vmatprep.subr.mxu0 0.0
  %1195 = vmatpush1.msra.mxu0 0.0
  %1196 = vmatprep.subr.mxu0 0.0
  %1197 = vmatpush1.msra.mxu0 0.0
  %1198 = vmatprep.subr.mxu0 0.0
  %1199 = vmatpush1.msra.mxu0 0.0
  %1200 = vmatprep.subr.mxu0 0.0
  %1201 = vmatpush1.msra.mxu0 0.0
  %1202 = vmatprep.subr.mxu0 0.0
  %1203 = vmatpush1.msra.mxu0 0.0
  %1204 = vmatprep.subr.mxu0 0.0
  %1205 = vmatpush1.msra.mxu0 0.0
  %1206 = vmatprep.subr.mxu0 0.0
  %1207 = vmatpush1.msra.mxu0 0.0
  %1208 = vmatprep.subr.mxu0 0.0
  %1209 = vmatpush1.msra.mxu0 0.0
  %1210 = vmatprep.subr.mxu0 0.0
  %1211 = vmatpush1.msra.mxu0 0.0
  %1212 = vmatprep.mubr.f32.mxu0 0.0
  %1213 = vmatmul.mubr.f32.gmra.mrb[0].mxu0 %v1140
  %v1214 = vpop.f32.mrb[0].mxu0
  %v1215 = vadd.f32 %v751, %v1214
  %v1216 = vpop.f32.mrb[0].mxu0
  %1217 = vmatprep.mubr.f32.mxu0 0.0
  %1218 = vmatmul.mubr.f32.gmra.mrb[0].mxu0 %v1142
  %v1219 = vpop.f32.mrb[0].mxu0
  %v1220 = vadd.f32 %v751, %v1219
  %v1221 = vpop.f32.mrb[0].mxu0
  %1222 = vmatprep.mubr.f32.mxu0 0.0
  %1223 = vmatmul.mubr.f32.gmra.mrb[0].mxu0 %v1144
  %v1224 = vpop.f32.mrb[0].mxu0
  %v1225 = vadd.f32 %v751, %v1224
  %v1226 = vpop.f32.mrb[0].mxu0
  %1227 = vmatprep.mubr.f32.mxu0 0.0
  %1228 = vmatmul.mubr.f32.gmra.mrb[0].mxu0 %v1146
  %v1229 = vpop.f32.mrb[0].mxu0
  %v1230 = vadd.f32 %v751, %v1229
  %v1231 = vpop.f32.mrb[0].mxu0
  %1232 = vdwg.mxu0
  %v1233 = vadd.f32 %v1048, %v1121
  %v1234 = vxor.u32 %v1233, 2147483648
  %v1235 = vmul.f32 %v1234, 1.442695
  %v1236 = vpow.pop %v1235
  %v1237 = vadd.f32 %v1236, 1.0
  %v1238 = vrcp.pop %v1237
  %v1239 = vmul.f32 1.0, %v1238
  %1241 = vrot.lane.b32.xlu0 %v1121, 64
  %v1242 = vpop.permute.xlu0 %1241
  %v1244 = vmul.f32 %v1239, %v1242
  %1246 = vrot.lane.b32.xlu0 %v1244, 64
  %v1247 = vpop.permute.xlu0 %1246
  %v1249 = vadd.f32 %v1048, %v1247
  %v1250 = vtanh.pop %v1249
  %v1251 = vsub.f32 1.0, %v1239
  %1253 = vrot.lane.b32.xlu0 %v1250, 96
  %v1254 = vpop.permute.xlu0 %1253
  %v1256 = vmul.f32 %v1251, %v1254
  %v1257 = vmul.f32 %v1239, %v943
  %v1258 = vadd.f32 %v1256, %v1257
  %v1259 = vadd.f32 %v1124, %v1215
  %v1260 = vadd.f32 %v1125, %v1220
  %v1261 = vadd.f32 %v1126, %v1225
  %v1262 = vadd.f32 %v1127, %v1230
  %v1263 = vxor.u32 %v1259, 2147483648
  %v1264 = vxor.u32 %v1260, 2147483648
  %v1265 = vxor.u32 %v1261, 2147483648
  %v1266 = vxor.u32 %v1262, 2147483648
  %v1267 = vmul.f32 %v1263, 1.442695
  %v1268 = vpow.pop %v1267
  %v1269 = vmul.f32 %v1264, 1.442695
  %v1270 = vpow.pop %v1269
  %v1271 = vmul.f32 %v1265, 1.442695
  %v1272 = vpow.pop %v1271
  %v1273 = vmul.f32 %v1266, 1.442695
  %v1274 = vpow.pop %v1273
  %v1275 = vadd.f32 %v1268, 1.0
  %v1276 = vadd.f32 %v1270, 1.0
  %v1277 = vadd.f32 %v1272, 1.0
  %v1278 = vadd.f32 %v1274, 1.0
  %v1279 = vrcp.pop %v1275
  %v1280 = vmul.f32 1.0, %v1279
  %v1281 = vrcp.pop %v1276
  %v1282 = vmul.f32 1.0, %v1281
  %v1283 = vrcp.pop %v1277
  %v1284 = vmul.f32 1.0, %v1283
  %v1285 = vrcp.pop %v1278
  %v1286 = vmul.f32 1.0, %v1285
  %1291 = vrot.lane.b32.xlu0 %v1215, 112
  %v1292 = vpop.permute.xlu0 %1291
  %1293 = vrot.lane.b32.xlu0 %v1220, 112
  %v1294 = vpop.permute.xlu0 %1293
  %1295 = vrot.lane.b32.xlu0 %v1225, 112
  %v1296 = vpop.permute.xlu0 %1295
  %1297 = vrot.lane.b32.xlu0 %v1230, 112
  %v1298 = vpop.permute.xlu0 %1297
  %v1303 = vmul.f32 %v1280, %v1292
  %v1304 = vmul.f32 %v1282, %v1294
  %v1305 = vmul.f32 %v1284, %v1296
  %v1306 = vmul.f32 %v1286, %v1298
  %1311 = vrot.lane.b32.xlu0 %v1303, 16
  %v1312 = vpop.permute.xlu0 %1311
  %1313 = vrot.lane.b32.xlu0 %v1304, 16
  %v1314 = vpop.permute.xlu0 %1313
  %1315 = vrot.lane.b32.xlu0 %v1305, 16
  %v1316 = vpop.permute.xlu0 %1315
  %1317 = vrot.lane.b32.xlu0 %v1306, 16
  %v1318 = vpop.permute.xlu0 %1317
  %v1323 = vadd.f32 %v1124, %v1312
  %v1324 = vadd.f32 %v1125, %v1314
  %v1325 = vadd.f32 %v1126, %v1316
  %v1326 = vadd.f32 %v1127, %v1318
  %v1327 = vtanh.pop %v1323
  %v1328 = vtanh.pop %v1324
  %v1329 = vtanh.pop %v1325
  %v1330 = vtanh.pop %v1326
  %v1331 = vsub.f32 1.0, %v1280
  %v1332 = vsub.f32 1.0, %v1282
  %v1333 = vsub.f32 1.0, %v1284
  %v1334 = vsub.f32 1.0, %v1286
  %1339 = vrot.lane.b32.xlu0 %v1327, 120
  %v1340 = vpop.permute.xlu0 %1339
  %1341 = vrot.lane.b32.xlu0 %v1328, 120
  %v1342 = vpop.permute.xlu0 %1341
  %1343 = vrot.lane.b32.xlu0 %v1329, 120
  %v1344 = vpop.permute.xlu0 %1343
  %1345 = vrot.lane.b32.xlu0 %v1330, 120
  %v1346 = vpop.permute.xlu0 %1345
  %v1351 = vmul.f32 %v1331, %v1340
  %v1352 = vmul.f32 %v1332, %v1342
  %v1353 = vmul.f32 %v1333, %v1344
  %v1354 = vmul.f32 %v1334, %v1346
  %v1355 = vmul.f32 %v1280, %v1044
  %v1356 = vmul.f32 %v1282, %v1045
  %v1357 = vmul.f32 %v1284, %v1046
  %v1358 = vmul.f32 %v1286, %v1047
  %v1359 = vadd.f32 %v1351, %v1355
  %v1360 = vadd.f32 %v1352, %v1356
  %v1361 = vadd.f32 %v1353, %v1357
  %v1362 = vadd.f32 %v1354, %v1358
  %v1363 = vld [vmem:[#allocation2 + $0x10] sm:$0xff]
  %1365 = vrot.lane.b32.xlu0 %v1258, 96
  %v1366 = vpop.permute.xlu0 %1365
  %v1367 = vsel %vm53, %v1366, 0
  %1369 = vmatprep.subr.mxu0 0.0
  %1370 = vmatpush1.msra.mxu0 %v739
  %1371 = vmatprep.subr.mxu0 0.0
  %1372 = vmatpush1.msra.mxu0 %v740
  %1373 = vmatprep.subr.mxu0 0.0
  %1374 = vmatpush1.msra.mxu0 %v741
  %1375 = vmatprep.subr.mxu0 0.0
  %1376 = vmatpush1.msra.mxu0 %v742
  %1377 = vmatprep.subr.mxu0 0.0
  %1378 = vmatpush1.msra.mxu0 0.0
  %1379 = vmatprep.subr.mxu0 0.0
  %1380 = vmatpush1.msra.mxu0 0.0
  %1381 = vmatprep.subr.mxu0 0.0
  %1382 = vmatpush1.msra.mxu0 0.0
  %1383 = vmatprep.subr.mxu0 0.0
  %1384 = vmatpush1.msra.mxu0 0.0
  %1385 = vmatprep.subr.mxu0 0.0
  %1386 = vmatpush1.msra.mxu0 0.0
  %1387 = vmatprep.subr.mxu0 0.0
  %1388 = vmatpush1.msra.mxu0 0.0
  %1389 = vmatprep.subr.mxu0 0.0
  %1390 = vmatpush1.msra.mxu0 0.0
  %1391 = vmatprep.subr.mxu0 0.0
  %1392 = vmatpush1.msra.mxu0 0.0
  %1393 = vmatprep.subr.mxu0 0.0
  %1394 = vmatpush1.msra.mxu0 0.0
  %1395 = vmatprep.subr.mxu0 0.0
  %1396 = vmatpush1.msra.mxu0 0.0
  %1397 = vmatprep.subr.mxu0 0.0
  %1398 = vmatpush1.msra.mxu0 0.0
  %1399 = vmatprep.subr.mxu0 0.0
  %1400 = vmatpush1.msra.mxu0 0.0
  %1401 = vmatprep.subr.mxu0 0.0
  %1402 = vmatpush1.msra.mxu0 0.0
  %1403 = vmatprep.subr.mxu0 0.0
  %1404 = vmatpush1.msra.mxu0 0.0
  %1405 = vmatprep.subr.mxu0 0.0
  %1406 = vmatpush1.msra.mxu0 0.0
  %1407 = vmatprep.subr.mxu0 0.0
  %1408 = vmatpush1.msra.mxu0 0.0
  %1409 = vmatprep.subr.mxu0 0.0
  %1410 = vmatpush1.msra.mxu0 0.0
  %1411 = vmatprep.subr.mxu0 0.0
  %1412 = vmatpush1.msra.mxu0 0.0
  %1413 = vmatprep.subr.mxu0 0.0
  %1414 = vmatpush1.msra.mxu0 0.0
  %1415 = vmatprep.subr.mxu0 0.0
  %1416 = vmatpush1.msra.mxu0 0.0
  %1417 = vmatprep.subr.mxu0 0.0
  %1418 = vmatpush1.msra.mxu0 0.0
  %1419 = vmatprep.subr.mxu0 0.0
  %1420 = vmatpush1.msra.mxu0 0.0
  %1421 = vmatprep.subr.mxu0 0.0
  %1422 = vmatpush1.msra.mxu0 0.0
  %1423 = vmatprep.subr.mxu0 0.0
  %1424 = vmatpush1.msra.mxu0 0.0
  %1425 = vmatprep.subr.mxu0 0.0
  %1426 = vmatpush1.msra.mxu0 0.0
  %1427 = vmatprep.subr.mxu0 0.0
  %1428 = vmatpush1.msra.mxu0 0.0
  %1429 = vmatprep.subr.mxu0 0.0
  %1430 = vmatpush1.msra.mxu0 0.0
  %1431 = vmatprep.subr.mxu0 0.0
  %1432 = vmatpush1.msra.mxu0 0.0
  %1433 = vmatprep.mubr.f32.mxu0 0.0
  %1434 = vmatmul.mubr.f32.gmra.mrb[0].mxu0 %v1367
  %v1435 = vpop.f32.mrb[0].mxu0
  %v1436 = vadd.f32 %v747, %v1435
  %v1437 = vpop.f32.mrb[0].mxu0
  %1438 = vdwg.mxu0
  %v1439 = vld [vmem:[#allocation3 + $0x40] sm:$0xff]
  %v1440 = vld [vmem:[#allocation3 + $0x48] sm:$0xff]
  %v1441 = vld [vmem:[#allocation3 + $0x50] sm:$0xff]
  %v1442 = vld [vmem:[#allocation3 + $0x58] sm:$0xff]
  %1447 = vrot.lane.b32.xlu0 %v1359, 120
  %v1448 = vpop.permute.xlu0 %1447
  %1449 = vrot.lane.b32.xlu0 %v1360, 120
  %v1450 = vpop.permute.xlu0 %1449
  %1451 = vrot.lane.b32.xlu0 %v1361, 120
  %v1452 = vpop.permute.xlu0 %1451
  %1453 = vrot.lane.b32.xlu0 %v1362, 120
  %v1454 = vpop.permute.xlu0 %1453
  %v1455 = vsel %vm830, %v1448, 0
  %v1457 = vsel %vm830, %v1450, 0
  %v1459 = vsel %vm830, %v1452, 0
  %v1461 = vsel %vm830, %v1454, 0
  %1463 = vmatprep.subr.mxu0 0.0
  %1464 = vmatpush1.msra.mxu0 %v743
  %1465 = vmatprep.subr.mxu0 0.0
  %1466 = vmatpush1.msra.mxu0 0.0
  %1467 = vmatprep.subr.mxu0 0.0
  %1468 = vmatpush1.msra.mxu0 0.0
  %1469 = vmatprep.subr.mxu0 0.0
  %1470 = vmatpush1.msra.mxu0 0.0
  %1471 = vmatprep.subr.mxu0 0.0
  %1472 = vmatpush1.msra.mxu0 0.0
  %1473 = vmatprep.subr.mxu0 0.0
  %1474 = vmatpush1.msra.mxu0 0.0
  %1475 = vmatprep.subr.mxu0 0.0
  %1476 = vmatpush1.msra.mxu0 0.0
  %1477 = vmatprep.subr.mxu0 0.0
  %1478 = vmatpush1.msra.mxu0 0.0
  %1479 = vmatprep.subr.mxu0 0.0
  %1480 = vmatpush1.msra.mxu0 0.0
  %1481 = vmatprep.subr.mxu0 0.0
  %1482 = vmatpush1.msra.mxu0 0.0
  %1483 = vmatprep.subr.mxu0 0.0
  %1484 = vmatpush1.msra.mxu0 0.0
  %1485 = vmatprep.subr.mxu0 0.0
  %1486 = vmatpush1.msra.mxu0 0.0
  %1487 = vmatprep.subr.mxu0 0.0
  %1488 = vmatpush1.msra.mxu0 0.0
  %1489 = vmatprep.subr.mxu0 0.0
  %1490 = vmatpush1.msra.mxu0 0.0
  %1491 = vmatprep.subr.mxu0 0.0
  %1492 = vmatpush1.msra.mxu0 0.0
  %1493 = vmatprep.subr.mxu0 0.0
  %1494 = vmatpush1.msra.mxu0 0.0
  %1495 = vmatprep.subr.mxu0 0.0
  %1496 = vmatpush1.msra.mxu0 0.0
  %1497 = vmatprep.subr.mxu0 0.0
  %1498 = vmatpush1.msra.mxu0 0.0
  %1499 = vmatprep.subr.mxu0 0.0
  %1500 = vmatpush1.msra.mxu0 0.0
  %1501 = vmatprep.subr.mxu0 0.0
  %1502 = vmatpush1.msra.mxu0 0.0
  %1503 = vmatprep.subr.mxu0 0.0
  %1504 = vmatpush1.msra.mxu0 0.0
  %1505 = vmatprep.subr.mxu0 0.0
  %1506 = vmatpush1.msra.mxu0 0.0
  %1507 = vmatprep.subr.mxu0 0.0
  %1508 = vmatpush1.msra.mxu0 0.0
  %1509 = vmatprep.subr.mxu0 0.0
  %1510 = vmatpush1.msra.mxu0 0.0
  %1511 = vmatprep.subr.mxu0 0.0
  %1512 = vmatpush1.msra.mxu0 0.0
  %1513 = vmatprep.subr.mxu0 0.0
  %1514 = vmatpush1.msra.mxu0 0.0
  %1515 = vmatprep.subr.mxu0 0.0
  %1516 = vmatpush1.msra.mxu0 0.0
  %1517 = vmatprep.subr.mxu0 0.0
  %1518 = vmatpush1.msra.mxu0 0.0
  %1519 = vmatprep.subr.mxu0 0.0
  %1520 = vmatpush1.msra.mxu0 0.0
  %1521 = vmatprep.subr.mxu0 0.0
  %1522 = vmatpush1.msra.mxu0 0.0
  %1523 = vmatprep.subr.mxu0 0.0
  %1524 = vmatpush1.msra.mxu0 0.0
  %1525 = vmatprep.subr.mxu0 0.0
  %1526 = vmatpush1.msra.mxu0 0.0
  %1527 = vmatprep.mubr.f32.mxu0 0.0
  %1528 = vmatmul.mubr.f32.gmra.mrb[0].mxu0 %v1455
  %v1529 = vpop.f32.mrb[0].mxu0
  %v1530 = vadd.f32 %v751, %v1529
  %v1531 = vpop.f32.mrb[0].mxu0
  %1532 = vmatprep.mubr.f32.mxu0 0.0
  %1533 = vmatmul.mubr.f32.gmra.mrb[0].mxu0 %v1457
  %v1534 = vpop.f32.mrb[0].mxu0
  %v1535 = vadd.f32 %v751, %v1534
  %v1536 = vpop.f32.mrb[0].mxu0
  %1537 = vmatprep.mubr.f32.mxu0 0.0
  %1538 = vmatmul.mubr.f32.gmra.mrb[0].mxu0 %v1459
  %v1539 = vpop.f32.mrb[0].mxu0
  %v1540 = vadd.f32 %v751, %v1539
  %v1541 = vpop.f32.mrb[0].mxu0
  %1542 = vmatprep.mubr.f32.mxu0 0.0
  %1543 = vmatmul.mubr.f32.gmra.mrb[0].mxu0 %v1461
  %v1544 = vpop.f32.mrb[0].mxu0
  %v1545 = vadd.f32 %v751, %v1544
  %v1546 = vpop.f32.mrb[0].mxu0
  %1547 = vdwg.mxu0
  %v1548 = vadd.f32 %v1363, %v1436
  %v1549 = vxor.u32 %v1548, 2147483648
  %v1550 = vmul.f32 %v1549, 1.442695
  %v1551 = vpow.pop %v1550
  %v1552 = vadd.f32 %v1551, 1.0
  %v1553 = vrcp.pop %v1552
  %v1554 = vmul.f32 1.0, %v1553
  %1556 = vrot.lane.b32.xlu0 %v1436, 64
  %v1557 = vpop.permute.xlu0 %1556
  %v1559 = vmul.f32 %v1554, %v1557
  %1561 = vrot.lane.b32.xlu0 %v1559, 64
  %v1562 = vpop.permute.xlu0 %1561
  %v1564 = vadd.f32 %v1363, %v1562
  %v1565 = vtanh.pop %v1564
  %v1566 = vsub.f32 1.0, %v1554
  %1568 = vrot.lane.b32.xlu0 %v1565, 96
  %v1569 = vpop.permute.xlu0 %1568
  %v1571 = vmul.f32 %v1566, %v1569
  %v1572 = vmul.f32 %v1554, %v1258
  %v1573 = vadd.f32 %v1571, %v1572
  %v1574 = vadd.f32 %v1439, %v1530
  %v1575 = vadd.f32 %v1440, %v1535
  %v1576 = vadd.f32 %v1441, %v1540
  %v1577 = vadd.f32 %v1442, %v1545
  %v1578 = vxor.u32 %v1574, 2147483648
  %v1579 = vxor.u32 %v1575, 2147483648
  %v1580 = vxor.u32 %v1576, 2147483648
  %v1581 = vxor.u32 %v1577, 2147483648
  %v1582 = vmul.f32 %v1578, 1.442695
  %v1583 = vpow.pop %v1582
  %v1584 = vmul.f32 %v1579, 1.442695
  %v1585 = vpow.pop %v1584
  %v1586 = vmul.f32 %v1580, 1.442695
  %v1587 = vpow.pop %v1586
  %v1588 = vmul.f32 %v1581, 1.442695
  %v1589 = vpow.pop %v1588
  %v1590 = vadd.f32 %v1583, 1.0
  %v1591 = vadd.f32 %v1585, 1.0
  %v1592 = vadd.f32 %v1587, 1.0
  %v1593 = vadd.f32 %v1589, 1.0
  %v1594 = vrcp.pop %v1590
  %v1595 = vmul.f32 1.0, %v1594
  %v1596 = vrcp.pop %v1591
  %v1597 = vmul.f32 1.0, %v1596
  %v1598 = vrcp.pop %v1592
  %v1599 = vmul.f32 1.0, %v1598
  %v1600 = vrcp.pop %v1593
  %v1601 = vmul.f32 1.0, %v1600
  %1606 = vrot.lane.b32.xlu0 %v1530, 112
  %v1607 = vpop.permute.xlu0 %1606
  %1608 = vrot.lane.b32.xlu0 %v1535, 112
  %v1609 = vpop.permute.xlu0 %1608
  %1610 = vrot.lane.b32.xlu0 %v1540, 112
  %v1611 = vpop.permute.xlu0 %1610
  %1612 = vrot.lane.b32.xlu0 %v1545, 112
  %v1613 = vpop.permute.xlu0 %1612
  %v1618 = vmul.f32 %v1595, %v1607
  %v1619 = vmul.f32 %v1597, %v1609
  %v1620 = vmul.f32 %v1599, %v1611
  %v1621 = vmul.f32 %v1601, %v1613
  %1626 = vrot.lane.b32.xlu0 %v1618, 16
  %v1627 = vpop.permute.xlu0 %1626
  %1628 = vrot.lane.b32.xlu0 %v1619, 16
  %v1629 = vpop.permute.xlu0 %1628
  %1630 = vrot.lane.b32.xlu0 %v1620, 16
  %v1631 = vpop.permute.xlu0 %1630
  %1632 = vrot.lane.b32.xlu0 %v1621, 16
  %v1633 = vpop.permute.xlu0 %1632
  %v1638 = vadd.f32 %v1439, %v1627
  %v1639 = vadd.f32 %v1440, %v1629
  %v1640 = vadd.f32 %v1441, %v1631
  %v1641 = vadd.f32 %v1442, %v1633
  %v1642 = vtanh.pop %v1638
  %v1643 = vtanh.pop %v1639
  %v1644 = vtanh.pop %v1640
  %v1645 = vtanh.pop %v1641
  %v1646 = vsub.f32 1.0, %v1595
  %v1647 = vsub.f32 1.0, %v1597
  %v1648 = vsub.f32 1.0, %v1599
  %v1649 = vsub.f32 1.0, %v1601
  %1654 = vrot.lane.b32.xlu0 %v1642, 120
  %v1655 = vpop.permute.xlu0 %1654
  %1656 = vrot.lane.b32.xlu0 %v1643, 120
  %v1657 = vpop.permute.xlu0 %1656
  %1658 = vrot.lane.b32.xlu0 %v1644, 120
  %v1659 = vpop.permute.xlu0 %1658
  %1660 = vrot.lane.b32.xlu0 %v1645, 120
  %v1661 = vpop.permute.xlu0 %1660
  %v1666 = vmul.f32 %v1646, %v1655
  %v1667 = vmul.f32 %v1647, %v1657
  %v1668 = vmul.f32 %v1648, %v1659
  %v1669 = vmul.f32 %v1649, %v1661
  %v1670 = vmul.f32 %v1595, %v1359
  %v1671 = vmul.f32 %v1597, %v1360
  %v1672 = vmul.f32 %v1599, %v1361
  %v1673 = vmul.f32 %v1601, %v1362
  %v1674 = vadd.f32 %v1666, %v1670
  %v1675 = vadd.f32 %v1667, %v1671
  %v1676 = vadd.f32 %v1668, %v1672
  %v1677 = vadd.f32 %v1669, %v1673
  %v1678 = vld [vmem:[#allocation2 + $0x18] sm:$0xff]
  %1680 = vrot.lane.b32.xlu0 %v1573, 96
  %v1681 = vpop.permute.xlu0 %1680
  %v1682 = vsel %vm53, %v1681, 0
  %1684 = vmatprep.subr.mxu0 0.0
  %1685 = vmatpush1.msra.mxu0 %v739
  %1686 = vmatprep.subr.mxu0 0.0
  %1687 = vmatpush1.msra.mxu0 %v740
  %1688 = vmatprep.subr.mxu0 0.0
  %1689 = vmatpush1.msra.mxu0 %v741
  %1690 = vmatprep.subr.mxu0 0.0
  %1691 = vmatpush1.msra.mxu0 %v742
  %1692 = vmatprep.subr.mxu0 0.0
  %1693 = vmatpush1.msra.mxu0 0.0
  %1694 = vmatprep.subr.mxu0 0.0
  %1695 = vmatpush1.msra.mxu0 0.0
  %1696 = vmatprep.subr.mxu0 0.0
  %1697 = vmatpush1.msra.mxu0 0.0
  %1698 = vmatprep.subr.mxu0 0.0
  %1699 = vmatpush1.msra.mxu0 0.0
  %1700 = vmatprep.subr.mxu0 0.0
  %1701 = vmatpush1.msra.mxu0 0.0
  %1702 = vmatprep.subr.mxu0 0.0
  %1703 = vmatpush1.msra.mxu0 0.0
  %1704 = vmatprep.subr.mxu0 0.0
  %1705 = vmatpush1.msra.mxu0 0.0
  %1706 = vmatprep.subr.mxu0 0.0
  %1707 = vmatpush1.msra.mxu0 0.0
  %1708 = vmatprep.subr.mxu0 0.0
  %1709 = vmatpush1.msra.mxu0 0.0
  %1710 = vmatprep.subr.mxu0 0.0
  %1711 = vmatpush1.msra.mxu0 0.0
  %1712 = vmatprep.subr.mxu0 0.0
  %1713 = vmatpush1.msra.mxu0 0.0
  %1714 = vmatprep.subr.mxu0 0.0
  %1715 = vmatpush1.msra.mxu0 0.0
  %1716 = vmatprep.subr.mxu0 0.0
  %1717 = vmatpush1.msra.mxu0 0.0
  %1718 = vmatprep.subr.mxu0 0.0
  %1719 = vmatpush1.msra.mxu0 0.0
  %1720 = vmatprep.subr.mxu0 0.0
  %1721 = vmatpush1.msra.mxu0 0.0
  %1722 = vmatprep.subr.mxu0 0.0
  %1723 = vmatpush1.msra.mxu0 0.0
  %1724 = vmatprep.subr.mxu0 0.0
  %1725 = vmatpush1.msra.mxu0 0.0
  %1726 = vmatprep.subr.mxu0 0.0
  %1727 = vmatpush1.msra.mxu0 0.0
  %1728 = vmatprep.subr.mxu0 0.0
  %1729 = vmatpush1.msra.mxu0 0.0
  %1730 = vmatprep.subr.mxu0 0.0
  %1731 = vmatpush1.msra.mxu0 0.0
  %1732 = vmatprep.subr.mxu0 0.0
  %1733 = vmatpush1.msra.mxu0 0.0
  %1734 = vmatprep.subr.mxu0 0.0
  %1735 = vmatpush1.msra.mxu0 0.0
  %1736 = vmatprep.subr.mxu0 0.0
  %1737 = vmatpush1.msra.mxu0 0.0
  %1738 = vmatprep.subr.mxu0 0.0
  %1739 = vmatpush1.msra.mxu0 0.0
  %1740 = vmatprep.subr.mxu0 0.0
  %1741 = vmatpush1.msra.mxu0 0.0
  %1742 = vmatprep.subr.mxu0 0.0
  %1743 = vmatpush1.msra.mxu0 0.0
  %1744 = vmatprep.subr.mxu0 0.0
  %1745 = vmatpush1.msra.mxu0 0.0
  %1746 = vmatprep.subr.mxu0 0.0
  %1747 = vmatpush1.msra.mxu0 0.0
  %1748 = vmatprep.mubr.f32.mxu0 0.0
  %1749 = vmatmul.mubr.f32.gmra.mrb[0].mxu0 %v1682
  %v1750 = vpop.f32.mrb[0].mxu0
  %v1751 = vadd.f32 %v747, %v1750
  %v1752 = vpop.f32.mrb[0].mxu0
  %1753 = vdwg.mxu0
  %v1754 = vld [vmem:[#allocation3 + $0x60] sm:$0xff]
  %v1755 = vld [vmem:[#allocation3 + $0x68] sm:$0xff]
  %v1756 = vld [vmem:[#allocation3 + $0x70] sm:$0xff]
  %v1757 = vld [vmem:[#allocation3 + $0x78] sm:$0xff]
  %1762 = vrot.lane.b32.xlu0 %v1674, 120
  %v1763 = vpop.permute.xlu0 %1762
  %1764 = vrot.lane.b32.xlu0 %v1675, 120
  %v1765 = vpop.permute.xlu0 %1764
  %1766 = vrot.lane.b32.xlu0 %v1676, 120
  %v1767 = vpop.permute.xlu0 %1766
  %1768 = vrot.lane.b32.xlu0 %v1677, 120
  %v1769 = vpop.permute.xlu0 %1768
  %v1770 = vsel %vm830, %v1763, 0
  %v1772 = vsel %vm830, %v1765, 0
  %v1774 = vsel %vm830, %v1767, 0
  %v1776 = vsel %vm830, %v1769, 0
  %1778 = vmatprep.subr.mxu0 0.0
  %1779 = vmatpush1.msra.mxu0 %v743
  %1780 = vmatprep.subr.mxu0 0.0
  %1781 = vmatpush1.msra.mxu0 0.0
  %1782 = vmatprep.subr.mxu0 0.0
  %1783 = vmatpush1.msra.mxu0 0.0
  %1784 = vmatprep.subr.mxu0 0.0
  %1785 = vmatpush1.msra.mxu0 0.0
  %1786 = vmatprep.subr.mxu0 0.0
  %1787 = vmatpush1.msra.mxu0 0.0
  %1788 = vmatprep.subr.mxu0 0.0
  %1789 = vmatpush1.msra.mxu0 0.0
  %1790 = vmatprep.subr.mxu0 0.0
  %1791 = vmatpush1.msra.mxu0 0.0
  %1792 = vmatprep.subr.mxu0 0.0
  %1793 = vmatpush1.msra.mxu0 0.0
  %1794 = vmatprep.subr.mxu0 0.0
  %1795 = vmatpush1.msra.mxu0 0.0
  %1796 = vmatprep.subr.mxu0 0.0
  %1797 = vmatpush1.msra.mxu0 0.0
  %1798 = vmatprep.subr.mxu0 0.0
  %1799 = vmatpush1.msra.mxu0 0.0
  %1800 = vmatprep.subr.mxu0 0.0
  %1801 = vmatpush1.msra.mxu0 0.0
  %1802 = vmatprep.subr.mxu0 0.0
  %1803 = vmatpush1.msra.mxu0 0.0
  %1804 = vmatprep.subr.mxu0 0.0
  %1805 = vmatpush1.msra.mxu0 0.0
  %1806 = vmatprep.subr.mxu0 0.0
  %1807 = vmatpush1.msra.mxu0 0.0
  %1808 = vmatprep.subr.mxu0 0.0
  %1809 = vmatpush1.msra.mxu0 0.0
  %1810 = vmatprep.subr.mxu0 0.0
  %1811 = vmatpush1.msra.mxu0 0.0
  %1812 = vmatprep.subr.mxu0 0.0
  %1813 = vmatpush1.msra.mxu0 0.0
  %1814 = vmatprep.subr.mxu0 0.0
  %1815 = vmatpush1.msra.mxu0 0.0
  %1816 = vmatprep.subr.mxu0 0.0
  %1817 = vmatpush1.msra.mxu0 0.0
  %1818 = vmatprep.subr.mxu0 0.0
  %1819 = vmatpush1.msra.mxu0 0.0
  %1820 = vmatprep.subr.mxu0 0.0
  %1821 = vmatpush1.msra.mxu0 0.0
  %1822 = vmatprep.subr.mxu0 0.0
  %1823 = vmatpush1.msra.mxu0 0.0
  %1824 = vmatprep.subr.mxu0 0.0
  %1825 = vmatpush1.msra.mxu0 0.0
  %1826 = vmatprep.subr.mxu0 0.0
  %1827 = vmatpush1.msra.mxu0 0.0
  %1828 = vmatprep.subr.mxu0 0.0
  %1829 = vmatpush1.msra.mxu0 0.0
  %1830 = vmatprep.subr.mxu0 0.0
  %1831 = vmatpush1.msra.mxu0 0.0
  %1832 = vmatprep.subr.mxu0 0.0
  %1833 = vmatpush1.msra.mxu0 0.0
  %1834 = vmatprep.subr.mxu0 0.0
  %1835 = vmatpush1.msra.mxu0 0.0
  %1836 = vmatprep.subr.mxu0 0.0
  %1837 = vmatpush1.msra.mxu0 0.0
  %1838 = vmatprep.subr.mxu0 0.0
  %1839 = vmatpush1.msra.mxu0 0.0
  %1840 = vmatprep.subr.mxu0 0.0
  %1841 = vmatpush1.msra.mxu0 0.0
  %1842 = vmatprep.mubr.f32.mxu0 0.0
  %1843 = vmatmul.mubr.f32.gmra.mrb[0].mxu0 %v1770
  %v1844 = vpop.f32.mrb[0].mxu0
  %v1845 = vadd.f32 %v751, %v1844
  %v1846 = vpop.f32.mrb[0].mxu0
  %1847 = vmatprep.mubr.f32.mxu0 0.0
  %1848 = vmatmul.mubr.f32.gmra.mrb[0].mxu0 %v1772
  %v1849 = vpop.f32.mrb[0].mxu0
  %v1850 = vadd.f32 %v751, %v1849
  %v1851 = vpop.f32.mrb[0].mxu0
  %1852 = vmatprep.mubr.f32.mxu0 0.0
  %1853 = vmatmul.mubr.f32.gmra.mrb[0].mxu0 %v1774
  %v1854 = vpop.f32.mrb[0].mxu0
  %v1855 = vadd.f32 %v751, %v1854
  %v1856 = vpop.f32.mrb[0].mxu0
  %1857 = vmatprep.mubr.f32.mxu0 0.0
  %1858 = vmatmul.mubr.f32.gmra.mrb[0].mxu0 %v1776
  %v1859 = vpop.f32.mrb[0].mxu0
  %v1860 = vadd.f32 %v751, %v1859
  %v1861 = vpop.f32.mrb[0].mxu0
  %1862 = vdwg.mxu0
  %v1863 = vadd.f32 %v1678, %v1751
  %v1864 = vxor.u32 %v1863, 2147483648
  %v1865 = vmul.f32 %v1864, 1.442695
  %v1866 = vpow.pop %v1865
  %v1867 = vadd.f32 %v1866, 1.0
  %v1868 = vrcp.pop %v1867
  %v1869 = vmul.f32 1.0, %v1868
  %1871 = vrot.lane.b32.xlu0 %v1751, 64
  %v1872 = vpop.permute.xlu0 %1871
  %v1874 = vmul.f32 %v1869, %v1872
  %1876 = vrot.lane.b32.xlu0 %v1874, 64
  %v1877 = vpop.permute.xlu0 %1876
  %v1879 = vadd.f32 %v1678, %v1877
  %v1880 = vtanh.pop %v1879
  %v1881 = vsub.f32 1.0, %v1869
  %1883 = vrot.lane.b32.xlu0 %v1880, 96
  %v1884 = vpop.permute.xlu0 %1883
  %v1886 = vmul.f32 %v1881, %v1884
  %v1887 = vmul.f32 %v1869, %v1573
  %v1888 = vadd.f32 %v1886, %v1887
  %v1889 = vadd.f32 %v1754, %v1845
  %v1890 = vadd.f32 %v1755, %v1850
  %v1891 = vadd.f32 %v1756, %v1855
  %v1892 = vadd.f32 %v1757, %v1860
  %v1893 = vxor.u32 %v1889, 2147483648
  %v1894 = vxor.u32 %v1890, 2147483648
  %v1895 = vxor.u32 %v1891, 2147483648
  %v1896 = vxor.u32 %v1892, 2147483648
  %v1897 = vmul.f32 %v1893, 1.442695
  %v1898 = vpow.pop %v1897
  %v1899 = vmul.f32 %v1894, 1.442695
  %v1900 = vpow.pop %v1899
  %v1901 = vmul.f32 %v1895, 1.442695
  %v1902 = vpow.pop %v1901
  %v1903 = vmul.f32 %v1896, 1.442695
  %v1904 = vpow.pop %v1903
  %v1905 = vadd.f32 %v1898, 1.0
  %v1906 = vadd.f32 %v1900, 1.0
  %v1907 = vadd.f32 %v1902, 1.0
  %v1908 = vadd.f32 %v1904, 1.0
  %v1909 = vrcp.pop %v1905
  %v1910 = vmul.f32 1.0, %v1909
  %v1911 = vrcp.pop %v1906
  %v1912 = vmul.f32 1.0, %v1911
  %v1913 = vrcp.pop %v1907
  %v1914 = vmul.f32 1.0, %v1913
  %v1915 = vrcp.pop %v1908
  %v1916 = vmul.f32 1.0, %v1915
  %1921 = vrot.lane.b32.xlu0 %v1845, 112
  %v1922 = vpop.permute.xlu0 %1921
  %1923 = vrot.lane.b32.xlu0 %v1850, 112
  %v1924 = vpop.permute.xlu0 %1923
  %1925 = vrot.lane.b32.xlu0 %v1855, 112
  %v1926 = vpop.permute.xlu0 %1925
  %1927 = vrot.lane.b32.xlu0 %v1860, 112
  %v1928 = vpop.permute.xlu0 %1927
  %v1933 = vmul.f32 %v1910, %v1922
  %v1934 = vmul.f32 %v1912, %v1924
  %v1935 = vmul.f32 %v1914, %v1926
  %v1936 = vmul.f32 %v1916, %v1928
  %1941 = vrot.lane.b32.xlu0 %v1933, 16
  %v1942 = vpop.permute.xlu0 %1941
  %1943 = vrot.lane.b32.xlu0 %v1934, 16
  %v1944 = vpop.permute.xlu0 %1943
  %1945 = vrot.lane.b32.xlu0 %v1935, 16
  %v1946 = vpop.permute.xlu0 %1945
  %1947 = vrot.lane.b32.xlu0 %v1936, 16
  %v1948 = vpop.permute.xlu0 %1947
  %v1953 = vadd.f32 %v1754, %v1942
  %v1954 = vadd.f32 %v1755, %v1944
  %v1955 = vadd.f32 %v1756, %v1946
  %v1956 = vadd.f32 %v1757, %v1948
  %v1957 = vtanh.pop %v1953
  %v1958 = vtanh.pop %v1954
  %v1959 = vtanh.pop %v1955
  %v1960 = vtanh.pop %v1956
  %v1961 = vsub.f32 1.0, %v1910
  %v1962 = vsub.f32 1.0, %v1912
  %v1963 = vsub.f32 1.0, %v1914
  %v1964 = vsub.f32 1.0, %v1916
  %1969 = vrot.lane.b32.xlu0 %v1957, 120
  %v1970 = vpop.permute.xlu0 %1969
  %1971 = vrot.lane.b32.xlu0 %v1958, 120
  %v1972 = vpop.permute.xlu0 %1971
  %1973 = vrot.lane.b32.xlu0 %v1959, 120
  %v1974 = vpop.permute.xlu0 %1973
  %1975 = vrot.lane.b32.xlu0 %v1960, 120
  %v1976 = vpop.permute.xlu0 %1975
  %v1981 = vmul.f32 %v1961, %v1970
  %v1982 = vmul.f32 %v1962, %v1972
  %v1983 = vmul.f32 %v1963, %v1974
  %v1984 = vmul.f32 %v1964, %v1976
  %v1985 = vmul.f32 %v1910, %v1674
  %v1986 = vmul.f32 %v1912, %v1675
  %v1987 = vmul.f32 %v1914, %v1676
  %v1988 = vmul.f32 %v1916, %v1677
  %v1989 = vadd.f32 %v1981, %v1985
  %v1990 = vadd.f32 %v1982, %v1986
  %v1991 = vadd.f32 %v1983, %v1987
  %v1992 = vadd.f32 %v1984, %v1988
  %v1993 = vld [vmem:[#allocation2 + $0x20] sm:$0xff]
  %1995 = vrot.lane.b32.xlu0 %v1888, 96
  %v1996 = vpop.permute.xlu0 %1995
  %v1997 = vsel %vm53, %v1996, 0
  %1999 = vmatprep.subr.mxu0 0.0
  %2000 = vmatpush1.msra.mxu0 %v739
  %2001 = vmatprep.subr.mxu0 0.0
  %2002 = vmatpush1.msra.mxu0 %v740
  %2003 = vmatprep.subr.mxu0 0.0
  %2004 = vmatpush1.msra.mxu0 %v741
  %2005 = vmatprep.subr.mxu0 0.0
  %2006 = vmatpush1.msra.mxu0 %v742
  %2007 = vmatprep.subr.mxu0 0.0
  %2008 = vmatpush1.msra.mxu0 0.0
  %2009 = vmatprep.subr.mxu0 0.0
  %2010 = vmatpush1.msra.mxu0 0.0
  %2011 = vmatprep.subr.mxu0 0.0
  %2012 = vmatpush1.msra.mxu0 0.0
  %2013 = vmatprep.subr.mxu0 0.0
  %2014 = vmatpush1.msra.mxu0 0.0
  %2015 = vmatprep.subr.mxu0 0.0
  %2016 = vmatpush1.msra.mxu0 0.0
  %2017 = vmatprep.subr.mxu0 0.0
  %2018 = vmatpush1.msra.mxu0 0.0
  %2019 = vmatprep.subr.mxu0 0.0
  %2020 = vmatpush1.msra.mxu0 0.0
  %2021 = vmatprep.subr.mxu0 0.0
  %2022 = vmatpush1.msra.mxu0 0.0
  %2023 = vmatprep.subr.mxu0 0.0
  %2024 = vmatpush1.msra.mxu0 0.0
  %2025 = vmatprep.subr.mxu0 0.0
  %2026 = vmatpush1.msra.mxu0 0.0
  %2027 = vmatprep.subr.mxu0 0.0
  %2028 = vmatpush1.msra.mxu0 0.0
  %2029 = vmatprep.subr.mxu0 0.0
  %2030 = vmatpush1.msra.mxu0 0.0
  %2031 = vmatprep.subr.mxu0 0.0
  %2032 = vmatpush1.msra.mxu0 0.0
  %2033 = vmatprep.subr.mxu0 0.0
  %2034 = vmatpush1.msra.mxu0 0.0
  %2035 = vmatprep.subr.mxu0 0.0
  %2036 = vmatpush1.msra.mxu0 0.0
  %2037 = vmatprep.subr.mxu0 0.0
  %2038 = vmatpush1.msra.mxu0 0.0
  %2039 = vmatprep.subr.mxu0 0.0
  %2040 = vmatpush1.msra.mxu0 0.0
  %2041 = vmatprep.subr.mxu0 0.0
  %2042 = vmatpush1.msra.mxu0 0.0
  %2043 = vmatprep.subr.mxu0 0.0
  %2044 = vmatpush1.msra.mxu0 0.0
  %2045 = vmatprep.subr.mxu0 0.0
  %2046 = vmatpush1.msra.mxu0 0.0
  %2047 = vmatprep.subr.mxu0 0.0
  %2048 = vmatpush1.msra.mxu0 0.0
  %2049 = vmatprep.subr.mxu0 0.0
  %2050 = vmatpush1.msra.mxu0 0.0
  %2051 = vmatprep.subr.mxu0 0.0
  %2052 = vmatpush1.msra.mxu0 0.0
  %2053 = vmatprep.subr.mxu0 0.0
  %2054 = vmatpush1.msra.mxu0 0.0
  %2055 = vmatprep.subr.mxu0 0.0
  %2056 = vmatpush1.msra.mxu0 0.0
  %2057 = vmatprep.subr.mxu0 0.0
  %2058 = vmatpush1.msra.mxu0 0.0
  %2059 = vmatprep.subr.mxu0 0.0
  %2060 = vmatpush1.msra.mxu0 0.0
  %2061 = vmatprep.subr.mxu0 0.0
  %2062 = vmatpush1.msra.mxu0 0.0
  %2063 = vmatprep.mubr.f32.mxu0 0.0
  %2064 = vmatmul.mubr.f32.gmra.mrb[0].mxu0 %v1997
  %v2065 = vpop.f32.mrb[0].mxu0
  %v2066 = vadd.f32 %v747, %v2065
  %v2067 = vpop.f32.mrb[0].mxu0
  %2068 = vdwg.mxu0
  %v2069 = vld [vmem:[#allocation3 + $0x80] sm:$0xff]
  %v2070 = vld [vmem:[#allocation3 + $0x88] sm:$0xff]
  %v2071 = vld [vmem:[#allocation3 + $0x90] sm:$0xff]
  %v2072 = vld [vmem:[#allocation3 + $0x98] sm:$0xff]
  %2077 = vrot.lane.b32.xlu0 %v1989, 120
  %v2078 = vpop.permute.xlu0 %2077
  %2079 = vrot.lane.b32.xlu0 %v1990, 120
  %v2080 = vpop.permute.xlu0 %2079
  %2081 = vrot.lane.b32.xlu0 %v1991, 120
  %v2082 = vpop.permute.xlu0 %2081
  %2083 = vrot.lane.b32.xlu0 %v1992, 120
  %v2084 = vpop.permute.xlu0 %2083
  %v2085 = vsel %vm830, %v2078, 0
  %v2087 = vsel %vm830, %v2080, 0
  %v2089 = vsel %vm830, %v2082, 0
  %v2091 = vsel %vm830, %v2084, 0
  %2093 = vmatprep.subr.mxu0 0.0
  %2094 = vmatpush1.msra.mxu0 %v743
  %2095 = vmatprep.subr.mxu0 0.0
  %2096 = vmatpush1.msra.mxu0 0.0
  %2097 = vmatprep.subr.mxu0 0.0
  %2098 = vmatpush1.msra.mxu0 0.0
  %2099 = vmatprep.subr.mxu0 0.0
  %2100 = vmatpush1.msra.mxu0 0.0
  %2101 = vmatprep.subr.mxu0 0.0
  %2102 = vmatpush1.msra.mxu0 0.0
  %2103 = vmatprep.subr.mxu0 0.0
  %2104 = vmatpush1.msra.mxu0 0.0
  %2105 = vmatprep.subr.mxu0 0.0
  %2106 = vmatpush1.msra.mxu0 0.0
  %2107 = vmatprep.subr.mxu0 0.0
  %2108 = vmatpush1.msra.mxu0 0.0
  %2109 = vmatprep.subr.mxu0 0.0
  %2110 = vmatpush1.msra.mxu0 0.0
  %2111 = vmatprep.subr.mxu0 0.0
  %2112 = vmatpush1.msra.mxu0 0.0
  %2113 = vmatprep.subr.mxu0 0.0
  %2114 = vmatpush1.msra.mxu0 0.0
  %2115 = vmatprep.subr.mxu0 0.0
  %2116 = vmatpush1.msra.mxu0 0.0
  %2117 = vmatprep.subr.mxu0 0.0
  %2118 = vmatpush1.msra.mxu0 0.0
  %2119 = vmatprep.subr.mxu0 0.0
  %2120 = vmatpush1.msra.mxu0 0.0
  %2121 = vmatprep.subr.mxu0 0.0
  %2122 = vmatpush1.msra.mxu0 0.0
  %2123 = vmatprep.subr.mxu0 0.0
  %2124 = vmatpush1.msra.mxu0 0.0
  %2125 = vmatprep.subr.mxu0 0.0
  %2126 = vmatpush1.msra.mxu0 0.0
  %2127 = vmatprep.subr.mxu0 0.0
  %2128 = vmatpush1.msra.mxu0 0.0
  %2129 = vmatprep.subr.mxu0 0.0
  %2130 = vmatpush1.msra.mxu0 0.0
  %2131 = vmatprep.subr.mxu0 0.0
  %2132 = vmatpush1.msra.mxu0 0.0
  %2133 = vmatprep.subr.mxu0 0.0
  %2134 = vmatpush1.msra.mxu0 0.0
  %2135 = vmatprep.subr.mxu0 0.0
  %2136 = vmatpush1.msra.mxu0 0.0
  %2137 = vmatprep.subr.mxu0 0.0
  %2138 = vmatpush1.msra.mxu0 0.0
  %2139 = vmatprep.subr.mxu0 0.0
  %2140 = vmatpush1.msra.mxu0 0.0
  %2141 = vmatprep.subr.mxu0 0.0
  %2142 = vmatpush1.msra.mxu0 0.0
  %2143 = vmatprep.subr.mxu0 0.0
  %2144 = vmatpush1.msra.mxu0 0.0
  %2145 = vmatprep.subr.mxu0 0.0
  %2146 = vmatpush1.msra.mxu0 0.0
  %2147 = vmatprep.subr.mxu0 0.0
  %2148 = vmatpush1.msra.mxu0 0.0
  %2149 = vmatprep.subr.mxu0 0.0
  %2150 = vmatpush1.msra.mxu0 0.0
  %2151 = vmatprep.subr.mxu0 0.0
  %2152 = vmatpush1.msra.mxu0 0.0
  %2153 = vmatprep.subr.mxu0 0.0
  %2154 = vmatpush1.msra.mxu0 0.0
  %2155 = vmatprep.subr.mxu0 0.0
  %2156 = vmatpush1.msra.mxu0 0.0
  %2157 = vmatprep.mubr.f32.mxu0 0.0
  %2158 = vmatmul.mubr.f32.gmra.mrb[0].mxu0 %v2085
  %v2159 = vpop.f32.mrb[0].mxu0
  %v2160 = vadd.f32 %v751, %v2159
  %v2161 = vpop.f32.mrb[0].mxu0
  %2162 = vmatprep.mubr.f32.mxu0 0.0
  %2163 = vmatmul.mubr.f32.gmra.mrb[0].mxu0 %v2087
  %v2164 = vpop.f32.mrb[0].mxu0
  %v2165 = vadd.f32 %v751, %v2164
  %v2166 = vpop.f32.mrb[0].mxu0
  %2167 = vmatprep.mubr.f32.mxu0 0.0
  %2168 = vmatmul.mubr.f32.gmra.mrb[0].mxu0 %v2089
  %v2169 = vpop.f32.mrb[0].mxu0
  %v2170 = vadd.f32 %v751, %v2169
  %v2171 = vpop.f32.mrb[0].mxu0
  %2172 = vmatprep.mubr.f32.mxu0 0.0
  %2173 = vmatmul.mubr.f32.gmra.mrb[0].mxu0 %v2091
  %v2174 = vpop.f32.mrb[0].mxu0
  %v2175 = vadd.f32 %v751, %v2174
  %v2176 = vpop.f32.mrb[0].mxu0
  %2177 = vdwg.mxu0
  %v2178 = vadd.f32 %v1993, %v2066
  %v2179 = vxor.u32 %v2178, 2147483648
  %v2180 = vmul.f32 %v2179, 1.442695
  %v2181 = vpow.pop %v2180
  %v2182 = vadd.f32 %v2181, 1.0
  %v2183 = vrcp.pop %v2182
  %v2184 = vmul.f32 1.0, %v2183
  %2186 = vrot.lane.b32.xlu0 %v2066, 64
  %v2187 = vpop.permute.xlu0 %2186
  %v2189 = vmul.f32 %v2184, %v2187
  %2191 = vrot.lane.b32.xlu0 %v2189, 64
  %v2192 = vpop.permute.xlu0 %2191
  %v2194 = vadd.f32 %v1993, %v2192
  %v2195 = vtanh.pop %v2194
  %v2196 = vsub.f32 1.0, %v2184
  %2198 = vrot.lane.b32.xlu0 %v2195, 96
  %v2199 = vpop.permute.xlu0 %2198
  %v2201 = vmul.f32 %v2196, %v2199
  %v2202 = vmul.f32 %v2184, %v1888
  %v2203 = vadd.f32 %v2201, %v2202
  %v2204 = vadd.f32 %v2069, %v2160
  %v2205 = vadd.f32 %v2070, %v2165
  %v2206 = vadd.f32 %v2071, %v2170
  %v2207 = vadd.f32 %v2072, %v2175
  %v2208 = vxor.u32 %v2204, 2147483648
  %v2209 = vxor.u32 %v2205, 2147483648
  %v2210 = vxor.u32 %v2206, 2147483648
  %v2211 = vxor.u32 %v2207, 2147483648
  %v2212 = vmul.f32 %v2208, 1.442695
  %v2213 = vpow.pop %v2212
  %v2214 = vmul.f32 %v2209, 1.442695
  %v2215 = vpow.pop %v2214
  %v2216 = vmul.f32 %v2210, 1.442695
  %v2217 = vpow.pop %v2216
  %v2218 = vmul.f32 %v2211, 1.442695
  %v2219 = vpow.pop %v2218
  %v2220 = vadd.f32 %v2213, 1.0
  %v2221 = vadd.f32 %v2215, 1.0
  %v2222 = vadd.f32 %v2217, 1.0
  %v2223 = vadd.f32 %v2219, 1.0
  %v2224 = vrcp.pop %v2220
  %v2225 = vmul.f32 1.0, %v2224
  %v2226 = vrcp.pop %v2221
  %v2227 = vmul.f32 1.0, %v2226
  %v2228 = vrcp.pop %v2222
  %v2229 = vmul.f32 1.0, %v2228
  %v2230 = vrcp.pop %v2223
  %v2231 = vmul.f32 1.0, %v2230
  %2236 = vrot.lane.b32.xlu0 %v2160, 112
  %v2237 = vpop.permute.xlu0 %2236
  %2238 = vrot.lane.b32.xlu0 %v2165, 112
  %v2239 = vpop.permute.xlu0 %2238
  %2240 = vrot.lane.b32.xlu0 %v2170, 112
  %v2241 = vpop.permute.xlu0 %2240
  %2242 = vrot.lane.b32.xlu0 %v2175, 112
  %v2243 = vpop.permute.xlu0 %2242
  %v2248 = vmul.f32 %v2225, %v2237
  %v2249 = vmul.f32 %v2227, %v2239
  %v2250 = vmul.f32 %v2229, %v2241
  %v2251 = vmul.f32 %v2231, %v2243
  %2256 = vrot.lane.b32.xlu0 %v2248, 16
  %v2257 = vpop.permute.xlu0 %2256
  %2258 = vrot.lane.b32.xlu0 %v2249, 16
  %v2259 = vpop.permute.xlu0 %2258
  %2260 = vrot.lane.b32.xlu0 %v2250, 16
  %v2261 = vpop.permute.xlu0 %2260
  %2262 = vrot.lane.b32.xlu0 %v2251, 16
  %v2263 = vpop.permute.xlu0 %2262
  %v2268 = vadd.f32 %v2069, %v2257
  %v2269 = vadd.f32 %v2070, %v2259
  %v2270 = vadd.f32 %v2071, %v2261
  %v2271 = vadd.f32 %v2072, %v2263
  %v2272 = vtanh.pop %v2268
  %v2273 = vtanh.pop %v2269
  %v2274 = vtanh.pop %v2270
  %v2275 = vtanh.pop %v2271
  %v2276 = vsub.f32 1.0, %v2225
  %v2277 = vsub.f32 1.0, %v2227
  %v2278 = vsub.f32 1.0, %v2229
  %v2279 = vsub.f32 1.0, %v2231
  %2284 = vrot.lane.b32.xlu0 %v2272, 120
  %v2285 = vpop.permute.xlu0 %2284
  %2286 = vrot.lane.b32.xlu0 %v2273, 120
  %v2287 = vpop.permute.xlu0 %2286
  %2288 = vrot.lane.b32.xlu0 %v2274, 120
  %v2289 = vpop.permute.xlu0 %2288
  %2290 = vrot.lane.b32.xlu0 %v2275, 120
  %v2291 = vpop.permute.xlu0 %2290
  %v2296 = vmul.f32 %v2276, %v2285
  %v2297 = vmul.f32 %v2277, %v2287
  %v2298 = vmul.f32 %v2278, %v2289
  %v2299 = vmul.f32 %v2279, %v2291
  %v2300 = vmul.f32 %v2225, %v1989
  %v2301 = vmul.f32 %v2227, %v1990
  %v2302 = vmul.f32 %v2229, %v1991
  %v2303 = vmul.f32 %v2231, %v1992
  %v2304 = vadd.f32 %v2296, %v2300
  %v2305 = vadd.f32 %v2297, %v2301
  %v2306 = vadd.f32 %v2298, %v2302
  %v2307 = vadd.f32 %v2299, %v2303
  %v2308 = vld [vmem:[#allocation2 + $0x28] sm:$0xff]
  %2310 = vrot.lane.b32.xlu0 %v2203, 96
  %v2311 = vpop.permute.xlu0 %2310
  %v2312 = vsel %vm53, %v2311, 0
  %2314 = vmatprep.subr.mxu0 0.0
  %2315 = vmatpush1.msra.mxu0 %v739
  %2316 = vmatprep.subr.mxu0 0.0
  %2317 = vmatpush1.msra.mxu0 %v740
  %2318 = vmatprep.subr.mxu0 0.0
  %2319 = vmatpush1.msra.mxu0 %v741
  %2320 = vmatprep.subr.mxu0 0.0
  %2321 = vmatpush1.msra.mxu0 %v742
  %2322 = vmatprep.subr.mxu0 0.0
  %2323 = vmatpush1.msra.mxu0 0.0
  %2324 = vmatprep.subr.mxu0 0.0
  %2325 = vmatpush1.msra.mxu0 0.0
  %2326 = vmatprep.subr.mxu0 0.0
  %2327 = vmatpush1.msra.mxu0 0.0
  %2328 = vmatprep.subr.mxu0 0.0
  %2329 = vmatpush1.msra.mxu0 0.0
  %2330 = vmatprep.subr.mxu0 0.0
  %2331 = vmatpush1.msra.mxu0 0.0
  %2332 = vmatprep.subr.mxu0 0.0
  %2333 = vmatpush1.msra.mxu0 0.0
  %2334 = vmatprep.subr.mxu0 0.0
  %2335 = vmatpush1.msra.mxu0 0.0
  %2336 = vmatprep.subr.mxu0 0.0
  %2337 = vmatpush1.msra.mxu0 0.0
  %2338 = vmatprep.subr.mxu0 0.0
  %2339 = vmatpush1.msra.mxu0 0.0
  %2340 = vmatprep.subr.mxu0 0.0
  %2341 = vmatpush1.msra.mxu0 0.0
  %2342 = vmatprep.subr.mxu0 0.0
  %2343 = vmatpush1.msra.mxu0 0.0
  %2344 = vmatprep.subr.mxu0 0.0
  %2345 = vmatpush1.msra.mxu0 0.0
  %2346 = vmatprep.subr.mxu0 0.0
  %2347 = vmatpush1.msra.mxu0 0.0
  %2348 = vmatprep.subr.mxu0 0.0
  %2349 = vmatpush1.msra.mxu0 0.0
  %2350 = vmatprep.subr.mxu0 0.0
  %2351 = vmatpush1.msra.mxu0 0.0
  %2352 = vmatprep.subr.mxu0 0.0
  %2353 = vmatpush1.msra.mxu0 0.0
  %2354 = vmatprep.subr.mxu0 0.0
  %2355 = vmatpush1.msra.mxu0 0.0
  %2356 = vmatprep.subr.mxu0 0.0
  %2357 = vmatpush1.msra.mxu0 0.0
  %2358 = vmatprep.subr.mxu0 0.0
  %2359 = vmatpush1.msra.mxu0 0.0
  %2360 = vmatprep.subr.mxu0 0.0
  %2361 = vmatpush1.msra.mxu0 0.0
  %2362 = vmatprep.subr.mxu0 0.0
  %2363 = vmatpush1.msra.mxu0 0.0
  %2364 = vmatprep.subr.mxu0 0.0
  %2365 = vmatpush1.msra.mxu0 0.0
  %2366 = vmatprep.subr.mxu0 0.0
  %2367 = vmatpush1.msra.mxu0 0.0
  %2368 = vmatprep.subr.mxu0 0.0
  %2369 = vmatpush1.msra.mxu0 0.0
  %2370 = vmatprep.subr.mxu0 0.0
  %2371 = vmatpush1.msra.mxu0 0.0
  %2372 = vmatprep.subr.mxu0 0.0
  %2373 = vmatpush1.msra.mxu0 0.0
  %2374 = vmatprep.subr.mxu0 0.0
  %2375 = vmatpush1.msra.mxu0 0.0
  %2376 = vmatprep.subr.mxu0 0.0
  %2377 = vmatpush1.msra.mxu0 0.0
  %2378 = vmatprep.mubr.f32.mxu0 0.0
  %2379 = vmatmul.mubr.f32.gmra.mrb[0].mxu0 %v2312
  %v2380 = vpop.f32.mrb[0].mxu0
  %v2381 = vadd.f32 %v747, %v2380
  %v2382 = vpop.f32.mrb[0].mxu0
  %2383 = vdwg.mxu0
  %v2384 = vadd.f32 %v2308, %v2381
  %v2385 = vxor.u32 %v2384, 2147483648
  %v2386 = vmul.f32 %v2385, 1.442695
  %v2387 = vpow.pop %v2386
  %v2388 = vadd.f32 %v2387, 1.0
  %v2389 = vrcp.pop %v2388
  %v2390 = vmul.f32 1.0, %v2389
  %2392 = vrot.lane.b32.xlu0 %v2381, 64
  %v2393 = vpop.permute.xlu0 %2392
  %v2395 = vmul.f32 %v2390, %v2393
  %2397 = vrot.lane.b32.xlu0 %v2395, 64
  %v2398 = vpop.permute.xlu0 %2397
  %v2400 = vadd.f32 %v2308, %v2398
  %v2401 = vtanh.pop %v2400
  %v2402 = vsub.f32 1.0, %v2390
  %2404 = vrot.lane.b32.xlu0 %v2401, 96
  %v2405 = vpop.permute.xlu0 %2404
  %v2407 = vmul.f32 %v2402, %v2405
  %v2408 = vmul.f32 %v2390, %v2203
  %v2409 = vadd.f32 %v2407, %v2408
  %v2410 = vld [vmem:[#allocation2 + $0x30] sm:$0xff]
  %2412 = vrot.lane.b32.xlu0 %v2409, 96
  %v2413 = vpop.permute.xlu0 %2412
  %v2414 = vsel %vm53, %v2413, 0
  %2416 = vmatprep.subr.mxu0 0.0
  %2417 = vmatpush1.msra.mxu0 %v739
  %2418 = vmatprep.subr.mxu0 0.0
  %2419 = vmatpush1.msra.mxu0 %v740
  %2420 = vmatprep.subr.mxu0 0.0
  %2421 = vmatpush1.msra.mxu0 %v741
  %2422 = vmatprep.subr.mxu0 0.0
  %2423 = vmatpush1.msra.mxu0 %v742
  %2424 = vmatprep.subr.mxu0 0.0
  %2425 = vmatpush1.msra.mxu0 0.0
  %2426 = vmatprep.subr.mxu0 0.0
  %2427 = vmatpush1.msra.mxu0 0.0
  %2428 = vmatprep.subr.mxu0 0.0
  %2429 = vmatpush1.msra.mxu0 0.0
  %2430 = vmatprep.subr.mxu0 0.0
  %2431 = vmatpush1.msra.mxu0 0.0
  %2432 = vmatprep.subr.mxu0 0.0
  %2433 = vmatpush1.msra.mxu0 0.0
  %2434 = vmatprep.subr.mxu0 0.0
  %2435 = vmatpush1.msra.mxu0 0.0
  %2436 = vmatprep.subr.mxu0 0.0
  %2437 = vmatpush1.msra.mxu0 0.0
  %2438 = vmatprep.subr.mxu0 0.0
  %2439 = vmatpush1.msra.mxu0 0.0
  %2440 = vmatprep.subr.mxu0 0.0
  %2441 = vmatpush1.msra.mxu0 0.0
  %2442 = vmatprep.subr.mxu0 0.0
  %2443 = vmatpush1.msra.mxu0 0.0
  %2444 = vmatprep.subr.mxu0 0.0
  %2445 = vmatpush1.msra.mxu0 0.0
  %2446 = vmatprep.subr.mxu0 0.0
  %2447 = vmatpush1.msra.mxu0 0.0
  %2448 = vmatprep.subr.mxu0 0.0
  %2449 = vmatpush1.msra.mxu0 0.0
  %2450 = vmatprep.subr.mxu0 0.0
  %2451 = vmatpush1.msra.mxu0 0.0
  %2452 = vmatprep.subr.mxu0 0.0
  %2453 = vmatpush1.msra.mxu0 0.0
  %2454 = vmatprep.subr.mxu0 0.0
  %2455 = vmatpush1.msra.mxu0 0.0
  %2456 = vmatprep.subr.mxu0 0.0
  %2457 = vmatpush1.msra.mxu0 0.0
  %2458 = vmatprep.subr.mxu0 0.0
  %2459 = vmatpush1.msra.mxu0 0.0
  %2460 = vmatprep.subr.mxu0 0.0
  %2461 = vmatpush1.msra.mxu0 0.0
  %2462 = vmatprep.subr.mxu0 0.0
  %2463 = vmatpush1.msra.mxu0 0.0
  %2464 = vmatprep.subr.mxu0 0.0
  %2465 = vmatpush1.msra.mxu0 0.0
  %2466 = vmatprep.subr.mxu0 0.0
  %2467 = vmatpush1.msra.mxu0 0.0
  %2468 = vmatprep.subr.mxu0 0.0
  %2469 = vmatpush1.msra.mxu0 0.0
  %2470 = vmatprep.subr.mxu0 0.0
  %2471 = vmatpush1.msra.mxu0 0.0
  %2472 = vmatprep.subr.mxu0 0.0
  %2473 = vmatpush1.msra.mxu0 0.0
  %2474 = vmatprep.subr.mxu0 0.0
  %2475 = vmatpush1.msra.mxu0 0.0
  %2476 = vmatprep.subr.mxu0 0.0
  %2477 = vmatpush1.msra.mxu0 0.0
  %2478 = vmatprep.subr.mxu0 0.0
  %2479 = vmatpush1.msra.mxu0 0.0
  %2480 = vmatprep.mubr.f32.mxu0 0.0
  %2481 = vmatmul.mubr.f32.gmra.mrb[0].mxu0 %v2414
  %v2482 = vpop.f32.mrb[0].mxu0
  %v2483 = vadd.f32 %v747, %v2482
  %v2484 = vpop.f32.mrb[0].mxu0
  %2485 = vdwg.mxu0
  %v2486 = vadd.f32 %v2410, %v2483
  %v2487 = vxor.u32 %v2486, 2147483648
  %v2488 = vmul.f32 %v2487, 1.442695
  %v2489 = vpow.pop %v2488
  %v2490 = vadd.f32 %v2489, 1.0
  %v2491 = vrcp.pop %v2490
  %v2492 = vmul.f32 1.0, %v2491
  %2494 = vrot.lane.b32.xlu0 %v2483, 64
  %v2495 = vpop.permute.xlu0 %2494
  %v2497 = vmul.f32 %v2492, %v2495
  %2499 = vrot.lane.b32.xlu0 %v2497, 64
  %v2500 = vpop.permute.xlu0 %2499
  %v2502 = vadd.f32 %v2410, %v2500
  %v2503 = vtanh.pop %v2502
  %v2504 = vsub.f32 1.0, %v2492
  %2506 = vrot.lane.b32.xlu0 %v2503, 96
  %v2507 = vpop.permute.xlu0 %2506
  %v2509 = vmul.f32 %v2504, %v2507
  %v2510 = vmul.f32 %v2492, %v2409
  %v2511 = vadd.f32 %v2509, %v2510
  %v2512 = vld [vmem:[#allocation2 + $0x38] sm:$0xff]
  %2514 = vrot.lane.b32.xlu0 %v2511, 96
  %v2515 = vpop.permute.xlu0 %2514
  %v2516 = vsel %vm53, %v2515, 0
  %2518 = vmatprep.subr.mxu0 0.0
  %2519 = vmatpush1.msra.mxu0 %v739
  %2520 = vmatprep.subr.mxu0 0.0
  %2521 = vmatpush1.msra.mxu0 %v740
  %2522 = vmatprep.subr.mxu0 0.0
  %2523 = vmatpush1.msra.mxu0 %v741
  %2524 = vmatprep.subr.mxu0 0.0
  %2525 = vmatpush1.msra.mxu0 %v742
  %2526 = vmatprep.subr.mxu0 0.0
  %2527 = vmatpush1.msra.mxu0 0.0
  %2528 = vmatprep.subr.mxu0 0.0
  %2529 = vmatpush1.msra.mxu0 0.0
  %2530 = vmatprep.subr.mxu0 0.0
  %2531 = vmatpush1.msra.mxu0 0.0
  %2532 = vmatprep.subr.mxu0 0.0
  %2533 = vmatpush1.msra.mxu0 0.0
  %2534 = vmatprep.subr.mxu0 0.0
  %2535 = vmatpush1.msra.mxu0 0.0
  %2536 = vmatprep.subr.mxu0 0.0
  %2537 = vmatpush1.msra.mxu0 0.0
  %2538 = vmatprep.subr.mxu0 0.0
  %2539 = vmatpush1.msra.mxu0 0.0
  %2540 = vmatprep.subr.mxu0 0.0
  %2541 = vmatpush1.msra.mxu0 0.0
  %2542 = vmatprep.subr.mxu0 0.0
  %2543 = vmatpush1.msra.mxu0 0.0
  %2544 = vmatprep.subr.mxu0 0.0
  %2545 = vmatpush1.msra.mxu0 0.0
  %2546 = vmatprep.subr.mxu0 0.0
  %2547 = vmatpush1.msra.mxu0 0.0
  %2548 = vmatprep.subr.mxu0 0.0
  %2549 = vmatpush1.msra.mxu0 0.0
  %2550 = vmatprep.subr.mxu0 0.0
  %2551 = vmatpush1.msra.mxu0 0.0
  %2552 = vmatprep.subr.mxu0 0.0
  %2553 = vmatpush1.msra.mxu0 0.0
  %2554 = vmatprep.subr.mxu0 0.0
  %2555 = vmatpush1.msra.mxu0 0.0
  %2556 = vmatprep.subr.mxu0 0.0
  %2557 = vmatpush1.msra.mxu0 0.0
  %2558 = vmatprep.subr.mxu0 0.0
  %2559 = vmatpush1.msra.mxu0 0.0
  %2560 = vmatprep.subr.mxu0 0.0
  %2561 = vmatpush1.msra.mxu0 0.0
  %2562 = vmatprep.subr.mxu0 0.0
  %2563 = vmatpush1.msra.mxu0 0.0
  %2564 = vmatprep.subr.mxu0 0.0
  %2565 = vmatpush1.msra.mxu0 0.0
  %2566 = vmatprep.subr.mxu0 0.0
  %2567 = vmatpush1.msra.mxu0 0.0
  %2568 = vmatprep.subr.mxu0 0.0
  %2569 = vmatpush1.msra.mxu0 0.0
  %2570 = vmatprep.subr.mxu0 0.0
  %2571 = vmatpush1.msra.mxu0 0.0
  %2572 = vmatprep.subr.mxu0 0.0
  %2573 = vmatpush1.msra.mxu0 0.0
  %2574 = vmatprep.subr.mxu0 0.0
  %2575 = vmatpush1.msra.mxu0 0.0
  %2576 = vmatprep.subr.mxu0 0.0
  %2577 = vmatpush1.msra.mxu0 0.0
  %2578 = vmatprep.subr.mxu0 0.0
  %2579 = vmatpush1.msra.mxu0 0.0
  %2580 = vmatprep.subr.mxu0 0.0
  %2581 = vmatpush1.msra.mxu0 0.0
  %2582 = vmatprep.mubr.f32.mxu0 0.0
  %2583 = vmatmul.mubr.f32.gmra.mrb[0].mxu0 %v2516
  %v2584 = vpop.f32.mrb[0].mxu0
  %v2585 = vadd.f32 %v747, %v2584
  %v2586 = vpop.f32.mrb[0].mxu0
  %2587 = vdwg.mxu0
  %v2588 = vadd.f32 %v2512, %v2585
  %v2589 = vxor.u32 %v2588, 2147483648
  %v2590 = vmul.f32 %v2589, 1.442695
  %v2591 = vpow.pop %v2590
  %v2592 = vadd.f32 %v2591, 1.0
  %v2593 = vrcp.pop %v2592
  %v2594 = vmul.f32 1.0, %v2593
  %2596 = vrot.lane.b32.xlu0 %v2585, 64
  %v2597 = vpop.permute.xlu0 %2596
  %v2599 = vmul.f32 %v2594, %v2597
  %2601 = vrot.lane.b32.xlu0 %v2599, 64
  %v2602 = vpop.permute.xlu0 %2601
  %v2604 = vadd.f32 %v2512, %v2602
  %v2605 = vtanh.pop %v2604
  %v2606 = vsub.f32 1.0, %v2594
  %2608 = vrot.lane.b32.xlu0 %v2605, 96
  %v2609 = vpop.permute.xlu0 %2608
  %v2611 = vmul.f32 %v2606, %v2609
  %v2612 = vmul.f32 %v2594, %v2511
  %v2613 = vadd.f32 %v2611, %v2612
  %v2614 = vld [vmem:[#allocation2 + $0x40] sm:$0xff]
  %2616 = vrot.lane.b32.xlu0 %v2613, 96
  %v2617 = vpop.permute.xlu0 %2616
  %v2618 = vsel %vm53, %v2617, 0
  %2620 = vmatprep.subr.mxu0 0.0
  %2621 = vmatpush1.msra.mxu0 %v739
  %2622 = vmatprep.subr.mxu0 0.0
  %2623 = vmatpush1.msra.mxu0 %v740
  %2624 = vmatprep.subr.mxu0 0.0
  %2625 = vmatpush1.msra.mxu0 %v741
  %2626 = vmatprep.subr.mxu0 0.0
  %2627 = vmatpush1.msra.mxu0 %v742
  %2628 = vmatprep.subr.mxu0 0.0
  %2629 = vmatpush1.msra.mxu0 0.0
  %2630 = vmatprep.subr.mxu0 0.0
  %2631 = vmatpush1.msra.mxu0 0.0
  %2632 = vmatprep.subr.mxu0 0.0
  %2633 = vmatpush1.msra.mxu0 0.0
  %2634 = vmatprep.subr.mxu0 0.0
  %2635 = vmatpush1.msra.mxu0 0.0
  %2636 = vmatprep.subr.mxu0 0.0
  %2637 = vmatpush1.msra.mxu0 0.0
  %2638 = vmatprep.subr.mxu0 0.0
  %2639 = vmatpush1.msra.mxu0 0.0
  %2640 = vmatprep.subr.mxu0 0.0
  %2641 = vmatpush1.msra.mxu0 0.0
  %2642 = vmatprep.subr.mxu0 0.0
  %2643 = vmatpush1.msra.mxu0 0.0
  %2644 = vmatprep.subr.mxu0 0.0
  %2645 = vmatpush1.msra.mxu0 0.0
  %2646 = vmatprep.subr.mxu0 0.0
  %2647 = vmatpush1.msra.mxu0 0.0
  %2648 = vmatprep.subr.mxu0 0.0
  %2649 = vmatpush1.msra.mxu0 0.0
  %2650 = vmatprep.subr.mxu0 0.0
  %2651 = vmatpush1.msra.mxu0 0.0
  %2652 = vmatprep.subr.mxu0 0.0
  %2653 = vmatpush1.msra.mxu0 0.0
  %2654 = vmatprep.subr.mxu0 0.0
  %2655 = vmatpush1.msra.mxu0 0.0
  %2656 = vmatprep.subr.mxu0 0.0
  %2657 = vmatpush1.msra.mxu0 0.0
  %2658 = vmatprep.subr.mxu0 0.0
  %2659 = vmatpush1.msra.mxu0 0.0
  %2660 = vmatprep.subr.mxu0 0.0
  %2661 = vmatpush1.msra.mxu0 0.0
  %2662 = vmatprep.subr.mxu0 0.0
  %2663 = vmatpush1.msra.mxu0 0.0
  %2664 = vmatprep.subr.mxu0 0.0
  %2665 = vmatpush1.msra.mxu0 0.0
  %2666 = vmatprep.subr.mxu0 0.0
  %2667 = vmatpush1.msra.mxu0 0.0
  %2668 = vmatprep.subr.mxu0 0.0
  %2669 = vmatpush1.msra.mxu0 0.0
  %2670 = vmatprep.subr.mxu0 0.0
  %2671 = vmatpush1.msra.mxu0 0.0
  %2672 = vmatprep.subr.mxu0 0.0
  %2673 = vmatpush1.msra.mxu0 0.0
  %2674 = vmatprep.subr.mxu0 0.0
  %2675 = vmatpush1.msra.mxu0 0.0
  %2676 = vmatprep.subr.mxu0 0.0
  %2677 = vmatpush1.msra.mxu0 0.0
  %2678 = vmatprep.subr.mxu0 0.0
  %2679 = vmatpush1.msra.mxu0 0.0
  %2680 = vmatprep.subr.mxu0 0.0
  %2681 = vmatpush1.msra.mxu0 0.0
  %2682 = vmatprep.subr.mxu0 0.0
  %2683 = vmatpush1.msra.mxu0 0.0
  %2684 = vmatprep.mubr.f32.mxu0 0.0
  %2685 = vmatmul.mubr.f32.gmra.mrb[0].mxu0 %v2618
  %v2686 = vpop.f32.mrb[0].mxu0
  %v2687 = vadd.f32 %v747, %v2686
  %v2688 = vpop.f32.mrb[0].mxu0
  %2689 = vdwg.mxu0
  %v2690 = vadd.f32 %v2614, %v2687
  %v2691 = vxor.u32 %v2690, 2147483648
  %v2692 = vmul.f32 %v2691, 1.442695
  %v2693 = vpow.pop %v2692
  %v2694 = vadd.f32 %v2693, 1.0
  %v2695 = vrcp.pop %v2694
  %v2696 = vmul.f32 1.0, %v2695
  %2698 = vrot.lane.b32.xlu0 %v2687, 64
  %v2699 = vpop.permute.xlu0 %2698
  %v2701 = vmul.f32 %v2696, %v2699
  %2703 = vrot.lane.b32.xlu0 %v2701, 64
  %v2704 = vpop.permute.xlu0 %2703
  %v2706 = vadd.f32 %v2614, %v2704
  %v2707 = vtanh.pop %v2706
  %v2708 = vsub.f32 1.0, %v2696
  %2710 = vrot.lane.b32.xlu0 %v2707, 96
  %v2711 = vpop.permute.xlu0 %2710
  %v2713 = vmul.f32 %v2708, %v2711
  %v2714 = vmul.f32 %v2696, %v2613
  %v2715 = vadd.f32 %v2713, %v2714
  %v2716 = vld [vmem:[#allocation2 + $0x48] sm:$0xff]
  %2718 = vrot.lane.b32.xlu0 %v2715, 96
  %v2719 = vpop.permute.xlu0 %2718
  %v2720 = vsel %vm53, %v2719, 0
  %2722 = vmatprep.subr.mxu0 0.0
  %2723 = vmatpush1.msra.mxu0 %v739
  %2724 = vmatprep.subr.mxu0 0.0
  %2725 = vmatpush1.msra.mxu0 %v740
  %2726 = vmatprep.subr.mxu0 0.0
  %2727 = vmatpush1.msra.mxu0 %v741
  %2728 = vmatprep.subr.mxu0 0.0
  %2729 = vmatpush1.msra.mxu0 %v742
  %2730 = vmatprep.subr.mxu0 0.0
  %2731 = vmatpush1.msra.mxu0 0.0
  %2732 = vmatprep.subr.mxu0 0.0
  %2733 = vmatpush1.msra.mxu0 0.0
  %2734 = vmatprep.subr.mxu0 0.0
  %2735 = vmatpush1.msra.mxu0 0.0
  %2736 = vmatprep.subr.mxu0 0.0
  %2737 = vmatpush1.msra.mxu0 0.0
  %2738 = vmatprep.subr.mxu0 0.0
  %2739 = vmatpush1.msra.mxu0 0.0
  %2740 = vmatprep.subr.mxu0 0.0
  %2741 = vmatpush1.msra.mxu0 0.0
  %2742 = vmatprep.subr.mxu0 0.0
  %2743 = vmatpush1.msra.mxu0 0.0
  %2744 = vmatprep.subr.mxu0 0.0
  %2745 = vmatpush1.msra.mxu0 0.0
  %2746 = vmatprep.subr.mxu0 0.0
  %2747 = vmatpush1.msra.mxu0 0.0
  %2748 = vmatprep.subr.mxu0 0.0
  %2749 = vmatpush1.msra.mxu0 0.0
  %2750 = vmatprep.subr.mxu0 0.0
  %2751 = vmatpush1.msra.mxu0 0.0
  %2752 = vmatprep.subr.mxu0 0.0
  %2753 = vmatpush1.msra.mxu0 0.0
  %2754 = vmatprep.subr.mxu0 0.0
  %2755 = vmatpush1.msra.mxu0 0.0
  %2756 = vmatprep.subr.mxu0 0.0
  %2757 = vmatpush1.msra.mxu0 0.0
  %2758 = vmatprep.subr.mxu0 0.0
  %2759 = vmatpush1.msra.mxu0 0.0
  %2760 = vmatprep.subr.mxu0 0.0
  %2761 = vmatpush1.msra.mxu0 0.0
  %2762 = vmatprep.subr.mxu0 0.0
  %2763 = vmatpush1.msra.mxu0 0.0
  %2764 = vmatprep.subr.mxu0 0.0
  %2765 = vmatpush1.msra.mxu0 0.0
  %2766 = vmatprep.subr.mxu0 0.0
  %2767 = vmatpush1.msra.mxu0 0.0
  %2768 = vmatprep.subr.mxu0 0.0
  %2769 = vmatpush1.msra.mxu0 0.0
  %2770 = vmatprep.subr.mxu0 0.0
  %2771 = vmatpush1.msra.mxu0 0.0
  %2772 = vmatprep.subr.mxu0 0.0
  %2773 = vmatpush1.msra.mxu0 0.0
  %2774 = vmatprep.subr.mxu0 0.0
  %2775 = vmatpush1.msra.mxu0 0.0
  %2776 = vmatprep.subr.mxu0 0.0
  %2777 = vmatpush1.msra.mxu0 0.0
  %2778 = vmatprep.subr.mxu0 0.0
  %2779 = vmatpush1.msra.mxu0 0.0
  %2780 = vmatprep.subr.mxu0 0.0
  %2781 = vmatpush1.msra.mxu0 0.0
  %2782 = vmatprep.subr.mxu0 0.0
  %2783 = vmatpush1.msra.mxu0 0.0
  %2784 = vmatprep.subr.mxu0 0.0
  %2785 = vmatpush1.msra.mxu0 0.0
  %2786 = vmatprep.mubr.f32.mxu0 0.0
  %2787 = vmatmul.mubr.f32.gmra.mrb[0].mxu0 %v2720
  %v2788 = vpop.f32.mrb[0].mxu0
  %v2789 = vadd.f32 %v747, %v2788
  %v2790 = vpop.f32.mrb[0].mxu0
  %2791 = vdwg.mxu0
  %v2792 = vadd.f32 %v2716, %v2789
  %v2793 = vxor.u32 %v2792, 2147483648
  %v2794 = vmul.f32 %v2793, 1.442695
  %v2795 = vpow.pop %v2794
  %v2796 = vadd.f32 %v2795, 1.0
  %v2797 = vrcp.pop %v2796
  %v2798 = vmul.f32 1.0, %v2797
  %2800 = vrot.lane.b32.xlu0 %v2789, 64
  %v2801 = vpop.permute.xlu0 %2800
  %v2803 = vmul.f32 %v2798, %v2801
  %2805 = vrot.lane.b32.xlu0 %v2803, 64
  %v2806 = vpop.permute.xlu0 %2805
  %v2808 = vadd.f32 %v2716, %v2806
  %v2809 = vtanh.pop %v2808
  %v2810 = vsub.f32 1.0, %v2798
  %2812 = vrot.lane.b32.xlu0 %v2809, 96
  %v2813 = vpop.permute.xlu0 %2812
  %v2815 = vmul.f32 %v2810, %v2813
  %v2816 = vmul.f32 %v2798, %v2715
  %v2817 = vadd.f32 %v2815, %v2816
  %v2818 = vld [vmem:[#allocation2 + $0x50] sm:$0xff]
  %2820 = vrot.lane.b32.xlu0 %v2817, 96
  %v2821 = vpop.permute.xlu0 %2820
  %v2822 = vsel %vm53, %v2821, 0
  %2824 = vmatprep.subr.mxu0 0.0
  %2825 = vmatpush1.msra.mxu0 %v739
  %2826 = vmatprep.subr.mxu0 0.0
  %2827 = vmatpush1.msra.mxu0 %v740
  %2828 = vmatprep.subr.mxu0 0.0
  %2829 = vmatpush1.msra.mxu0 %v741
  %2830 = vmatprep.subr.mxu0 0.0
  %2831 = vmatpush1.msra.mxu0 %v742
  %2832 = vmatprep.subr.mxu0 0.0
  %2833 = vmatpush1.msra.mxu0 0.0
  %2834 = vmatprep.subr.mxu0 0.0
  %2835 = vmatpush1.msra.mxu0 0.0
  %2836 = vmatprep.subr.mxu0 0.0
  %2837 = vmatpush1.msra.mxu0 0.0
  %2838 = vmatprep.subr.mxu0 0.0
  %2839 = vmatpush1.msra.mxu0 0.0
  %2840 = vmatprep.subr.mxu0 0.0
  %2841 = vmatpush1.msra.mxu0 0.0
  %2842 = vmatprep.subr.mxu0 0.0
  %2843 = vmatpush1.msra.mxu0 0.0
  %2844 = vmatprep.subr.mxu0 0.0
  %2845 = vmatpush1.msra.mxu0 0.0
  %2846 = vmatprep.subr.mxu0 0.0
  %2847 = vmatpush1.msra.mxu0 0.0
  %2848 = vmatprep.subr.mxu0 0.0
  %2849 = vmatpush1.msra.mxu0 0.0
  %2850 = vmatprep.subr.mxu0 0.0
  %2851 = vmatpush1.msra.mxu0 0.0
  %2852 = vmatprep.subr.mxu0 0.0
  %2853 = vmatpush1.msra.mxu0 0.0
  %2854 = vmatprep.subr.mxu0 0.0
  %2855 = vmatpush1.msra.mxu0 0.0
  %2856 = vmatprep.subr.mxu0 0.0
  %2857 = vmatpush1.msra.mxu0 0.0
  %2858 = vmatprep.subr.mxu0 0.0
  %2859 = vmatpush1.msra.mxu0 0.0
  %2860 = vmatprep.subr.mxu0 0.0
  %2861 = vmatpush1.msra.mxu0 0.0
  %2862 = vmatprep.subr.mxu0 0.0
  %2863 = vmatpush1.msra.mxu0 0.0
  %2864 = vmatprep.subr.mxu0 0.0
  %2865 = vmatpush1.msra.mxu0 0.0
  %2866 = vmatprep.subr.mxu0 0.0
  %2867 = vmatpush1.msra.mxu0 0.0
  %2868 = vmatprep.subr.mxu0 0.0
  %2869 = vmatpush1.msra.mxu0 0.0
  %2870 = vmatprep.subr.mxu0 0.0
  %2871 = vmatpush1.msra.mxu0 0.0
  %2872 = vmatprep.subr.mxu0 0.0
  %2873 = vmatpush1.msra.mxu0 0.0
  %2874 = vmatprep.subr.mxu0 0.0
  %2875 = vmatpush1.msra.mxu0 0.0
  %2876 = vmatprep.subr.mxu0 0.0
  %2877 = vmatpush1.msra.mxu0 0.0
  %2878 = vmatprep.subr.mxu0 0.0
  %2879 = vmatpush1.msra.mxu0 0.0
  %2880 = vmatprep.subr.mxu0 0.0
  %2881 = vmatpush1.msra.mxu0 0.0
  %2882 = vmatprep.subr.mxu0 0.0
  %2883 = vmatpush1.msra.mxu0 0.0
  %2884 = vmatprep.subr.mxu0 0.0
  %2885 = vmatpush1.msra.mxu0 0.0
  %2886 = vmatprep.subr.mxu0 0.0
  %2887 = vmatpush1.msra.mxu0 0.0
  %2888 = vmatprep.mubr.f32.mxu0 0.0
  %2889 = vmatmul.mubr.f32.gmra.mrb[0].mxu0 %v2822
  %v2890 = vpop.f32.mrb[0].mxu0
  %v2891 = vadd.f32 %v747, %v2890
  %v2892 = vpop.f32.mrb[0].mxu0
  %2893 = vdwg.mxu0
  %v2894 = vadd.f32 %v2818, %v2891
  %v2895 = vxor.u32 %v2894, 2147483648
  %v2896 = vmul.f32 %v2895, 1.442695
  %v2897 = vpow.pop %v2896
  %v2898 = vadd.f32 %v2897, 1.0
  %v2899 = vrcp.pop %v2898
  %v2900 = vmul.f32 1.0, %v2899
  %2902 = vrot.lane.b32.xlu0 %v2891, 64
  %v2903 = vpop.permute.xlu0 %2902
  %v2905 = vmul.f32 %v2900, %v2903
  %2907 = vrot.lane.b32.xlu0 %v2905, 64
  %v2908 = vpop.permute.xlu0 %2907
  %v2910 = vadd.f32 %v2818, %v2908
  %v2911 = vtanh.pop %v2910
  %v2912 = vsub.f32 1.0, %v2900
  %2914 = vrot.lane.b32.xlu0 %v2911, 96
  %v2915 = vpop.permute.xlu0 %2914
  %v2917 = vmul.f32 %v2912, %v2915
  %v2918 = vmul.f32 %v2900, %v2817
  %v2919 = vadd.f32 %v2917, %v2918
  %v2920 = vld [vmem:[#allocation2 + $0x58] sm:$0xff]
  %2922 = vrot.lane.b32.xlu0 %v2919, 96
  %v2923 = vpop.permute.xlu0 %2922
  %v2924 = vsel %vm53, %v2923, 0
  %2926 = vmatprep.subr.mxu0 0.0
  %2927 = vmatpush1.msra.mxu0 %v739
  %2928 = vmatprep.subr.mxu0 0.0
  %2929 = vmatpush1.msra.mxu0 %v740
  %2930 = vmatprep.subr.mxu0 0.0
  %2931 = vmatpush1.msra.mxu0 %v741
  %2932 = vmatprep.subr.mxu0 0.0
  %2933 = vmatpush1.msra.mxu0 %v742
  %2934 = vmatprep.subr.mxu0 0.0
  %2935 = vmatpush1.msra.mxu0 0.0
  %2936 = vmatprep.subr.mxu0 0.0
  %2937 = vmatpush1.msra.mxu0 0.0
  %2938 = vmatprep.subr.mxu0 0.0
  %2939 = vmatpush1.msra.mxu0 0.0
  %2940 = vmatprep.subr.mxu0 0.0
  %2941 = vmatpush1.msra.mxu0 0.0
  %2942 = vmatprep.subr.mxu0 0.0
  %2943 = vmatpush1.msra.mxu0 0.0
  %2944 = vmatprep.subr.mxu0 0.0
  %2945 = vmatpush1.msra.mxu0 0.0
  %2946 = vmatprep.subr.mxu0 0.0
  %2947 = vmatpush1.msra.mxu0 0.0
  %2948 = vmatprep.subr.mxu0 0.0
  %2949 = vmatpush1.msra.mxu0 0.0
  %2950 = vmatprep.subr.mxu0 0.0
  %2951 = vmatpush1.msra.mxu0 0.0
  %2952 = vmatprep.subr.mxu0 0.0
  %2953 = vmatpush1.msra.mxu0 0.0
  %2954 = vmatprep.subr.mxu0 0.0
  %2955 = vmatpush1.msra.mxu0 0.0
  %2956 = vmatprep.subr.mxu0 0.0
  %2957 = vmatpush1.msra.mxu0 0.0
  %2958 = vmatprep.subr.mxu0 0.0
  %2959 = vmatpush1.msra.mxu0 0.0
  %2960 = vmatprep.subr.mxu0 0.0
  %2961 = vmatpush1.msra.mxu0 0.0
  %2962 = vmatprep.subr.mxu0 0.0
  %2963 = vmatpush1.msra.mxu0 0.0
  %2964 = vmatprep.subr.mxu0 0.0
  %2965 = vmatpush1.msra.mxu0 0.0
  %2966 = vmatprep.subr.mxu0 0.0
  %2967 = vmatpush1.msra.mxu0 0.0
  %2968 = vmatprep.subr.mxu0 0.0
  %2969 = vmatpush1.msra.mxu0 0.0
  %2970 = vmatprep.subr.mxu0 0.0
  %2971 = vmatpush1.msra.mxu0 0.0
  %2972 = vmatprep.subr.mxu0 0.0
  %2973 = vmatpush1.msra.mxu0 0.0
  %2974 = vmatprep.subr.mxu0 0.0
  %2975 = vmatpush1.msra.mxu0 0.0
  %2976 = vmatprep.subr.mxu0 0.0
  %2977 = vmatpush1.msra.mxu0 0.0
  %2978 = vmatprep.subr.mxu0 0.0
  %2979 = vmatpush1.msra.mxu0 0.0
  %2980 = vmatprep.subr.mxu0 0.0
  %2981 = vmatpush1.msra.mxu0 0.0
  %2982 = vmatprep.subr.mxu0 0.0
  %2983 = vmatpush1.msra.mxu0 0.0
  %2984 = vmatprep.subr.mxu0 0.0
  %2985 = vmatpush1.msra.mxu0 0.0
  %2986 = vmatprep.subr.mxu0 0.0
  %2987 = vmatpush1.msra.mxu0 0.0
  %2988 = vmatprep.subr.mxu0 0.0
  %2989 = vmatpush1.msra.mxu0 0.0
  %2990 = vmatprep.mubr.f32.mxu0 0.0
  %2991 = vmatmul.mubr.f32.gmra.mrb[0].mxu0 %v2924
  %v2992 = vpop.f32.mrb[0].mxu0
  %v2993 = vadd.f32 %v747, %v2992
  %v2994 = vpop.f32.mrb[0].mxu0
  %2995 = vdwg.mxu0
  %v2996 = vadd.f32 %v2920, %v2993
  %v2997 = vxor.u32 %v2996, 2147483648
  %v2998 = vmul.f32 %v2997, 1.442695
  %v2999 = vpow.pop %v2998
  %v3000 = vadd.f32 %v2999, 1.0
  %v3001 = vrcp.pop %v3000
  %v3002 = vmul.f32 1.0, %v3001
  %3004 = vrot.lane.b32.xlu0 %v2993, 64
  %v3005 = vpop.permute.xlu0 %3004
  %v3007 = vmul.f32 %v3002, %v3005
  %3009 = vrot.lane.b32.xlu0 %v3007, 64
  %v3010 = vpop.permute.xlu0 %3009
  %v3012 = vadd.f32 %v2920, %v3010
  %v3013 = vtanh.pop %v3012
  %v3014 = vsub.f32 1.0, %v3002
  %3016 = vrot.lane.b32.xlu0 %v3013, 96
  %v3017 = vpop.permute.xlu0 %3016
  %v3019 = vmul.f32 %v3014, %v3017
  %v3020 = vmul.f32 %v3002, %v2919
  %v3021 = vadd.f32 %v3019, %v3020
  %v3022 = vld [vmem:[#allocation2 + $0x60] sm:$0xff]
  %3024 = vrot.lane.b32.xlu0 %v3021, 96
  %v3025 = vpop.permute.xlu0 %3024
  %v3026 = vsel %vm53, %v3025, 0
  %3028 = vmatprep.subr.mxu0 0.0
  %3029 = vmatpush1.msra.mxu0 %v739
  %3030 = vmatprep.subr.mxu0 0.0
  %3031 = vmatpush1.msra.mxu0 %v740
  %3032 = vmatprep.subr.mxu0 0.0
  %3033 = vmatpush1.msra.mxu0 %v741
  %3034 = vmatprep.subr.mxu0 0.0
  %3035 = vmatpush1.msra.mxu0 %v742
  %3036 = vmatprep.subr.mxu0 0.0
  %3037 = vmatpush1.msra.mxu0 0.0
  %3038 = vmatprep.subr.mxu0 0.0
  %3039 = vmatpush1.msra.mxu0 0.0
  %3040 = vmatprep.subr.mxu0 0.0
  %3041 = vmatpush1.msra.mxu0 0.0
  %3042 = vmatprep.subr.mxu0 0.0
  %3043 = vmatpush1.msra.mxu0 0.0
  %3044 = vmatprep.subr.mxu0 0.0
  %3045 = vmatpush1.msra.mxu0 0.0
  %3046 = vmatprep.subr.mxu0 0.0
  %3047 = vmatpush1.msra.mxu0 0.0
  %3048 = vmatprep.subr.mxu0 0.0
  %3049 = vmatpush1.msra.mxu0 0.0
  %3050 = vmatprep.subr.mxu0 0.0
  %3051 = vmatpush1.msra.mxu0 0.0
  %3052 = vmatprep.subr.mxu0 0.0
  %3053 = vmatpush1.msra.mxu0 0.0
  %3054 = vmatprep.subr.mxu0 0.0
  %3055 = vmatpush1.msra.mxu0 0.0
  %3056 = vmatprep.subr.mxu0 0.0
  %3057 = vmatpush1.msra.mxu0 0.0
  %3058 = vmatprep.subr.mxu0 0.0
  %3059 = vmatpush1.msra.mxu0 0.0
  %3060 = vmatprep.subr.mxu0 0.0
  %3061 = vmatpush1.msra.mxu0 0.0
  %3062 = vmatprep.subr.mxu0 0.0
  %3063 = vmatpush1.msra.mxu0 0.0
  %3064 = vmatprep.subr.mxu0 0.0
  %3065 = vmatpush1.msra.mxu0 0.0
  %3066 = vmatprep.subr.mxu0 0.0
  %3067 = vmatpush1.msra.mxu0 0.0
  %3068 = vmatprep.subr.mxu0 0.0
  %3069 = vmatpush1.msra.mxu0 0.0
  %3070 = vmatprep.subr.mxu0 0.0
  %3071 = vmatpush1.msra.mxu0 0.0
  %3072 = vmatprep.subr.mxu0 0.0
  %3073 = vmatpush1.msra.mxu0 0.0
  %3074 = vmatprep.subr.mxu0 0.0
  %3075 = vmatpush1.msra.mxu0 0.0
  %3076 = vmatprep.subr.mxu0 0.0
  %3077 = vmatpush1.msra.mxu0 0.0
  %3078 = vmatprep.subr.mxu0 0.0
  %3079 = vmatpush1.msra.mxu0 0.0
  %3080 = vmatprep.subr.mxu0 0.0
  %3081 = vmatpush1.msra.mxu0 0.0
  %3082 = vmatprep.subr.mxu0 0.0
  %3083 = vmatpush1.msra.mxu0 0.0
  %3084 = vmatprep.subr.mxu0 0.0
  %3085 = vmatpush1.msra.mxu0 0.0
  %3086 = vmatprep.subr.mxu0 0.0
  %3087 = vmatpush1.msra.mxu0 0.0
  %3088 = vmatprep.subr.mxu0 0.0
  %3089 = vmatpush1.msra.mxu0 0.0
  %3090 = vmatprep.subr.mxu0 0.0
  %3091 = vmatpush1.msra.mxu0 0.0
  %3092 = vmatprep.mubr.f32.mxu0 0.0
  %3093 = vmatmul.mubr.f32.gmra.mrb[0].mxu0 %v3026
  %v3094 = vpop.f32.mrb[0].mxu0
  %v3095 = vadd.f32 %v747, %v3094
  %v3096 = vpop.f32.mrb[0].mxu0
  %3097 = vdwg.mxu0
  %v3098 = vadd.f32 %v3022, %v3095
  %v3099 = vxor.u32 %v3098, 2147483648
  %v3100 = vmul.f32 %v3099, 1.442695
  %v3101 = vpow.pop %v3100
  %v3102 = vadd.f32 %v3101, 1.0
  %v3103 = vrcp.pop %v3102
  %v3104 = vmul.f32 1.0, %v3103
  %3106 = vrot.lane.b32.xlu0 %v3095, 64
  %v3107 = vpop.permute.xlu0 %3106
  %v3109 = vmul.f32 %v3104, %v3107
  %3111 = vrot.lane.b32.xlu0 %v3109, 64
  %v3112 = vpop.permute.xlu0 %3111
  %v3114 = vadd.f32 %v3022, %v3112
  %v3115 = vtanh.pop %v3114
  %v3116 = vsub.f32 1.0, %v3104
  %3118 = vrot.lane.b32.xlu0 %v3115, 96
  %v3119 = vpop.permute.xlu0 %3118
  %v3121 = vmul.f32 %v3116, %v3119
  %v3122 = vmul.f32 %v3104, %v3021
  %v3123 = vadd.f32 %v3121, %v3122
  %v3124 = vld [vmem:[#allocation2 + $0x68] sm:$0xff]
  %3126 = vrot.lane.b32.xlu0 %v3123, 96
  %v3127 = vpop.permute.xlu0 %3126
  %v3128 = vsel %vm53, %v3127, 0
  %3130 = vmatprep.subr.mxu0 0.0
  %3131 = vmatpush1.msra.mxu0 %v739
  %3132 = vmatprep.subr.mxu0 0.0
  %3133 = vmatpush1.msra.mxu0 %v740
  %3134 = vmatprep.subr.mxu0 0.0
  %3135 = vmatpush1.msra.mxu0 %v741
  %3136 = vmatprep.subr.mxu0 0.0
  %3137 = vmatpush1.msra.mxu0 %v742
  %3138 = vmatprep.subr.mxu0 0.0
  %3139 = vmatpush1.msra.mxu0 0.0
  %3140 = vmatprep.subr.mxu0 0.0
  %3141 = vmatpush1.msra.mxu0 0.0
  %3142 = vmatprep.subr.mxu0 0.0
  %3143 = vmatpush1.msra.mxu0 0.0
  %3144 = vmatprep.subr.mxu0 0.0
  %3145 = vmatpush1.msra.mxu0 0.0
  %3146 = vmatprep.subr.mxu0 0.0
  %3147 = vmatpush1.msra.mxu0 0.0
  %3148 = vmatprep.subr.mxu0 0.0
  %3149 = vmatpush1.msra.mxu0 0.0
  %3150 = vmatprep.subr.mxu0 0.0
  %3151 = vmatpush1.msra.mxu0 0.0
  %3152 = vmatprep.subr.mxu0 0.0
  %3153 = vmatpush1.msra.mxu0 0.0
  %3154 = vmatprep.subr.mxu0 0.0
  %3155 = vmatpush1.msra.mxu0 0.0
  %3156 = vmatprep.subr.mxu0 0.0
  %3157 = vmatpush1.msra.mxu0 0.0
  %3158 = vmatprep.subr.mxu0 0.0
  %3159 = vmatpush1.msra.mxu0 0.0
  %3160 = vmatprep.subr.mxu0 0.0
  %3161 = vmatpush1.msra.mxu0 0.0
  %3162 = vmatprep.subr.mxu0 0.0
  %3163 = vmatpush1.msra.mxu0 0.0
  %3164 = vmatprep.subr.mxu0 0.0
  %3165 = vmatpush1.msra.mxu0 0.0
  %3166 = vmatprep.subr.mxu0 0.0
  %3167 = vmatpush1.msra.mxu0 0.0
  %3168 = vmatprep.subr.mxu0 0.0
  %3169 = vmatpush1.msra.mxu0 0.0
  %3170 = vmatprep.subr.mxu0 0.0
  %3171 = vmatpush1.msra.mxu0 0.0
  %3172 = vmatprep.subr.mxu0 0.0
  %3173 = vmatpush1.msra.mxu0 0.0
  %3174 = vmatprep.subr.mxu0 0.0
  %3175 = vmatpush1.msra.mxu0 0.0
  %3176 = vmatprep.subr.mxu0 0.0
  %3177 = vmatpush1.msra.mxu0 0.0
  %3178 = vmatprep.subr.mxu0 0.0
  %3179 = vmatpush1.msra.mxu0 0.0
  %3180 = vmatprep.subr.mxu0 0.0
  %3181 = vmatpush1.msra.mxu0 0.0
  %3182 = vmatprep.subr.mxu0 0.0
  %3183 = vmatpush1.msra.mxu0 0.0
  %3184 = vmatprep.subr.mxu0 0.0
  %3185 = vmatpush1.msra.mxu0 0.0
  %3186 = vmatprep.subr.mxu0 0.0
  %3187 = vmatpush1.msra.mxu0 0.0
  %3188 = vmatprep.subr.mxu0 0.0
  %3189 = vmatpush1.msra.mxu0 0.0
  %3190 = vmatprep.subr.mxu0 0.0
  %3191 = vmatpush1.msra.mxu0 0.0
  %3192 = vmatprep.subr.mxu0 0.0
  %3193 = vmatpush1.msra.mxu0 0.0
  %3194 = vmatprep.mubr.f32.mxu0 0.0
  %3195 = vmatmul.mubr.f32.gmra.mrb[0].mxu0 %v3128
  %v3196 = vpop.f32.mrb[0].mxu0
  %v3197 = vadd.f32 %v747, %v3196
  %v3198 = vpop.f32.mrb[0].mxu0
  %3199 = vdwg.mxu0
  %v3200 = vadd.f32 %v3124, %v3197
  %v3201 = vxor.u32 %v3200, 2147483648
  %v3202 = vmul.f32 %v3201, 1.442695
  %v3203 = vpow.pop %v3202
  %v3204 = vadd.f32 %v3203, 1.0
  %v3205 = vrcp.pop %v3204
  %v3206 = vmul.f32 1.0, %v3205
  %3208 = vrot.lane.b32.xlu0 %v3197, 64
  %v3209 = vpop.permute.xlu0 %3208
  %v3211 = vmul.f32 %v3206, %v3209
  %3213 = vrot.lane.b32.xlu0 %v3211, 64
  %v3214 = vpop.permute.xlu0 %3213
  %v3216 = vadd.f32 %v3124, %v3214
  %v3217 = vtanh.pop %v3216
  %v3218 = vsub.f32 1.0, %v3206
  %3220 = vrot.lane.b32.xlu0 %v3217, 96
  %v3221 = vpop.permute.xlu0 %3220
  %v3223 = vmul.f32 %v3218, %v3221
  %v3224 = vmul.f32 %v3206, %v3123
  %v3225 = vadd.f32 %v3223, %v3224
  %v3226 = vld [vmem:[#allocation2 + $0x70] sm:$0xff]
  %3228 = vrot.lane.b32.xlu0 %v3225, 96
  %v3229 = vpop.permute.xlu0 %3228
  %v3230 = vsel %vm53, %v3229, 0
  %3232 = vmatprep.subr.mxu0 0.0
  %3233 = vmatpush1.msra.mxu0 %v739
  %3234 = vmatprep.subr.mxu0 0.0
  %3235 = vmatpush1.msra.mxu0 %v740
  %3236 = vmatprep.subr.mxu0 0.0
  %3237 = vmatpush1.msra.mxu0 %v741
  %3238 = vmatprep.subr.mxu0 0.0
  %3239 = vmatpush1.msra.mxu0 %v742
  %3240 = vmatprep.subr.mxu0 0.0
  %3241 = vmatpush1.msra.mxu0 0.0
  %3242 = vmatprep.subr.mxu0 0.0
  %3243 = vmatpush1.msra.mxu0 0.0
  %3244 = vmatprep.subr.mxu0 0.0
  %3245 = vmatpush1.msra.mxu0 0.0
  %3246 = vmatprep.subr.mxu0 0.0
  %3247 = vmatpush1.msra.mxu0 0.0
  %3248 = vmatprep.subr.mxu0 0.0
  %3249 = vmatpush1.msra.mxu0 0.0
  %3250 = vmatprep.subr.mxu0 0.0
  %3251 = vmatpush1.msra.mxu0 0.0
  %3252 = vmatprep.subr.mxu0 0.0
  %3253 = vmatpush1.msra.mxu0 0.0
  %3254 = vmatprep.subr.mxu0 0.0
  %3255 = vmatpush1.msra.mxu0 0.0
  %3256 = vmatprep.subr.mxu0 0.0
  %3257 = vmatpush1.msra.mxu0 0.0
  %3258 = vmatprep.subr.mxu0 0.0
  %3259 = vmatpush1.msra.mxu0 0.0
  %3260 = vmatprep.subr.mxu0 0.0
  %3261 = vmatpush1.msra.mxu0 0.0
  %3262 = vmatprep.subr.mxu0 0.0
  %3263 = vmatpush1.msra.mxu0 0.0
  %3264 = vmatprep.subr.mxu0 0.0
  %3265 = vmatpush1.msra.mxu0 0.0
  %3266 = vmatprep.subr.mxu0 0.0
  %3267 = vmatpush1.msra.mxu0 0.0
  %3268 = vmatprep.subr.mxu0 0.0
  %3269 = vmatpush1.msra.mxu0 0.0
  %3270 = vmatprep.subr.mxu0 0.0
  %3271 = vmatpush1.msra.mxu0 0.0
  %3272 = vmatprep.subr.mxu0 0.0
  %3273 = vmatpush1.msra.mxu0 0.0
  %3274 = vmatprep.subr.mxu0 0.0
  %3275 = vmatpush1.msra.mxu0 0.0
  %3276 = vmatprep.subr.mxu0 0.0
  %3277 = vmatpush1.msra.mxu0 0.0
  %3278 = vmatprep.subr.mxu0 0.0
  %3279 = vmatpush1.msra.mxu0 0.0
  %3280 = vmatprep.subr.mxu0 0.0
  %3281 = vmatpush1.msra.mxu0 0.0
  %3282 = vmatprep.subr.mxu0 0.0
  %3283 = vmatpush1.msra.mxu0 0.0
  %3284 = vmatprep.subr.mxu0 0.0
  %3285 = vmatpush1.msra.mxu0 0.0
  %3286 = vmatprep.subr.mxu0 0.0
  %3287 = vmatpush1.msra.mxu0 0.0
  %3288 = vmatprep.subr.mxu0 0.0
  %3289 = vmatpush1.msra.mxu0 0.0
  %3290 = vmatprep.subr.mxu0 0.0
  %3291 = vmatpush1.msra.mxu0 0.0
  %3292 = vmatprep.subr.mxu0 0.0
  %3293 = vmatpush1.msra.mxu0 0.0
  %3294 = vmatprep.subr.mxu0 0.0
  %3295 = vmatpush1.msra.mxu0 0.0
  %3296 = vmatprep.mubr.f32.mxu0 0.0
  %3297 = vmatmul.mubr.f32.gmra.mrb[0].mxu0 %v3230
  %v3298 = vpop.f32.mrb[0].mxu0
  %v3299 = vadd.f32 %v747, %v3298
  %v3300 = vpop.f32.mrb[0].mxu0
  %3301 = vdwg.mxu0
  %v3302 = vadd.f32 %v3226, %v3299
  %v3303 = vxor.u32 %v3302, 2147483648
  %v3304 = vmul.f32 %v3303, 1.442695
  %v3305 = vpow.pop %v3304
  %v3306 = vadd.f32 %v3305, 1.0
  %v3307 = vrcp.pop %v3306
  %v3308 = vmul.f32 1.0, %v3307
  %3310 = vrot.lane.b32.xlu0 %v3299, 64
  %v3311 = vpop.permute.xlu0 %3310
  %v3313 = vmul.f32 %v3308, %v3311
  %3315 = vrot.lane.b32.xlu0 %v3313, 64
  %v3316 = vpop.permute.xlu0 %3315
  %v3318 = vadd.f32 %v3226, %v3316
  %v3319 = vtanh.pop %v3318
  %v3320 = vsub.f32 1.0, %v3308
  %3322 = vrot.lane.b32.xlu0 %v3319, 96
  %v3323 = vpop.permute.xlu0 %3322
  %v3325 = vmul.f32 %v3320, %v3323
  %v3326 = vmul.f32 %v3308, %v3225
  %v3327 = vadd.f32 %v3325, %v3326
  %v3328 = vld [vmem:[#allocation2 + $0x78] sm:$0xff]
  %3330 = vrot.lane.b32.xlu0 %v3327, 96
  %v3331 = vpop.permute.xlu0 %3330
  %v3332 = vsel %vm53, %v3331, 0
  %3334 = vmatprep.subr.mxu0 0.0
  %3335 = vmatpush1.msra.mxu0 %v739
  %3336 = vmatprep.subr.mxu0 0.0
  %3337 = vmatpush1.msra.mxu0 %v740
  %3338 = vmatprep.subr.mxu0 0.0
  %3339 = vmatpush1.msra.mxu0 %v741
  %3340 = vmatprep.subr.mxu0 0.0
  %3341 = vmatpush1.msra.mxu0 %v742
  %3342 = vmatprep.subr.mxu0 0.0
  %3343 = vmatpush1.msra.mxu0 0.0
  %3344 = vmatprep.subr.mxu0 0.0
  %3345 = vmatpush1.msra.mxu0 0.0
  %3346 = vmatprep.subr.mxu0 0.0
  %3347 = vmatpush1.msra.mxu0 0.0
  %3348 = vmatprep.subr.mxu0 0.0
  %3349 = vmatpush1.msra.mxu0 0.0
  %3350 = vmatprep.subr.mxu0 0.0
  %3351 = vmatpush1.msra.mxu0 0.0
  %3352 = vmatprep.subr.mxu0 0.0
  %3353 = vmatpush1.msra.mxu0 0.0
  %3354 = vmatprep.subr.mxu0 0.0
  %3355 = vmatpush1.msra.mxu0 0.0
  %3356 = vmatprep.subr.mxu0 0.0
  %3357 = vmatpush1.msra.mxu0 0.0
  %3358 = vmatprep.subr.mxu0 0.0
  %3359 = vmatpush1.msra.mxu0 0.0
  %3360 = vmatprep.subr.mxu0 0.0
  %3361 = vmatpush1.msra.mxu0 0.0
  %3362 = vmatprep.subr.mxu0 0.0
  %3363 = vmatpush1.msra.mxu0 0.0
  %3364 = vmatprep.subr.mxu0 0.0
  %3365 = vmatpush1.msra.mxu0 0.0
  %3366 = vmatprep.subr.mxu0 0.0
  %3367 = vmatpush1.msra.mxu0 0.0
  %3368 = vmatprep.subr.mxu0 0.0
  %3369 = vmatpush1.msra.mxu0 0.0
  %3370 = vmatprep.subr.mxu0 0.0
  %3371 = vmatpush1.msra.mxu0 0.0
  %3372 = vmatprep.subr.mxu0 0.0
  %3373 = vmatpush1.msra.mxu0 0.0
  %3374 = vmatprep.subr.mxu0 0.0
  %3375 = vmatpush1.msra.mxu0 0.0
  %3376 = vmatprep.subr.mxu0 0.0
  %3377 = vmatpush1.msra.mxu0 0.0
  %3378 = vmatprep.subr.mxu0 0.0
  %3379 = vmatpush1.msra.mxu0 0.0
  %3380 = vmatprep.subr.mxu0 0.0
  %3381 = vmatpush1.msra.mxu0 0.0
  %3382 = vmatprep.subr.mxu0 0.0
  %3383 = vmatpush1.msra.mxu0 0.0
  %3384 = vmatprep.subr.mxu0 0.0
  %3385 = vmatpush1.msra.mxu0 0.0
  %3386 = vmatprep.subr.mxu0 0.0
  %3387 = vmatpush1.msra.mxu0 0.0
  %3388 = vmatprep.subr.mxu0 0.0
  %3389 = vmatpush1.msra.mxu0 0.0
  %3390 = vmatprep.subr.mxu0 0.0
  %3391 = vmatpush1.msra.mxu0 0.0
  %3392 = vmatprep.subr.mxu0 0.0
  %3393 = vmatpush1.msra.mxu0 0.0
  %3394 = vmatprep.subr.mxu0 0.0
  %3395 = vmatpush1.msra.mxu0 0.0
  %3396 = vmatprep.subr.mxu0 0.0
  %3397 = vmatpush1.msra.mxu0 0.0
  %3398 = vmatprep.mubr.f32.mxu0 0.0
  %3399 = vmatmul.mubr.f32.gmra.mrb[0].mxu0 %v3332
  %v3400 = vpop.f32.mrb[0].mxu0
  %v3401 = vadd.f32 %v747, %v3400
  %v3402 = vpop.f32.mrb[0].mxu0
  %3403 = vdwg.mxu0
  %v3404 = vadd.f32 %v3328, %v3401
  %v3405 = vxor.u32 %v3404, 2147483648
  %v3406 = vmul.f32 %v3405, 1.442695
  %v3407 = vpow.pop %v3406
  %v3408 = vadd.f32 %v3407, 1.0
  %v3409 = vrcp.pop %v3408
  %v3410 = vmul.f32 1.0, %v3409
  %3412 = vrot.lane.b32.xlu0 %v3401, 64
  %v3413 = vpop.permute.xlu0 %3412
  %v3415 = vmul.f32 %v3410, %v3413
  %3417 = vrot.lane.b32.xlu0 %v3415, 64
  %v3418 = vpop.permute.xlu0 %3417
  %v3420 = vadd.f32 %v3328, %v3418
  %v3421 = vtanh.pop %v3420
  %v3422 = vsub.f32 1.0, %v3410
  %3424 = vrot.lane.b32.xlu0 %v3421, 96
  %v3425 = vpop.permute.xlu0 %3424
  %v3427 = vmul.f32 %v3422, %v3425
  %v3428 = vmul.f32 %v3410, %v3327
  %v3429 = vadd.f32 %v3427, %v3428
  %v3430 = vld [vmem:[#allocation2 + $0x80] sm:$0xff]
  %3432 = vrot.lane.b32.xlu0 %v3429, 96
  %v3433 = vpop.permute.xlu0 %3432
  %v3434 = vsel %vm53, %v3433, 0
  %3436 = vmatprep.subr.mxu0 0.0
  %3437 = vmatpush1.msra.mxu0 %v739
  %3438 = vmatprep.subr.mxu0 0.0
  %3439 = vmatpush1.msra.mxu0 %v740
  %3440 = vmatprep.subr.mxu0 0.0
  %3441 = vmatpush1.msra.mxu0 %v741
  %3442 = vmatprep.subr.mxu0 0.0
  %3443 = vmatpush1.msra.mxu0 %v742
  %3444 = vmatprep.subr.mxu0 0.0
  %3445 = vmatpush1.msra.mxu0 0.0
  %3446 = vmatprep.subr.mxu0 0.0
  %3447 = vmatpush1.msra.mxu0 0.0
  %3448 = vmatprep.subr.mxu0 0.0
  %3449 = vmatpush1.msra.mxu0 0.0
  %3450 = vmatprep.subr.mxu0 0.0
  %3451 = vmatpush1.msra.mxu0 0.0
  %3452 = vmatprep.subr.mxu0 0.0
  %3453 = vmatpush1.msra.mxu0 0.0
  %3454 = vmatprep.subr.mxu0 0.0
  %3455 = vmatpush1.msra.mxu0 0.0
  %3456 = vmatprep.subr.mxu0 0.0
  %3457 = vmatpush1.msra.mxu0 0.0
  %3458 = vmatprep.subr.mxu0 0.0
  %3459 = vmatpush1.msra.mxu0 0.0
  %3460 = vmatprep.subr.mxu0 0.0
  %3461 = vmatpush1.msra.mxu0 0.0
  %3462 = vmatprep.subr.mxu0 0.0
  %3463 = vmatpush1.msra.mxu0 0.0
  %3464 = vmatprep.subr.mxu0 0.0
  %3465 = vmatpush1.msra.mxu0 0.0
  %3466 = vmatprep.subr.mxu0 0.0
  %3467 = vmatpush1.msra.mxu0 0.0
  %3468 = vmatprep.subr.mxu0 0.0
  %3469 = vmatpush1.msra.mxu0 0.0
  %3470 = vmatprep.subr.mxu0 0.0
  %3471 = vmatpush1.msra.mxu0 0.0
  %3472 = vmatprep.subr.mxu0 0.0
  %3473 = vmatpush1.msra.mxu0 0.0
  %3474 = vmatprep.subr.mxu0 0.0
  %3475 = vmatpush1.msra.mxu0 0.0
  %3476 = vmatprep.subr.mxu0 0.0
  %3477 = vmatpush1.msra.mxu0 0.0
  %3478 = vmatprep.subr.mxu0 0.0
  %3479 = vmatpush1.msra.mxu0 0.0
  %3480 = vmatprep.subr.mxu0 0.0
  %3481 = vmatpush1.msra.mxu0 0.0
  %3482 = vmatprep.subr.mxu0 0.0
  %3483 = vmatpush1.msra.mxu0 0.0
  %3484 = vmatprep.subr.mxu0 0.0
  %3485 = vmatpush1.msra.mxu0 0.0
  %3486 = vmatprep.subr.mxu0 0.0
  %3487 = vmatpush1.msra.mxu0 0.0
  %3488 = vmatprep.subr.mxu0 0.0
  %3489 = vmatpush1.msra.mxu0 0.0
  %3490 = vmatprep.subr.mxu0 0.0
  %3491 = vmatpush1.msra.mxu0 0.0
  %3492 = vmatprep.subr.mxu0 0.0
  %3493 = vmatpush1.msra.mxu0 0.0
  %3494 = vmatprep.subr.mxu0 0.0
  %3495 = vmatpush1.msra.mxu0 0.0
  %3496 = vmatprep.subr.mxu0 0.0
  %3497 = vmatpush1.msra.mxu0 0.0
  %3498 = vmatprep.subr.mxu0 0.0
  %3499 = vmatpush1.msra.mxu0 0.0
  %3500 = vmatprep.mubr.f32.mxu0 0.0
  %3501 = vmatmul.mubr.f32.gmra.mrb[0].mxu0 %v3434
  %v3502 = vpop.f32.mrb[0].mxu0
  %v3503 = vadd.f32 %v747, %v3502
  %v3504 = vpop.f32.mrb[0].mxu0
  %3505 = vdwg.mxu0
  %v3506 = vadd.f32 %v3430, %v3503
  %v3507 = vxor.u32 %v3506, 2147483648
  %v3508 = vmul.f32 %v3507, 1.442695
  %v3509 = vpow.pop %v3508
  %v3510 = vadd.f32 %v3509, 1.0
  %v3511 = vrcp.pop %v3510
  %v3512 = vmul.f32 1.0, %v3511
  %3514 = vrot.lane.b32.xlu0 %v3503, 64
  %v3515 = vpop.permute.xlu0 %3514
  %v3517 = vmul.f32 %v3512, %v3515
  %3519 = vrot.lane.b32.xlu0 %v3517, 64
  %v3520 = vpop.permute.xlu0 %3519
  %v3522 = vadd.f32 %v3430, %v3520
  %v3523 = vtanh.pop %v3522
  %v3524 = vsub.f32 1.0, %v3512
  %3526 = vrot.lane.b32.xlu0 %v3523, 96
  %v3527 = vpop.permute.xlu0 %3526
  %v3529 = vmul.f32 %v3524, %v3527
  %v3530 = vmul.f32 %v3512, %v3429
  %v3531 = vadd.f32 %v3529, %v3530
  %v3532 = vld [vmem:[#allocation2 + $0x88] sm:$0xff]
  %3534 = vrot.lane.b32.xlu0 %v3531, 96
  %v3535 = vpop.permute.xlu0 %3534
  %v3536 = vsel %vm53, %v3535, 0
  %3538 = vmatprep.subr.mxu0 0.0
  %3539 = vmatpush1.msra.mxu0 %v739
  %3540 = vmatprep.subr.mxu0 0.0
  %3541 = vmatpush1.msra.mxu0 %v740
  %3542 = vmatprep.subr.mxu0 0.0
  %3543 = vmatpush1.msra.mxu0 %v741
  %3544 = vmatprep.subr.mxu0 0.0
  %3545 = vmatpush1.msra.mxu0 %v742
  %3546 = vmatprep.subr.mxu0 0.0
  %3547 = vmatpush1.msra.mxu0 0.0
  %3548 = vmatprep.subr.mxu0 0.0
  %3549 = vmatpush1.msra.mxu0 0.0
  %3550 = vmatprep.subr.mxu0 0.0
  %3551 = vmatpush1.msra.mxu0 0.0
  %3552 = vmatprep.subr.mxu0 0.0
  %3553 = vmatpush1.msra.mxu0 0.0
  %3554 = vmatprep.subr.mxu0 0.0
  %3555 = vmatpush1.msra.mxu0 0.0
  %3556 = vmatprep.subr.mxu0 0.0
  %3557 = vmatpush1.msra.mxu0 0.0
  %3558 = vmatprep.subr.mxu0 0.0
  %3559 = vmatpush1.msra.mxu0 0.0
  %3560 = vmatprep.subr.mxu0 0.0
  %3561 = vmatpush1.msra.mxu0 0.0
  %3562 = vmatprep.subr.mxu0 0.0
  %3563 = vmatpush1.msra.mxu0 0.0
  %3564 = vmatprep.subr.mxu0 0.0
  %3565 = vmatpush1.msra.mxu0 0.0
  %3566 = vmatprep.subr.mxu0 0.0
  %3567 = vmatpush1.msra.mxu0 0.0
  %3568 = vmatprep.subr.mxu0 0.0
  %3569 = vmatpush1.msra.mxu0 0.0
  %3570 = vmatprep.subr.mxu0 0.0
  %3571 = vmatpush1.msra.mxu0 0.0
  %3572 = vmatprep.subr.mxu0 0.0
  %3573 = vmatpush1.msra.mxu0 0.0
  %3574 = vmatprep.subr.mxu0 0.0
  %3575 = vmatpush1.msra.mxu0 0.0
  %3576 = vmatprep.subr.mxu0 0.0
  %3577 = vmatpush1.msra.mxu0 0.0
  %3578 = vmatprep.subr.mxu0 0.0
  %3579 = vmatpush1.msra.mxu0 0.0
  %3580 = vmatprep.subr.mxu0 0.0
  %3581 = vmatpush1.msra.mxu0 0.0
  %3582 = vmatprep.subr.mxu0 0.0
  %3583 = vmatpush1.msra.mxu0 0.0
  %3584 = vmatprep.subr.mxu0 0.0
  %3585 = vmatpush1.msra.mxu0 0.0
  %3586 = vmatprep.subr.mxu0 0.0
  %3587 = vmatpush1.msra.mxu0 0.0
  %3588 = vmatprep.subr.mxu0 0.0
  %3589 = vmatpush1.msra.mxu0 0.0
  %3590 = vmatprep.subr.mxu0 0.0
  %3591 = vmatpush1.msra.mxu0 0.0
  %3592 = vmatprep.subr.mxu0 0.0
  %3593 = vmatpush1.msra.mxu0 0.0
  %3594 = vmatprep.subr.mxu0 0.0
  %3595 = vmatpush1.msra.mxu0 0.0
  %3596 = vmatprep.subr.mxu0 0.0
  %3597 = vmatpush1.msra.mxu0 0.0
  %3598 = vmatprep.subr.mxu0 0.0
  %3599 = vmatpush1.msra.mxu0 0.0
  %3600 = vmatprep.subr.mxu0 0.0
  %3601 = vmatpush1.msra.mxu0 0.0
  %3602 = vmatprep.mubr.f32.mxu0 0.0
  %3603 = vmatmul.mubr.f32.gmra.mrb[0].mxu0 %v3536
  %v3604 = vpop.f32.mrb[0].mxu0
  %v3605 = vadd.f32 %v747, %v3604
  %v3606 = vpop.f32.mrb[0].mxu0
  %3607 = vdwg.mxu0
  %v3608 = vadd.f32 %v3532, %v3605
  %v3609 = vxor.u32 %v3608, 2147483648
  %v3610 = vmul.f32 %v3609, 1.442695
  %v3611 = vpow.pop %v3610
  %v3612 = vadd.f32 %v3611, 1.0
  %v3613 = vrcp.pop %v3612
  %v3614 = vmul.f32 1.0, %v3613
  %3616 = vrot.lane.b32.xlu0 %v3605, 64
  %v3617 = vpop.permute.xlu0 %3616
  %v3619 = vmul.f32 %v3614, %v3617
  %3621 = vrot.lane.b32.xlu0 %v3619, 64
  %v3622 = vpop.permute.xlu0 %3621
  %v3624 = vadd.f32 %v3532, %v3622
  %v3625 = vtanh.pop %v3624
  %v3626 = vsub.f32 1.0, %v3614
  %3628 = vrot.lane.b32.xlu0 %v3625, 96
  %v3629 = vpop.permute.xlu0 %3628
  %v3631 = vmul.f32 %v3626, %v3629
  %v3632 = vmul.f32 %v3614, %v3531
  %v3633 = vadd.f32 %v3631, %v3632
  %v3634 = vld [vmem:[#allocation2 + $0x90] sm:$0xff]
  %3636 = vrot.lane.b32.xlu0 %v3633, 96
  %v3637 = vpop.permute.xlu0 %3636
  %v3638 = vsel %vm53, %v3637, 0
  %3640 = vmatprep.subr.mxu0 0.0
  %3641 = vmatpush1.msra.mxu0 %v739
  %3642 = vmatprep.subr.mxu0 0.0
  %3643 = vmatpush1.msra.mxu0 %v740
  %3644 = vmatprep.subr.mxu0 0.0
  %3645 = vmatpush1.msra.mxu0 %v741
  %3646 = vmatprep.subr.mxu0 0.0
  %3647 = vmatpush1.msra.mxu0 %v742
  %3648 = vmatprep.subr.mxu0 0.0
  %3649 = vmatpush1.msra.mxu0 0.0
  %3650 = vmatprep.subr.mxu0 0.0
  %3651 = vmatpush1.msra.mxu0 0.0
  %3652 = vmatprep.subr.mxu0 0.0
  %3653 = vmatpush1.msra.mxu0 0.0
  %3654 = vmatprep.subr.mxu0 0.0
  %3655 = vmatpush1.msra.mxu0 0.0
  %3656 = vmatprep.subr.mxu0 0.0
  %3657 = vmatpush1.msra.mxu0 0.0
  %3658 = vmatprep.subr.mxu0 0.0
  %3659 = vmatpush1.msra.mxu0 0.0
  %3660 = vmatprep.subr.mxu0 0.0
  %3661 = vmatpush1.msra.mxu0 0.0
  %3662 = vmatprep.subr.mxu0 0.0
  %3663 = vmatpush1.msra.mxu0 0.0
  %3664 = vmatprep.subr.mxu0 0.0
  %3665 = vmatpush1.msra.mxu0 0.0
  %3666 = vmatprep.subr.mxu0 0.0
  %3667 = vmatpush1.msra.mxu0 0.0
  %3668 = vmatprep.subr.mxu0 0.0
  %3669 = vmatpush1.msra.mxu0 0.0
  %3670 = vmatprep.subr.mxu0 0.0
  %3671 = vmatpush1.msra.mxu0 0.0
  %3672 = vmatprep.subr.mxu0 0.0
  %3673 = vmatpush1.msra.mxu0 0.0
  %3674 = vmatprep.subr.mxu0 0.0
  %3675 = vmatpush1.msra.mxu0 0.0
  %3676 = vmatprep.subr.mxu0 0.0
  %3677 = vmatpush1.msra.mxu0 0.0
  %3678 = vmatprep.subr.mxu0 0.0
  %3679 = vmatpush1.msra.mxu0 0.0
  %3680 = vmatprep.subr.mxu0 0.0
  %3681 = vmatpush1.msra.mxu0 0.0
  %3682 = vmatprep.subr.mxu0 0.0
  %3683 = vmatpush1.msra.mxu0 0.0
  %3684 = vmatprep.subr.mxu0 0.0
  %3685 = vmatpush1.msra.mxu0 0.0
  %3686 = vmatprep.subr.mxu0 0.0
  %3687 = vmatpush1.msra.mxu0 0.0
  %3688 = vmatprep.subr.mxu0 0.0
  %3689 = vmatpush1.msra.mxu0 0.0
  %3690 = vmatprep.subr.mxu0 0.0
  %3691 = vmatpush1.msra.mxu0 0.0
  %3692 = vmatprep.subr.mxu0 0.0
  %3693 = vmatpush1.msra.mxu0 0.0
  %3694 = vmatprep.subr.mxu0 0.0
  %3695 = vmatpush1.msra.mxu0 0.0
  %3696 = vmatprep.subr.mxu0 0.0
  %3697 = vmatpush1.msra.mxu0 0.0
  %3698 = vmatprep.subr.mxu0 0.0
  %3699 = vmatpush1.msra.mxu0 0.0
  %3700 = vmatprep.subr.mxu0 0.0
  %3701 = vmatpush1.msra.mxu0 0.0
  %3702 = vmatprep.subr.mxu0 0.0
  %3703 = vmatpush1.msra.mxu0 0.0
  %3704 = vmatprep.mubr.f32.mxu0 0.0
  %3705 = vmatmul.mubr.f32.gmra.mrb[0].mxu0 %v3638
  %v3706 = vpop.f32.mrb[0].mxu0
  %v3707 = vadd.f32 %v747, %v3706
  %v3708 = vpop.f32.mrb[0].mxu0
  %3709 = vdwg.mxu0
  %v3710 = vadd.f32 %v3634, %v3707
  %v3711 = vxor.u32 %v3710, 2147483648
  %v3712 = vmul.f32 %v3711, 1.442695
  %v3713 = vpow.pop %v3712
  %v3714 = vadd.f32 %v3713, 1.0
  %v3715 = vrcp.pop %v3714
  %v3716 = vmul.f32 1.0, %v3715
  %3718 = vrot.lane.b32.xlu0 %v3707, 64
  %v3719 = vpop.permute.xlu0 %3718
  %v3721 = vmul.f32 %v3716, %v3719
  %3723 = vrot.lane.b32.xlu0 %v3721, 64
  %v3724 = vpop.permute.xlu0 %3723
  %v3726 = vadd.f32 %v3634, %v3724
  %v3727 = vtanh.pop %v3726
  %v3728 = vsub.f32 1.0, %v3716
  %3730 = vrot.lane.b32.xlu0 %v3727, 96
  %v3731 = vpop.permute.xlu0 %3730
  %v3733 = vmul.f32 %v3728, %v3731
  %v3734 = vmul.f32 %v3716, %v3633
  %v3735 = vadd.f32 %v3733, %v3734
  %v3736 = vld [vmem:[#allocation2 + $0x98] sm:$0xff]
  %3738 = vrot.lane.b32.xlu0 %v3735, 96
  %v3739 = vpop.permute.xlu0 %3738
  %v3740 = vsel %vm53, %v3739, 0
  %3742 = vmatprep.subr.mxu0 0.0
  %3743 = vmatpush1.msra.mxu0 %v739
  %3744 = vmatprep.subr.mxu0 0.0
  %3745 = vmatpush1.msra.mxu0 %v740
  %3746 = vmatprep.subr.mxu0 0.0
  %3747 = vmatpush1.msra.mxu0 %v741
  %3748 = vmatprep.subr.mxu0 0.0
  %3749 = vmatpush1.msra.mxu0 %v742
  %3750 = vmatprep.subr.mxu0 0.0
  %3751 = vmatpush1.msra.mxu0 0.0
  %3752 = vmatprep.subr.mxu0 0.0
  %3753 = vmatpush1.msra.mxu0 0.0
  %3754 = vmatprep.subr.mxu0 0.0
  %3755 = vmatpush1.msra.mxu0 0.0
  %3756 = vmatprep.subr.mxu0 0.0
  %3757 = vmatpush1.msra.mxu0 0.0
  %3758 = vmatprep.subr.mxu0 0.0
  %3759 = vmatpush1.msra.mxu0 0.0
  %3760 = vmatprep.subr.mxu0 0.0
  %3761 = vmatpush1.msra.mxu0 0.0
  %3762 = vmatprep.subr.mxu0 0.0
  %3763 = vmatpush1.msra.mxu0 0.0
  %3764 = vmatprep.subr.mxu0 0.0
  %3765 = vmatpush1.msra.mxu0 0.0
  %3766 = vmatprep.subr.mxu0 0.0
  %3767 = vmatpush1.msra.mxu0 0.0
  %3768 = vmatprep.subr.mxu0 0.0
  %3769 = vmatpush1.msra.mxu0 0.0
  %3770 = vmatprep.subr.mxu0 0.0
  %3771 = vmatpush1.msra.mxu0 0.0
  %3772 = vmatprep.subr.mxu0 0.0
  %3773 = vmatpush1.msra.mxu0 0.0
  %3774 = vmatprep.subr.mxu0 0.0
  %3775 = vmatpush1.msra.mxu0 0.0
  %3776 = vmatprep.subr.mxu0 0.0
  %3777 = vmatpush1.msra.mxu0 0.0
  %3778 = vmatprep.subr.mxu0 0.0
  %3779 = vmatpush1.msra.mxu0 0.0
  %3780 = vmatprep.subr.mxu0 0.0
  %3781 = vmatpush1.msra.mxu0 0.0
  %3782 = vmatprep.subr.mxu0 0.0
  %3783 = vmatpush1.msra.mxu0 0.0
  %3784 = vmatprep.subr.mxu0 0.0
  %3785 = vmatpush1.msra.mxu0 0.0
  %3786 = vmatprep.subr.mxu0 0.0
  %3787 = vmatpush1.msra.mxu0 0.0
  %3788 = vmatprep.subr.mxu0 0.0
  %3789 = vmatpush1.msra.mxu0 0.0
  %3790 = vmatprep.subr.mxu0 0.0
  %3791 = vmatpush1.msra.mxu0 0.0
  %3792 = vmatprep.subr.mxu0 0.0
  %3793 = vmatpush1.msra.mxu0 0.0
  %3794 = vmatprep.subr.mxu0 0.0
  %3795 = vmatpush1.msra.mxu0 0.0
  %3796 = vmatprep.subr.mxu0 0.0
  %3797 = vmatpush1.msra.mxu0 0.0
  %3798 = vmatprep.subr.mxu0 0.0
  %3799 = vmatpush1.msra.mxu0 0.0
  %3800 = vmatprep.subr.mxu0 0.0
  %3801 = vmatpush1.msra.mxu0 0.0
  %3802 = vmatprep.subr.mxu0 0.0
  %3803 = vmatpush1.msra.mxu0 0.0
  %3804 = vmatprep.subr.mxu0 0.0
  %3805 = vmatpush1.msra.mxu0 0.0
  %3806 = vmatprep.mubr.f32.mxu0 0.0
  %3807 = vmatmul.mubr.f32.gmra.mrb[0].mxu0 %v3740
  %v3808 = vpop.f32.mrb[0].mxu0
  %v3809 = vadd.f32 %v747, %v3808
  %v3810 = vpop.f32.mrb[0].mxu0
  %3811 = vdwg.mxu0
  %v3812 = vadd.f32 %v3736, %v3809
  %v3813 = vxor.u32 %v3812, 2147483648
  %v3814 = vmul.f32 %v3813, 1.442695
  %v3815 = vpow.pop %v3814
  %v3816 = vadd.f32 %v3815, 1.0
  %v3817 = vrcp.pop %v3816
  %v3818 = vmul.f32 1.0, %v3817
  %3820 = vrot.lane.b32.xlu0 %v3809, 64
  %v3821 = vpop.permute.xlu0 %3820
  %v3823 = vmul.f32 %v3818, %v3821
  %3825 = vrot.lane.b32.xlu0 %v3823, 64
  %v3826 = vpop.permute.xlu0 %3825
  %v3828 = vadd.f32 %v3736, %v3826
  %v3829 = vtanh.pop %v3828
  %v3830 = vsub.f32 1.0, %v3818
  %3832 = vrot.lane.b32.xlu0 %v3829, 96
  %v3833 = vpop.permute.xlu0 %3832
  %v3835 = vmul.f32 %v3830, %v3833
  %v3836 = vmul.f32 %v3818, %v3735
  %v3837 = vadd.f32 %v3835, %v3836
  %v3838 = vld [vmem:[#allocation2 + $0xa0] sm:$0xff]
  %3840 = vrot.lane.b32.xlu0 %v3837, 96
  %v3841 = vpop.permute.xlu0 %3840
  %v3842 = vsel %vm53, %v3841, 0
  %3844 = vmatprep.subr.mxu0 0.0
  %3845 = vmatpush1.msra.mxu0 %v739
  %3846 = vmatprep.subr.mxu0 0.0
  %3847 = vmatpush1.msra.mxu0 %v740
  %3848 = vmatprep.subr.mxu0 0.0
  %3849 = vmatpush1.msra.mxu0 %v741
  %3850 = vmatprep.subr.mxu0 0.0
  %3851 = vmatpush1.msra.mxu0 %v742
  %3852 = vmatprep.subr.mxu0 0.0
  %3853 = vmatpush1.msra.mxu0 0.0
  %3854 = vmatprep.subr.mxu0 0.0
  %3855 = vmatpush1.msra.mxu0 0.0
  %3856 = vmatprep.subr.mxu0 0.0
  %3857 = vmatpush1.msra.mxu0 0.0
  %3858 = vmatprep.subr.mxu0 0.0
  %3859 = vmatpush1.msra.mxu0 0.0
  %3860 = vmatprep.subr.mxu0 0.0
  %3861 = vmatpush1.msra.mxu0 0.0
  %3862 = vmatprep.subr.mxu0 0.0
  %3863 = vmatpush1.msra.mxu0 0.0
  %3864 = vmatprep.subr.mxu0 0.0
  %3865 = vmatpush1.msra.mxu0 0.0
  %3866 = vmatprep.subr.mxu0 0.0
  %3867 = vmatpush1.msra.mxu0 0.0
  %3868 = vmatprep.subr.mxu0 0.0
  %3869 = vmatpush1.msra.mxu0 0.0
  %3870 = vmatprep.subr.mxu0 0.0
  %3871 = vmatpush1.msra.mxu0 0.0
  %3872 = vmatprep.subr.mxu0 0.0
  %3873 = vmatpush1.msra.mxu0 0.0
  %3874 = vmatprep.subr.mxu0 0.0
  %3875 = vmatpush1.msra.mxu0 0.0
  %3876 = vmatprep.subr.mxu0 0.0
  %3877 = vmatpush1.msra.mxu0 0.0
  %3878 = vmatprep.subr.mxu0 0.0
  %3879 = vmatpush1.msra.mxu0 0.0
  %3880 = vmatprep.subr.mxu0 0.0
  %3881 = vmatpush1.msra.mxu0 0.0
  %3882 = vmatprep.subr.mxu0 0.0
  %3883 = vmatpush1.msra.mxu0 0.0
  %3884 = vmatprep.subr.mxu0 0.0
  %3885 = vmatpush1.msra.mxu0 0.0
  %3886 = vmatprep.subr.mxu0 0.0
  %3887 = vmatpush1.msra.mxu0 0.0
  %3888 = vmatprep.subr.mxu0 0.0
  %3889 = vmatpush1.msra.mxu0 0.0
  %3890 = vmatprep.subr.mxu0 0.0
  %3891 = vmatpush1.msra.mxu0 0.0
  %3892 = vmatprep.subr.mxu0 0.0
  %3893 = vmatpush1.msra.mxu0 0.0
  %3894 = vmatprep.subr.mxu0 0.0
  %3895 = vmatpush1.msra.mxu0 0.0
  %3896 = vmatprep.subr.mxu0 0.0
  %3897 = vmatpush1.msra.mxu0 0.0
  %3898 = vmatprep.subr.mxu0 0.0
  %3899 = vmatpush1.msra.mxu0 0.0
  %3900 = vmatprep.subr.mxu0 0.0
  %3901 = vmatpush1.msra.mxu0 0.0
  %3902 = vmatprep.subr.mxu0 0.0
  %3903 = vmatpush1.msra.mxu0 0.0
  %3904 = vmatprep.subr.mxu0 0.0
  %3905 = vmatpush1.msra.mxu0 0.0
  %3906 = vmatprep.subr.mxu0 0.0
  %3907 = vmatpush1.msra.mxu0 0.0
  %3908 = vmatprep.mubr.f32.mxu0 0.0
  %3909 = vmatmul.mubr.f32.gmra.mrb[0].mxu0 %v3842
  %v3910 = vpop.f32.mrb[0].mxu0
  %v3911 = vadd.f32 %v747, %v3910
  %v3912 = vpop.f32.mrb[0].mxu0
  %3913 = vdwg.mxu0
  %v3914 = vadd.f32 %v3838, %v3911
  %v3915 = vxor.u32 %v3914, 2147483648
  %v3916 = vmul.f32 %v3915, 1.442695
  %v3917 = vpow.pop %v3916
  %v3918 = vadd.f32 %v3917, 1.0
  %v3919 = vrcp.pop %v3918
  %v3920 = vmul.f32 1.0, %v3919
  %3922 = vrot.lane.b32.xlu0 %v3911, 64
  %v3923 = vpop.permute.xlu0 %3922
  %v3925 = vmul.f32 %v3920, %v3923
  %3927 = vrot.lane.b32.xlu0 %v3925, 64
  %v3928 = vpop.permute.xlu0 %3927
  %v3930 = vadd.f32 %v3838, %v3928
  %v3931 = vtanh.pop %v3930
  %v3932 = vsub.f32 1.0, %v3920
  %3934 = vrot.lane.b32.xlu0 %v3931, 96
  %v3935 = vpop.permute.xlu0 %3934
  %v3937 = vmul.f32 %v3932, %v3935
  %v3938 = vmul.f32 %v3920, %v3837
  %v3939 = vadd.f32 %v3937, %v3938
  %v3940 = vld [vmem:[#allocation2 + $0xa8] sm:$0xff]
  %3942 = vrot.lane.b32.xlu0 %v3939, 96
  %v3943 = vpop.permute.xlu0 %3942
  %v3944 = vsel %vm53, %v3943, 0
  %3946 = vmatprep.subr.mxu0 0.0
  %3947 = vmatpush1.msra.mxu0 %v739
  %3948 = vmatprep.subr.mxu0 0.0
  %3949 = vmatpush1.msra.mxu0 %v740
  %3950 = vmatprep.subr.mxu0 0.0
  %3951 = vmatpush1.msra.mxu0 %v741
  %3952 = vmatprep.subr.mxu0 0.0
  %3953 = vmatpush1.msra.mxu0 %v742
  %3954 = vmatprep.subr.mxu0 0.0
  %3955 = vmatpush1.msra.mxu0 0.0
  %3956 = vmatprep.subr.mxu0 0.0
  %3957 = vmatpush1.msra.mxu0 0.0
  %3958 = vmatprep.subr.mxu0 0.0
  %3959 = vmatpush1.msra.mxu0 0.0
  %3960 = vmatprep.subr.mxu0 0.0
  %3961 = vmatpush1.msra.mxu0 0.0
  %3962 = vmatprep.subr.mxu0 0.0
  %3963 = vmatpush1.msra.mxu0 0.0
  %3964 = vmatprep.subr.mxu0 0.0
  %3965 = vmatpush1.msra.mxu0 0.0
  %3966 = vmatprep.subr.mxu0 0.0
  %3967 = vmatpush1.msra.mxu0 0.0
  %3968 = vmatprep.subr.mxu0 0.0
  %3969 = vmatpush1.msra.mxu0 0.0
  %3970 = vmatprep.subr.mxu0 0.0
  %3971 = vmatpush1.msra.mxu0 0.0
  %3972 = vmatprep.subr.mxu0 0.0
  %3973 = vmatpush1.msra.mxu0 0.0
  %3974 = vmatprep.subr.mxu0 0.0
  %3975 = vmatpush1.msra.mxu0 0.0
  %3976 = vmatprep.subr.mxu0 0.0
  %3977 = vmatpush1.msra.mxu0 0.0
  %3978 = vmatprep.subr.mxu0 0.0
  %3979 = vmatpush1.msra.mxu0 0.0
  %3980 = vmatprep.subr.mxu0 0.0
  %3981 = vmatpush1.msra.mxu0 0.0
  %3982 = vmatprep.subr.mxu0 0.0
  %3983 = vmatpush1.msra.mxu0 0.0
  %3984 = vmatprep.subr.mxu0 0.0
  %3985 = vmatpush1.msra.mxu0 0.0
  %3986 = vmatprep.subr.mxu0 0.0
  %3987 = vmatpush1.msra.mxu0 0.0
  %3988 = vmatprep.subr.mxu0 0.0
  %3989 = vmatpush1.msra.mxu0 0.0
  %3990 = vmatprep.subr.mxu0 0.0
  %3991 = vmatpush1.msra.mxu0 0.0
  %3992 = vmatprep.subr.mxu0 0.0
  %3993 = vmatpush1.msra.mxu0 0.0
  %3994 = vmatprep.subr.mxu0 0.0
  %3995 = vmatpush1.msra.mxu0 0.0
  %3996 = vmatprep.subr.mxu0 0.0
  %3997 = vmatpush1.msra.mxu0 0.0
  %3998 = vmatprep.subr.mxu0 0.0
  %3999 = vmatpush1.msra.mxu0 0.0
  %4000 = vmatprep.subr.mxu0 0.0
  %4001 = vmatpush1.msra.mxu0 0.0
  %4002 = vmatprep.subr.mxu0 0.0
  %4003 = vmatpush1.msra.mxu0 0.0
  %4004 = vmatprep.subr.mxu0 0.0
  %4005 = vmatpush1.msra.mxu0 0.0
  %4006 = vmatprep.subr.mxu0 0.0
  %4007 = vmatpush1.msra.mxu0 0.0
  %4008 = vmatprep.subr.mxu0 0.0
  %4009 = vmatpush1.msra.mxu0 0.0
  %4010 = vmatprep.mubr.f32.mxu0 0.0
  %4011 = vmatmul.mubr.f32.gmra.mrb[0].mxu0 %v3944
  %v4012 = vpop.f32.mrb[0].mxu0
  %v4013 = vadd.f32 %v747, %v4012
  %v4014 = vpop.f32.mrb[0].mxu0
  %4015 = vdwg.mxu0
  %v4016 = vadd.f32 %v3940, %v4013
  %v4017 = vxor.u32 %v4016, 2147483648
  %v4018 = vmul.f32 %v4017, 1.442695
  %v4019 = vpow.pop %v4018
  %v4020 = vadd.f32 %v4019, 1.0
  %v4021 = vrcp.pop %v4020
  %v4022 = vmul.f32 1.0, %v4021
  %4024 = vrot.lane.b32.xlu0 %v4013, 64
  %v4025 = vpop.permute.xlu0 %4024
  %v4027 = vmul.f32 %v4022, %v4025
  %4029 = vrot.lane.b32.xlu0 %v4027, 64
  %v4030 = vpop.permute.xlu0 %4029
  %v4032 = vadd.f32 %v3940, %v4030
  %v4033 = vtanh.pop %v4032
  %v4034 = vsub.f32 1.0, %v4022
  %4036 = vrot.lane.b32.xlu0 %v4033, 96
  %v4037 = vpop.permute.xlu0 %4036
  %v4039 = vmul.f32 %v4034, %v4037
  %v4040 = vmul.f32 %v4022, %v3939
  %v4041 = vadd.f32 %v4039, %v4040
  %v4042 = vld [vmem:[%s5] sm:$0xff]
  %v4043 = vld [vmem:[%s5 + $0x8] sm:$0xff]
  %v4044 = vld [vmem:[%s5 + $0x10] sm:$0xff]
  %v4045 = vld [vmem:[%s5 + $0x18] sm:$0xff]
  %v4046 = vld [vmem:[%s5 + $0x20] sm:$0xff]
  %4048 = vrot.lane.b32.xlu0 %v2304, 120
  %v4049 = vpop.permute.xlu0 %4048
  %v4050 = vsel %vm830, %v4049, 0
  %4052 = vmatprep.subr.mxu0 0.0
  %4053 = vmatpush1.msra.mxu0 %v4046
  %4054 = vmatprep.subr.mxu0 0.0
  %4055 = vmatpush1.msra.mxu0 0.0
  %4056 = vmatprep.subr.mxu0 0.0
  %4057 = vmatpush1.msra.mxu0 0.0
  %4058 = vmatprep.subr.mxu0 0.0
  %4059 = vmatpush1.msra.mxu0 0.0
  %4060 = vmatprep.subr.mxu0 0.0
  %4061 = vmatpush1.msra.mxu0 0.0
  %4062 = vmatprep.subr.mxu0 0.0
  %4063 = vmatpush1.msra.mxu0 0.0
  %4064 = vmatprep.subr.mxu0 0.0
  %4065 = vmatpush1.msra.mxu0 0.0
  %4066 = vmatprep.subr.mxu0 0.0
  %4067 = vmatpush1.msra.mxu0 0.0
  %4068 = vmatprep.subr.mxu0 0.0
  %4069 = vmatpush1.msra.mxu0 0.0
  %4070 = vmatprep.subr.mxu0 0.0
  %4071 = vmatpush1.msra.mxu0 0.0
  %4072 = vmatprep.subr.mxu0 0.0
  %4073 = vmatpush1.msra.mxu0 0.0
  %4074 = vmatprep.subr.mxu0 0.0
  %4075 = vmatpush1.msra.mxu0 0.0
  %4076 = vmatprep.subr.mxu0 0.0
  %4077 = vmatpush1.msra.mxu0 0.0
  %4078 = vmatprep.subr.mxu0 0.0
  %4079 = vmatpush1.msra.mxu0 0.0
  %4080 = vmatprep.subr.mxu0 0.0
  %4081 = vmatpush1.msra.mxu0 0.0
  %4082 = vmatprep.subr.mxu0 0.0
  %4083 = vmatpush1.msra.mxu0 0.0
  %4084 = vmatprep.subr.mxu0 0.0
  %4085 = vmatpush1.msra.mxu0 0.0
  %4086 = vmatprep.subr.mxu0 0.0
  %4087 = vmatpush1.msra.mxu0 0.0
  %4088 = vmatprep.subr.mxu0 0.0
  %4089 = vmatpush1.msra.mxu0 0.0
  %4090 = vmatprep.subr.mxu0 0.0
  %4091 = vmatpush1.msra.mxu0 0.0
  %4092 = vmatprep.subr.mxu0 0.0
  %4093 = vmatpush1.msra.mxu0 0.0
  %4094 = vmatprep.subr.mxu0 0.0
  %4095 = vmatpush1.msra.mxu0 0.0
  %4096 = vmatprep.subr.mxu0 0.0
  %4097 = vmatpush1.msra.mxu0 0.0
  %4098 = vmatprep.subr.mxu0 0.0
  %4099 = vmatpush1.msra.mxu0 0.0
  %4100 = vmatprep.subr.mxu0 0.0
  %4101 = vmatpush1.msra.mxu0 0.0
  %4102 = vmatprep.subr.mxu0 0.0
  %4103 = vmatpush1.msra.mxu0 0.0
  %4104 = vmatprep.subr.mxu0 0.0
  %4105 = vmatpush1.msra.mxu0 0.0
  %4106 = vmatprep.subr.mxu0 0.0
  %4107 = vmatpush1.msra.mxu0 0.0
  %4108 = vmatprep.subr.mxu0 0.0
  %4109 = vmatpush1.msra.mxu0 0.0
  %4110 = vmatprep.subr.mxu0 0.0
  %4111 = vmatpush1.msra.mxu0 0.0
  %4112 = vmatprep.subr.mxu0 0.0
  %4113 = vmatpush1.msra.mxu0 0.0
  %4114 = vmatprep.subr.mxu0 0.0
  %4115 = vmatpush1.msra.mxu0 0.0
  %4116 = vmatprep.mubr.f32.mxu0 0.0
  %4117 = vmatmul.mubr.f32.gmra.mrb[0].mxu0 %v4050
  %v4118 = vpop.f32.mrb[0].mxu0
  %v4119 = vadd.f32 0.0, %v4118
  %v4120 = vpop.f32.mrb[0].mxu0
  %4121 = vdwg.mxu0
  %4123 = vrot.lane.b32.xlu0 %v4041, 96
  %v4124 = vpop.permute.xlu0 %4123
  %v4125 = vsel %vm53, %v4124, 0
  %4127 = vmatprep.subr.mxu0 0.0
  %4128 = vmatpush1.msra.mxu0 %v4042
  %4129 = vmatprep.subr.mxu0 0.0
  %4130 = vmatpush1.msra.mxu0 %v4043
  %4131 = vmatprep.subr.mxu0 0.0
  %4132 = vmatpush1.msra.mxu0 %v4044
  %4133 = vmatprep.subr.mxu0 0.0
  %4134 = vmatpush1.msra.mxu0 %v4045
  %4135 = vmatprep.subr.mxu0 0.0
  %4136 = vmatpush1.msra.mxu0 0.0
  %4137 = vmatprep.subr.mxu0 0.0
  %4138 = vmatpush1.msra.mxu0 0.0
  %4139 = vmatprep.subr.mxu0 0.0
  %4140 = vmatpush1.msra.mxu0 0.0
  %4141 = vmatprep.subr.mxu0 0.0
  %4142 = vmatpush1.msra.mxu0 0.0
  %4143 = vmatprep.subr.mxu0 0.0
  %4144 = vmatpush1.msra.mxu0 0.0
  %4145 = vmatprep.subr.mxu0 0.0
  %4146 = vmatpush1.msra.mxu0 0.0
  %4147 = vmatprep.subr.mxu0 0.0
  %4148 = vmatpush1.msra.mxu0 0.0
  %4149 = vmatprep.subr.mxu0 0.0
  %4150 = vmatpush1.msra.mxu0 0.0
  %4151 = vmatprep.subr.mxu0 0.0
  %4152 = vmatpush1.msra.mxu0 0.0
  %4153 = vmatprep.subr.mxu0 0.0
  %4154 = vmatpush1.msra.mxu0 0.0
  %4155 = vmatprep.subr.mxu0 0.0
  %4156 = vmatpush1.msra.mxu0 0.0
  %4157 = vmatprep.subr.mxu0 0.0
  %4158 = vmatpush1.msra.mxu0 0.0
  %4159 = vmatprep.subr.mxu0 0.0
  %4160 = vmatpush1.msra.mxu0 0.0
  %4161 = vmatprep.subr.mxu0 0.0
  %4162 = vmatpush1.msra.mxu0 0.0
  %4163 = vmatprep.subr.mxu0 0.0
  %4164 = vmatpush1.msra.mxu0 0.0
  %4165 = vmatprep.subr.mxu0 0.0
  %4166 = vmatpush1.msra.mxu0 0.0
  %4167 = vmatprep.subr.mxu0 0.0
  %4168 = vmatpush1.msra.mxu0 0.0
  %4169 = vmatprep.subr.mxu0 0.0
  %4170 = vmatpush1.msra.mxu0 0.0
  %4171 = vmatprep.subr.mxu0 0.0
  %4172 = vmatpush1.msra.mxu0 0.0
  %4173 = vmatprep.subr.mxu0 0.0
  %4174 = vmatpush1.msra.mxu0 0.0
  %4175 = vmatprep.subr.mxu0 0.0
  %4176 = vmatpush1.msra.mxu0 0.0
  %4177 = vmatprep.subr.mxu0 0.0
  %4178 = vmatpush1.msra.mxu0 0.0
  %4179 = vmatprep.subr.mxu0 0.0
  %4180 = vmatpush1.msra.mxu0 0.0
  %4181 = vmatprep.subr.mxu0 0.0
  %4182 = vmatpush1.msra.mxu0 0.0
  %4183 = vmatprep.subr.mxu0 0.0
  %4184 = vmatpush1.msra.mxu0 0.0
  %4185 = vmatprep.subr.mxu0 0.0
  %4186 = vmatpush1.msra.mxu0 0.0
  %4187 = vmatprep.subr.mxu0 0.0
  %4188 = vmatpush1.msra.mxu0 0.0
  %4189 = vmatprep.subr.mxu0 0.0
  %4190 = vmatpush1.msra.mxu0 0.0
  %4191 = vmatprep.mubr.f32.mxu0 0.0
  %4192 = vmatmul.mubr.f32.gmra.mrb[0].mxu0 %v4125
  %v4193 = vpop.f32.mrb[0].mxu0
  %v4194 = vadd.f32 %v4119, %v4193
  %v4195 = vpop.f32.mrb[0].mxu0
  %4196 = vdwg.mxu0
  %v4197 = vld [vmem:[%s5 + $0x28] sm:$0xff]
  %4199 = vrot.lane.b32.xlu0 %v2305, 120
  %v4200 = vpop.permute.xlu0 %4199
  %v4201 = vsel %vm830, %v4200, 0
  %4203 = vmatprep.subr.mxu0 0.0
  %4204 = vmatpush1.msra.mxu0 %v4197
  %4205 = vmatprep.subr.mxu0 0.0
  %4206 = vmatpush1.msra.mxu0 0.0
  %4207 = vmatprep.subr.mxu0 0.0
  %4208 = vmatpush1.msra.mxu0 0.0
  %4209 = vmatprep.subr.mxu0 0.0
  %4210 = vmatpush1.msra.mxu0 0.0
  %4211 = vmatprep.subr.mxu0 0.0
  %4212 = vmatpush1.msra.mxu0 0.0
  %4213 = vmatprep.subr.mxu0 0.0
  %4214 = vmatpush1.msra.mxu0 0.0
  %4215 = vmatprep.subr.mxu0 0.0
  %4216 = vmatpush1.msra.mxu0 0.0
  %4217 = vmatprep.subr.mxu0 0.0
  %4218 = vmatpush1.msra.mxu0 0.0
  %4219 = vmatprep.subr.mxu0 0.0
  %4220 = vmatpush1.msra.mxu0 0.0
  %4221 = vmatprep.subr.mxu0 0.0
  %4222 = vmatpush1.msra.mxu0 0.0
  %4223 = vmatprep.subr.mxu0 0.0
  %4224 = vmatpush1.msra.mxu0 0.0
  %4225 = vmatprep.subr.mxu0 0.0
  %4226 = vmatpush1.msra.mxu0 0.0
  %4227 = vmatprep.subr.mxu0 0.0
  %4228 = vmatpush1.msra.mxu0 0.0
  %4229 = vmatprep.subr.mxu0 0.0
  %4230 = vmatpush1.msra.mxu0 0.0
  %4231 = vmatprep.subr.mxu0 0.0
  %4232 = vmatpush1.msra.mxu0 0.0
  %4233 = vmatprep.subr.mxu0 0.0
  %4234 = vmatpush1.msra.mxu0 0.0
  %4235 = vmatprep.subr.mxu0 0.0
  %4236 = vmatpush1.msra.mxu0 0.0
  %4237 = vmatprep.subr.mxu0 0.0
  %4238 = vmatpush1.msra.mxu0 0.0
  %4239 = vmatprep.subr.mxu0 0.0
  %4240 = vmatpush1.msra.mxu0 0.0
  %4241 = vmatprep.subr.mxu0 0.0
  %4242 = vmatpush1.msra.mxu0 0.0
  %4243 = vmatprep.subr.mxu0 0.0
  %4244 = vmatpush1.msra.mxu0 0.0
  %4245 = vmatprep.subr.mxu0 0.0
  %4246 = vmatpush1.msra.mxu0 0.0
  %4247 = vmatprep.subr.mxu0 0.0
  %4248 = vmatpush1.msra.mxu0 0.0
  %4249 = vmatprep.subr.mxu0 0.0
  %4250 = vmatpush1.msra.mxu0 0.0
  %4251 = vmatprep.subr.mxu0 0.0
  %4252 = vmatpush1.msra.mxu0 0.0
  %4253 = vmatprep.subr.mxu0 0.0
  %4254 = vmatpush1.msra.mxu0 0.0
  %4255 = vmatprep.subr.mxu0 0.0
  %4256 = vmatpush1.msra.mxu0 0.0
  %4257 = vmatprep.subr.mxu0 0.0
  %4258 = vmatpush1.msra.mxu0 0.0
  %4259 = vmatprep.subr.mxu0 0.0
  %4260 = vmatpush1.msra.mxu0 0.0
  %4261 = vmatprep.subr.mxu0 0.0
  %4262 = vmatpush1.msra.mxu0 0.0
  %4263 = vmatprep.subr.mxu0 0.0
  %4264 = vmatpush1.msra.mxu0 0.0
  %4265 = vmatprep.subr.mxu0 0.0
  %4266 = vmatpush1.msra.mxu0 0.0
  %4267 = vmatprep.mubr.f32.mxu0 0.0
  %4268 = vmatmul.mubr.f32.gmra.mrb[0].mxu0 %v4201
  %v4269 = vpop.f32.mrb[0].mxu0
  %v4270 = vadd.f32 0.0, %v4269
  %v4271 = vpop.f32.mrb[0].mxu0
  %4272 = vdwg.mxu0
  %v4273 = vadd.f32 %v4194, %v4270
  %v4274 = vld [vmem:[%s5 + $0x30] sm:$0xff]
  %4276 = vrot.lane.b32.xlu0 %v2306, 120
  %v4277 = vpop.permute.xlu0 %4276
  %v4278 = vsel %vm830, %v4277, 0
  %4280 = vmatprep.subr.mxu0 0.0
  %4281 = vmatpush1.msra.mxu0 %v4274
  %4282 = vmatprep.subr.mxu0 0.0
  %4283 = vmatpush1.msra.mxu0 0.0
  %4284 = vmatprep.subr.mxu0 0.0
  %4285 = vmatpush1.msra.mxu0 0.0
  %4286 = vmatprep.subr.mxu0 0.0
  %4287 = vmatpush1.msra.mxu0 0.0
  %4288 = vmatprep.subr.mxu0 0.0
  %4289 = vmatpush1.msra.mxu0 0.0
  %4290 = vmatprep.subr.mxu0 0.0
  %4291 = vmatpush1.msra.mxu0 0.0
  %4292 = vmatprep.subr.mxu0 0.0
  %4293 = vmatpush1.msra.mxu0 0.0
  %4294 = vmatprep.subr.mxu0 0.0
  %4295 = vmatpush1.msra.mxu0 0.0
  %4296 = vmatprep.subr.mxu0 0.0
  %4297 = vmatpush1.msra.mxu0 0.0
  %4298 = vmatprep.subr.mxu0 0.0
  %4299 = vmatpush1.msra.mxu0 0.0
  %4300 = vmatprep.subr.mxu0 0.0
  %4301 = vmatpush1.msra.mxu0 0.0
  %4302 = vmatprep.subr.mxu0 0.0
  %4303 = vmatpush1.msra.mxu0 0.0
  %4304 = vmatprep.subr.mxu0 0.0
  %4305 = vmatpush1.msra.mxu0 0.0
  %4306 = vmatprep.subr.mxu0 0.0
  %4307 = vmatpush1.msra.mxu0 0.0
  %4308 = vmatprep.subr.mxu0 0.0
  %4309 = vmatpush1.msra.mxu0 0.0
  %4310 = vmatprep.subr.mxu0 0.0
  %4311 = vmatpush1.msra.mxu0 0.0
  %4312 = vmatprep.subr.mxu0 0.0
  %4313 = vmatpush1.msra.mxu0 0.0
  %4314 = vmatprep.subr.mxu0 0.0
  %4315 = vmatpush1.msra.mxu0 0.0
  %4316 = vmatprep.subr.mxu0 0.0
  %4317 = vmatpush1.msra.mxu0 0.0
  %4318 = vmatprep.subr.mxu0 0.0
  %4319 = vmatpush1.msra.mxu0 0.0
  %4320 = vmatprep.subr.mxu0 0.0
  %4321 = vmatpush1.msra.mxu0 0.0
  %4322 = vmatprep.subr.mxu0 0.0
  %4323 = vmatpush1.msra.mxu0 0.0
  %4324 = vmatprep.subr.mxu0 0.0
  %4325 = vmatpush1.msra.mxu0 0.0
  %4326 = vmatprep.subr.mxu0 0.0
  %4327 = vmatpush1.msra.mxu0 0.0
  %4328 = vmatprep.subr.mxu0 0.0
  %4329 = vmatpush1.msra.mxu0 0.0
  %4330 = vmatprep.subr.mxu0 0.0
  %4331 = vmatpush1.msra.mxu0 0.0
  %4332 = vmatprep.subr.mxu0 0.0
  %4333 = vmatpush1.msra.mxu0 0.0
  %4334 = vmatprep.subr.mxu0 0.0
  %4335 = vmatpush1.msra.mxu0 0.0
  %4336 = vmatprep.subr.mxu0 0.0
  %4337 = vmatpush1.msra.mxu0 0.0
  %4338 = vmatprep.subr.mxu0 0.0
  %4339 = vmatpush1.msra.mxu0 0.0
  %4340 = vmatprep.subr.mxu0 0.0
  %4341 = vmatpush1.msra.mxu0 0.0
  %4342 = vmatprep.subr.mxu0 0.0
  %4343 = vmatpush1.msra.mxu0 0.0
  %4344 = vmatprep.mubr.f32.mxu0 0.0
  %4345 = vmatmul.mubr.f32.gmra.mrb[0].mxu0 %v4278
  %v4346 = vpop.f32.mrb[0].mxu0
  %v4347 = vadd.f32 0.0, %v4346
  %v4348 = vpop.f32.mrb[0].mxu0
  %4349 = vdwg.mxu0
  %v4350 = vadd.f32 %v4273, %v4347
  %v4351 = vld [vmem:[%s5 + $0x38] sm:$0xff]
  %4353 = vrot.lane.b32.xlu0 %v2307, 120
  %v4354 = vpop.permute.xlu0 %4353
  %v4355 = vsel %vm830, %v4354, 0
  %4357 = vmatprep.subr.mxu0 0.0
  %4358 = vmatpush1.msra.mxu0 %v4351
  %4359 = vmatprep.subr.mxu0 0.0
  %4360 = vmatpush1.msra.mxu0 0.0
  %4361 = vmatprep.subr.mxu0 0.0
  %4362 = vmatpush1.msra.mxu0 0.0
  %4363 = vmatprep.subr.mxu0 0.0
  %4364 = vmatpush1.msra.mxu0 0.0
  %4365 = vmatprep.subr.mxu0 0.0
  %4366 = vmatpush1.msra.mxu0 0.0
  %4367 = vmatprep.subr.mxu0 0.0
  %4368 = vmatpush1.msra.mxu0 0.0
  %4369 = vmatprep.subr.mxu0 0.0
  %4370 = vmatpush1.msra.mxu0 0.0
  %4371 = vmatprep.subr.mxu0 0.0
  %4372 = vmatpush1.msra.mxu0 0.0
  %4373 = vmatprep.subr.mxu0 0.0
  %4374 = vmatpush1.msra.mxu0 0.0
  %4375 = vmatprep.subr.mxu0 0.0
  %4376 = vmatpush1.msra.mxu0 0.0
  %4377 = vmatprep.subr.mxu0 0.0
  %4378 = vmatpush1.msra.mxu0 0.0
  %4379 = vmatprep.subr.mxu0 0.0
  %4380 = vmatpush1.msra.mxu0 0.0
  %4381 = vmatprep.subr.mxu0 0.0
  %4382 = vmatpush1.msra.mxu0 0.0
  %4383 = vmatprep.subr.mxu0 0.0
  %4384 = vmatpush1.msra.mxu0 0.0
  %4385 = vmatprep.subr.mxu0 0.0
  %4386 = vmatpush1.msra.mxu0 0.0
  %4387 = vmatprep.subr.mxu0 0.0
  %4388 = vmatpush1.msra.mxu0 0.0
  %4389 = vmatprep.subr.mxu0 0.0
  %4390 = vmatpush1.msra.mxu0 0.0
  %4391 = vmatprep.subr.mxu0 0.0
  %4392 = vmatpush1.msra.mxu0 0.0
  %4393 = vmatprep.subr.mxu0 0.0
  %4394 = vmatpush1.msra.mxu0 0.0
  %4395 = vmatprep.subr.mxu0 0.0
  %4396 = vmatpush1.msra.mxu0 0.0
  %4397 = vmatprep.subr.mxu0 0.0
  %4398 = vmatpush1.msra.mxu0 0.0
  %4399 = vmatprep.subr.mxu0 0.0
  %4400 = vmatpush1.msra.mxu0 0.0
  %4401 = vmatprep.subr.mxu0 0.0
  %4402 = vmatpush1.msra.mxu0 0.0
  %4403 = vmatprep.subr.mxu0 0.0
  %4404 = vmatpush1.msra.mxu0 0.0
  %4405 = vmatprep.subr.mxu0 0.0
  %4406 = vmatpush1.msra.mxu0 0.0
  %4407 = vmatprep.subr.mxu0 0.0
  %4408 = vmatpush1.msra.mxu0 0.0
  %4409 = vmatprep.subr.mxu0 0.0
  %4410 = vmatpush1.msra.mxu0 0.0
  %4411 = vmatprep.subr.mxu0 0.0
  %4412 = vmatpush1.msra.mxu0 0.0
  %4413 = vmatprep.subr.mxu0 0.0
  %4414 = vmatpush1.msra.mxu0 0.0
  %4415 = vmatprep.subr.mxu0 0.0
  %4416 = vmatpush1.msra.mxu0 0.0
  %4417 = vmatprep.subr.mxu0 0.0
  %4418 = vmatpush1.msra.mxu0 0.0
  %4419 = vmatprep.subr.mxu0 0.0
  %4420 = vmatpush1.msra.mxu0 0.0
  %4421 = vmatprep.mubr.f32.mxu0 0.0
  %4422 = vmatmul.mubr.f32.gmra.mrb[0].mxu0 %v4355
  %v4423 = vpop.f32.mrb[0].mxu0
  %v4424 = vadd.f32 0.0, %v4423
  %v4425 = vpop.f32.mrb[0].mxu0
  %4426 = vdwg.mxu0
  %v4427 = vadd.f32 %v4350, %v4424
  %v4428 = vld [vmem:[%s0 + $0xb0] sm:$0xff]
  %v4429 = vld [vmem:[%s5 + $0x40] sm:$0xff]
  %v4430 = vld [vmem:[%s5 + $0x48] sm:$0xff]
  %v4431 = vld [vmem:[%s5 + $0x50] sm:$0xff]
  %v4432 = vld [vmem:[%s5 + $0x58] sm:$0xff]
  %v4434 = vsel %vm53, %v4428, 0
  %4436 = vmatprep.subr.mxu0 0.0
  %4437 = vmatpush1.msra.mxu0 %v4429
  %4438 = vmatprep.subr.mxu0 0.0
  %4439 = vmatpush1.msra.mxu0 %v4430
  %4440 = vmatprep.subr.mxu0 0.0
  %4441 = vmatpush1.msra.mxu0 %v4431
  %4442 = vmatprep.subr.mxu0 0.0
  %4443 = vmatpush1.msra.mxu0 %v4432
  %4444 = vmatprep.subr.mxu0 0.0
  %4445 = vmatpush1.msra.mxu0 0.0
  %4446 = vmatprep.subr.mxu0 0.0
  %4447 = vmatpush1.msra.mxu0 0.0
  %4448 = vmatprep.subr.mxu0 0.0
  %4449 = vmatpush1.msra.mxu0 0.0
  %4450 = vmatprep.subr.mxu0 0.0
  %4451 = vmatpush1.msra.mxu0 0.0
  %4452 = vmatprep.subr.mxu0 0.0
  %4453 = vmatpush1.msra.mxu0 0.0
  %4454 = vmatprep.subr.mxu0 0.0
  %4455 = vmatpush1.msra.mxu0 0.0
  %4456 = vmatprep.subr.mxu0 0.0
  %4457 = vmatpush1.msra.mxu0 0.0
  %4458 = vmatprep.subr.mxu0 0.0
  %4459 = vmatpush1.msra.mxu0 0.0
  %4460 = vmatprep.subr.mxu0 0.0
  %4461 = vmatpush1.msra.mxu0 0.0
  %4462 = vmatprep.subr.mxu0 0.0
  %4463 = vmatpush1.msra.mxu0 0.0
  %4464 = vmatprep.subr.mxu0 0.0
  %4465 = vmatpush1.msra.mxu0 0.0
  %4466 = vmatprep.subr.mxu0 0.0
  %4467 = vmatpush1.msra.mxu0 0.0
  %4468 = vmatprep.subr.mxu0 0.0
  %4469 = vmatpush1.msra.mxu0 0.0
  %4470 = vmatprep.subr.mxu0 0.0
  %4471 = vmatpush1.msra.mxu0 0.0
  %4472 = vmatprep.subr.mxu0 0.0
  %4473 = vmatpush1.msra.mxu0 0.0
  %4474 = vmatprep.subr.mxu0 0.0
  %4475 = vmatpush1.msra.mxu0 0.0
  %4476 = vmatprep.subr.mxu0 0.0
  %4477 = vmatpush1.msra.mxu0 0.0
  %4478 = vmatprep.subr.mxu0 0.0
  %4479 = vmatpush1.msra.mxu0 0.0
  %4480 = vmatprep.subr.mxu0 0.0
  %4481 = vmatpush1.msra.mxu0 0.0
  %4482 = vmatprep.subr.mxu0 0.0
  %4483 = vmatpush1.msra.mxu0 0.0
  %4484 = vmatprep.subr.mxu0 0.0
  %4485 = vmatpush1.msra.mxu0 0.0
  %4486 = vmatprep.subr.mxu0 0.0
  %4487 = vmatpush1.msra.mxu0 0.0
  %4488 = vmatprep.subr.mxu0 0.0
  %4489 = vmatpush1.msra.mxu0 0.0
  %4490 = vmatprep.subr.mxu0 0.0
  %4491 = vmatpush1.msra.mxu0 0.0
  %4492 = vmatprep.subr.mxu0 0.0
  %4493 = vmatpush1.msra.mxu0 0.0
  %4494 = vmatprep.subr.mxu0 0.0
  %4495 = vmatpush1.msra.mxu0 0.0
  %4496 = vmatprep.subr.mxu0 0.0
  %4497 = vmatpush1.msra.mxu0 0.0
  %4498 = vmatprep.subr.mxu0 0.0
  %4499 = vmatpush1.msra.mxu0 0.0
  %4500 = vmatprep.mubr.f32.mxu0 0.0
  %4501 = vmatmul.mubr.f32.gmra.mrb[0].mxu0 %v4434
  %v4502 = vpop.f32.mrb[0].mxu0
  %v4503 = vadd.f32 0.0, %v4502
  %v4504 = vpop.f32.mrb[0].mxu0
  %4505 = vdwg.mxu0
  %v4506 = vadd.f32 %v4427, %v4503
  %v4507 = vlaneseq
  %v4508 = vshrl.u32 %v4507, 7
  %v4509 = vsub.s32 4, %v4508
  %v4510 = vrot.slane %v26, %v4509
  %v4511 = vadd.f32 %v4506, %v4510
  %v4512 = vxor.u32 %v4511, 2147483648
  %v4513 = vmul.f32 %v4512, 1.442695
  %v4514 = vpow.pop %v4513
  %v4515 = vadd.f32 %v4514, 1.0
  %v4516 = vrcp.pop %v4515
  %v4517 = vmul.f32 1.0, %v4516
  %4518 = vst.msk [vmem:[%s7] sm:$0xff] %vm319, %v4517
  // Predicated region
  $region30: #{lstnet_forward.1} parent=0 // pred_check
    _
  $region31: #{lstnet_forward.1} parent=0 // pred_check_branch
    %4520 = sbr.rel (0) target = $region33
  $region32: #{lstnet_forward.1} parent=0 // pred_region
    _
  $region33: #{lstnet_forward.1} parent=0 // pred_fallthru
    _
  // Predicated region
  $region34: #{lstnet_forward.1} parent=0 // pred_check
    _
  $region35: #{lstnet_forward.1} parent=0 // pred_check_branch
    %4522 = sbr.rel (0) target = $region37
  $region36: #{lstnet_forward.1} parent=0 // pred_region
    _
  $region37: #{lstnet_forward.1} parent=0 // pred_fallthru
    _

</llo_original>
